<compile_context>
chip_gen: v7x
topology: tpu7x:2x2x1
jax: 0.10.0
libtpu: 0.0.40
codegen_flags: <defaults>
</compile_context>

<pallas_src>
import functools

import jax
import jax.numpy as jnp
from jax import lax
from jax.experimental import pallas as pl
from jax.experimental.pallas import tpu as pltpu


def _round_up(x, m):
    return ((x + m - 1) // m) * m


# ----------------------------------------------------------------------------
# Pallas kernels:  out = act(A @ B + bias)   (tiled, f32 accumulator)
# ----------------------------------------------------------------------------
def _matmul_kernel(a_ref, b_ref, bias_ref, o_ref, acc_ref, *,
                   apply_relu, rhs_transposed):
    k = pl.program_id(2)

    @pl.when(k == 0)
    def _():
        acc_ref[...] = jnp.zeros_like(acc_ref)

    dn = (((1,), (1,)), ((), ())) if rhs_transposed else (((1,), (0,)), ((), ()))
    acc_ref[...] += lax.dot_general(
        a_ref[...], b_ref[...], dimension_numbers=dn,
        preferred_element_type=jnp.float32)

    @pl.when(k == pl.num_programs(2) - 1)
    def _():
        acc = acc_ref[...] + bias_ref[...]
        if apply_relu:
            acc = jnp.maximum(acc, 0.0)
        o_ref[...] = acc.astype(o_ref.dtype)


def _noisy_matmul_kernel(a_ref, w_ref, sw_ref, ew_ref, bias_ref, o_ref, acc_ref,
                         *, apply_relu, rhs_transposed):
    k = pl.program_id(2)

    @pl.when(k == 0)
    def _():
        acc_ref[...] = jnp.zeros_like(acc_ref)

    # Effective noisy weight built per tile on the VPU (hides under MXU slot).
    w_eff = (w_ref[...] + sw_ref[...] * ew_ref[...]).astype(jnp.bfloat16)
    dn = (((1,), (1,)), ((), ())) if rhs_transposed else (((1,), (0,)), ((), ()))
    acc_ref[...] += lax.dot_general(
        a_ref[...], w_eff, dimension_numbers=dn,
        preferred_element_type=jnp.float32)

    @pl.when(k == pl.num_programs(2) - 1)
    def _():
        acc = acc_ref[...] + bias_ref[...]
        if apply_relu:
            acc = jnp.maximum(acc, 0.0)
        o_ref[...] = acc.astype(o_ref.dtype)


# ----------------------------------------------------------------------------
# Generic wrapper:  out[M,N] = act(A[M,K] @ B + bias)
#   B is (K,N) if not rhs_transposed, (N,K) if rhs_transposed (torch layout).
#   bias is (M,) if bias_over_rows else (N,).
#   If sigma_w/eps_w given (same layout as B), B_eff = B + sigma_w*eps_w is
#   computed inside the kernel.
# ----------------------------------------------------------------------------
def fused_matmul(a, b, bias, *, sigma_w=None, eps_w=None, apply_relu,
                 rhs_transposed, bias_over_rows, out_dtype=jnp.float32,
                 max_tm=512, max_tn=512, max_tk=512):
    noisy = sigma_w is not None
    M, K = a.shape
    if rhs_transposed:
        N, Kb = b.shape
    else:
        Kb, N = b.shape
    assert K == Kb

    # --- tile sizes: sublane dim multiple of 8, lane dim multiple of 128 ---
    tm = min(max_tm, _round_up(M, 8))
    tn = min(max_tn, _round_up(N, 128))
    tk = K if K <= max_tk else max_tk
    m_pad = _round_up(M, tm)
    n_pad = _round_up(N, tn)
    k_pad = _round_up(K, tk)

    # --- pad operands (zero padding does not affect the matmul; sliced off) ---
    a_p = jnp.pad(a.astype(jnp.bfloat16), ((0, m_pad - M), (0, k_pad - K)))
    if rhs_transposed:
        bpad = ((0, n_pad - N), (0, k_pad - K))
    else:
        bpad = ((0, k_pad - K), (0, n_pad - N))
    if noisy:
        b_p = jnp.pad(b.astype(jnp.float32), bpad)
        sw_p = jnp.pad(sigma_w.astype(jnp.float32), bpad)
        ew_p = jnp.pad(eps_w.astype(jnp.float32), bpad)
    else:
        b_p = jnp.pad(b.astype(jnp.bfloat16), bpad)
    if bias_over_rows:
        bias_p = jnp.pad(bias.astype(jnp.float32), (0, m_pad - M)).reshape(m_pad, 1)
    else:
        bias_p = jnp.pad(bias.astype(jnp.float32), (0, n_pad - N)).reshape(1, n_pad)

    grid = (m_pad // tm, n_pad // tn, k_pad // tk)

    a_spec = pl.BlockSpec((tm, tk), lambda i, j, k: (i, k))
    if rhs_transposed:
        b_spec = pl.BlockSpec((tn, tk), lambda i, j, k: (j, k))
    else:
        b_spec = pl.BlockSpec((tk, tn), lambda i, j, k: (k, j))
    if bias_over_rows:
        bias_spec = pl.BlockSpec((tm, 1), lambda i, j, k: (i, 0))
    else:
        bias_spec = pl.BlockSpec((1, tn), lambda i, j, k: (0, j))
    out_spec = pl.BlockSpec((tm, tn), lambda i, j, k: (i, j))

    if noisy:
        kernel = functools.partial(_noisy_matmul_kernel, apply_relu=apply_relu,
                                   rhs_transposed=rhs_transposed)
        in_specs = [a_spec, b_spec, b_spec, b_spec, bias_spec]
        operands = (a_p, b_p, sw_p, ew_p, bias_p)
    else:
        kernel = functools.partial(_matmul_kernel, apply_relu=apply_relu,
                                   rhs_transposed=rhs_transposed)
        in_specs = [a_spec, b_spec, bias_spec]
        operands = (a_p, b_p, bias_p)

    out = pl.pallas_call(
        kernel,
        out_shape=jax.ShapeDtypeStruct((m_pad, n_pad), out_dtype),
        grid_spec=pltpu.PrefetchScalarGridSpec(
            num_scalar_prefetch=0,
            grid=grid,
            in_specs=in_specs,
            out_specs=out_spec,
            scratch_shapes=[pltpu.VMEM((tm, tn), jnp.float32)]),
        compiler_params=pltpu.CompilerParams(
            dimension_semantics=("parallel", "parallel", "arbitrary"),
            vmem_limit_bytes=32 << 20),
    )(*operands)
    return out[:M, :N]


# ----------------------------------------------------------------------------
# Conv2d (NCHW, valid padding, stride s) via im2col (glue) + transposed matmul
# ----------------------------------------------------------------------------
def _im2col_kt(x, kh, kw, stride):
    """x: (N,C,H,W) -> patches (C*KH*KW, N*OH*OW); K ordering matches
    torch weight.reshape(out_c, in_c*kh*kw) (in_c slowest, kh, then kw)."""
    n, c, h, w = x.shape
    oh = (h - kh) // stride + 1
    ow = (w - kw) // stride + 1
    cols = []
    for i in range(kh):
        for j in range(kw):
            cols.append(x[:, :, i:i + stride * oh:stride, j:j + stride * ow:stride])
    patches = jnp.stack(cols, axis=2)                     # (N, C, KH*KW, OH, OW)
    patches = patches.reshape(n, c * kh * kw, oh * ow)    # (N, K, OH*OW)
    patches = patches.transpose(1, 0, 2).reshape(c * kh * kw, n * oh * ow)
    return patches, oh, ow


def conv2d_relu(x, weight, bias, stride):
    # weight: (out_c, in_c, kh, kw) (PyTorch convention). Output stays bf16.
    out_c, in_c, kh, kw = weight.shape
    n = x.shape[0]
    patches_kt, oh, ow = _im2col_kt(x, kh, kw, stride)        # (K, N*OH*OW)
    wmat = weight.reshape(out_c, in_c * kh * kw)              # (out_c, K)
    # Lane-dense transposed matmul: (out_c, K) @ (K, N*OH*OW) -> (out_c, M)
    y = fused_matmul(wmat, patches_kt, bias, apply_relu=True,
                     rhs_transposed=False, bias_over_rows=True,
                     out_dtype=jnp.bfloat16)
    y = y.reshape(out_c, n, oh, ow).transpose(1, 0, 2, 3)     # back to NCHW
    return y


# ----------------------------------------------------------------------------
# NoisyLinear:  y = x @ (W + sigma_w*eps_w)^T + (b + sigma_b*eps_b)
#   (effective weight is formed inside the kernel; weight kept in torch layout)
# ----------------------------------------------------------------------------
def noisy_linear(x, params, eps_w, eps_b, *, apply_relu, out_dtype):
    b_eff = params["bias"] + params["sigma_bias"] * eps_b          # tiny; glue
    return fused_matmul(x, params["weight"], b_eff,
                        sigma_w=params["sigma_weight"], eps_w=eps_w,
                        apply_relu=apply_relu, rhs_transposed=True,
                        bias_over_rows=False, out_dtype=out_dtype)


# ----------------------------------------------------------------------------
# Parameter construction (deterministic, shapes follow the module __init__)
# ----------------------------------------------------------------------------
def init_noisy_linear(key, in_features, out_features, sigma_init=0.017):
    k1, k2 = jax.random.split(key)
    std = jnp.sqrt(3.0 / in_features)
    return {
        "weight": jax.random.uniform(k1, (out_features, in_features),
                                     jnp.float32, -std, std),
        "bias": jax.random.uniform(k2, (out_features,), jnp.float32, -std, std),
        "sigma_weight": jnp.full((out_features, in_features), sigma_init, jnp.float32),
        "sigma_bias": jnp.full((out_features,), sigma_init, jnp.float32),
    }


def init_conv(key, out_c, in_c, kh, kw):
    k1, k2 = jax.random.split(key)
    fan_in = in_c * kh * kw
    bound = 1.0 / jnp.sqrt(fan_in)
    return {
        "weight": jax.random.uniform(k1, (out_c, in_c, kh, kw),
                                     jnp.float32, -bound, bound),
        "bias": jax.random.uniform(k2, (out_c,), jnp.float32, -bound, bound),
    }


def init_noisy_dqn(key, input_shape, num_actions):
    c, h, w = input_shape
    k1, k2, k3, k4, k5 = jax.random.split(key, 5)
    conv1 = init_conv(k1, 32, c, 8, 8)
    conv2 = init_conv(k2, 64, 32, 4, 4)
    conv3 = init_conv(k3, 64, 64, 3, 3)
    # static conv-out size (same arithmetic as the torch dummy pass)
    h1, w1 = (h - 8) // 4 + 1, (w - 8) // 4 + 1
    h2, w2 = (h1 - 4) // 2 + 1, (w1 - 4) // 2 + 1
    h3, w3 = (h2 - 3) // 1 + 1, (w2 - 3) // 1 + 1
    conv_out_size = 64 * h3 * w3
    fc1 = init_noisy_linear(k4, conv_out_size, 512)
    fc2 = init_noisy_linear(k5, 512, num_actions)
    return {"conv1": conv1, "conv2": conv2, "conv3": conv3,
            "fc1": fc1, "fc2": fc2}


# ----------------------------------------------------------------------------
# Forward pass (matches NoisyDQN.forward)
# ----------------------------------------------------------------------------
def noisy_dqn_forward(params, x, noise_key):
    n = x.shape[0]
    # uint8 values are exactly representable in bf16; the 1/256 scaling is
    # folded into conv1's weights (exact, power of two).
    fx = x.astype(jnp.bfloat16)
    w1_scaled = params["conv1"]["weight"] * (1.0 / 256.0)
    h = conv2d_relu(fx, w1_scaled, params["conv1"]["bias"], stride=4)
    h = conv2d_relu(h, params["conv2"]["weight"], params["conv2"]["bias"], stride=2)
    h = conv2d_relu(h, params["conv3"]["weight"], params["conv3"]["bias"], stride=1)
    flat = h.reshape(n, -1)                                  # (N, conv_out_size)

    # fresh Gaussian noise each forward call (epsilon_*.normal_())
    k1, k2, k3, k4 = jax.random.split(noise_key, 4)
    fc1, fc2 = params["fc1"], params["fc2"]
    eps_w1 = jax.random.normal(k1, fc1["weight"].shape, jnp.float32)
    eps_b1 = jax.random.normal(k2, fc1["bias"].shape, jnp.float32)
    eps_w2 = jax.random.normal(k3, fc2["weight"].shape, jnp.float32)
    eps_b2 = jax.random.normal(k4, fc2["bias"].shape, jnp.float32)

    h = noisy_linear(flat, fc1, eps_w1, eps_b1, apply_relu=True,
                     out_dtype=jnp.bfloat16)
    q = noisy_linear(h, fc2, eps_w2, eps_b2, apply_relu=False,
                     out_dtype=jnp.float32)
    return q


# ----------------------------------------------------------------------------
if __name__ == "__main__":
    # Small shapes consistent with the module: NCHW uint8-style frames.
    # spatial=36 is the smallest size the 8/4/3 conv stack handles cleanly.
    batch, channels, spatial, num_actions = 2, 4, 36, 6
    input_shape = (channels, spatial, spatial)

    key = jax.random.PRNGKey(0)
    k_params, k_input, k_noise = jax.random.split(key, 3)

    params = init_noisy_dqn(k_params, input_shape, num_actions)
    x = jax.random.randint(k_input, (batch,) + input_shape, 0, 256,
                           dtype=jnp.int32).astype(jnp.uint8)

    fwd = jax.jit(noisy_dqn_forward)
    q_values = fwd(params, x, k_noise)
    jax.block_until_ready(q_values)

    assert q_values.shape == (batch, num_actions), q_values.shape
    assert q_values.dtype == jnp.float32
    assert bool(jnp.all(jnp.isfinite(q_values)))
    print("KERNEL_OK")
</pallas_src>

<mosaic_0001>
module attributes {stable_mosaic.version = 11 : i64} {
  func.func @_matmul_kernel(%arg0: i32, %arg1: i32, %arg2: i32, %arg3: memref<32x256xbf16, #tpu.memory_space<vmem>>, %arg4: memref<256x128xbf16, #tpu.memory_space<vmem>>, %arg5: memref<32x1xf32, #tpu.memory_space<vmem>>, %arg6: memref<32x128xbf16, #tpu.memory_space<vmem>>, %arg7: memref<32x128xf32, #tpu.memory_space<vmem>>) attributes {dimension_semantics = [#tpu.dimension_semantics<parallel>, #tpu.dimension_semantics<parallel>, #tpu.dimension_semantics<arbitrary>], iteration_bounds = array<i64: 1, 1, 1>, scalar_prefetch = 0 : i64, scratch_operands = 1 : i64, tpu.core_type = #tpu.core_type<tc>, window_params = [{transform_indices = @transform_0, window_bounds = array<i64: 32, 256>}, {transform_indices = @transform_1, window_bounds = array<i64: 256, 128>}, {transform_indices = @transform_2, window_bounds = array<i64: 32, 1>}, {transform_indices = @transform_3, window_bounds = array<i64: 32, 128>}]} {
    %c0_i32 = arith.constant 0 : i32
    %0 = arith.cmpi eq, %arg2, %c0_i32 : i32
    %1 = arith.extui %0 : i1 to i32
    %c0_i32_0 = arith.constant 0 : i32
    %2 = arith.cmpi ne, %1, %c0_i32_0 : i32
    scf.if %2 {
      %cst_10 = arith.constant 0.000000e+00 : f32
      %12 = vector.broadcast %cst_10 : f32 to vector<32x128xf32>
      %c0_11 = arith.constant 0 : index
      %c0_12 = arith.constant 0 : index
      %13 = vector.load %arg7[%c0_11, %c0_12] : memref<32x128xf32, #tpu.memory_space<vmem>>, vector<32x128xf32>
      tpu.vector_store %arg7[%c0_11, %c0_12], %12 {strides = array<i32>} : memref<32x128xf32, #tpu.memory_space<vmem>>, vector<32x128xf32>,
    } else {
    }
    %c0 = arith.constant 0 : index
    %c0_1 = arith.constant 0 : index
    %3 = vector.load %arg7[%c0, %c0_1] : memref<32x128xf32, #tpu.memory_space<vmem>>, vector<32x128xf32>
    %c0_2 = arith.constant 0 : index
    %c0_3 = arith.constant 0 : index
    %4 = vector.load %arg3[%c0_2, %c0_3] : memref<32x256xbf16, #tpu.memory_space<vmem>>, vector<32x256xbf16>
    %c0_4 = arith.constant 0 : index
    %c0_5 = arith.constant 0 : index
    %5 = vector.load %arg4[%c0_4, %c0_5] : memref<256x128xbf16, #tpu.memory_space<vmem>>, vector<256x128xbf16>
    %cst = arith.constant dense<0.000000e+00> : vector<32x128xf32>
    %6 = tpu.matmul %4, %5, %cst {dimension_numbers = #tpu.dot_dimension_numbers<[1], [0], [0], [1], [0, 0, 1, 1], [], []>} : vector<32x256xbf16>, vector<256x128xbf16>, vector<32x128xf32> -> vector<32x128xf32>
    %7 = arith.addf %3, %6 : vector<32x128xf32>
    %c0_6 = arith.constant 0 : index
    %c0_7 = arith.constant 0 : index
    %8 = vector.load %arg7[%c0_6, %c0_7] : memref<32x128xf32, #tpu.memory_space<vmem>>, vector<32x128xf32>
    tpu.vector_store %arg7[%c0_6, %c0_7], %7 {strides = array<i32>} : memref<32x128xf32, #tpu.memory_space<vmem>>, vector<32x128xf32>,
    %c0_i32_8 = arith.constant 0 : i32
    %9 = arith.cmpi eq, %arg2, %c0_i32_8 : i32
    %10 = arith.extui %9 : i1 to i32
    %c0_i32_9 = arith.constant 0 : i32
    %11 = arith.cmpi ne, %10, %c0_i32_9 : i32
    scf.if %11 {
      %c0_10 = arith.constant 0 : index
      %c0_11 = arith.constant 0 : index
      %12 = vector.load %arg7[%c0_10, %c0_11] : memref<32x128xf32, #tpu.memory_space<vmem>>, vector<32x128xf32>
      %c0_12 = arith.constant 0 : index
      %c0_13 = arith.constant 0 : index
      %13 = vector.load %arg5[%c0_12, %c0_13] : memref<32x1xf32, #tpu.memory_space<vmem>>, vector<32x1xf32>
      %14 = vector.broadcast %13 : vector<32x1xf32> to vector<32x128xf32>
      %15 = arith.addf %12, %14 : vector<32x128xf32>
      %cst_14 = arith.constant 0.000000e+00 : f32
      %16 = vector.broadcast %cst_14 : f32 to vector<32x128xf32>
      %17 = arith.maximumf %15, %16 : vector<32x128xf32>
      %18 = arith.truncf %17 : vector<32x128xf32> to vector<32x128xbf16>
      %c0_15 = arith.constant 0 : index
      %c0_16 = arith.constant 0 : index
      %19 = vector.load %arg6[%c0_15, %c0_16] : memref<32x128xbf16, #tpu.memory_space<vmem>>, vector<32x128xbf16>
      tpu.vector_store %arg6[%c0_15, %c0_16], %18 {strides = array<i32>} : memref<32x128xbf16, #tpu.memory_space<vmem>>, vector<32x128xbf16>,
    } else {
    }
    return
  }
  func.func @transform_0(%arg0: i32, %arg1: i32, %arg2: i32) -> (i32, i32) {
    %c0_i32 = arith.constant 0 : i32
    return %arg0, %arg2 : i32, i32
  }
  func.func @transform_1(%arg0: i32, %arg1: i32, %arg2: i32) -> (i32, i32) {
    %c0_i32 = arith.constant 0 : i32
    return %arg2, %arg1 : i32, i32
  }
  func.func @transform_2(%arg0: i32, %arg1: i32, %arg2: i32) -> (i32, i32) {
    %c0_i32 = arith.constant 0 : i32
    %c0_i32_0 = arith.constant 0 : i32
    return %arg0, %c0_i32 : i32, i32
  }
  func.func @transform_3(%arg0: i32, %arg1: i32, %arg2: i32) -> (i32, i32) {
    %c0_i32 = arith.constant 0 : i32
    return %arg0, %arg1 : i32, i32
  }
}

module attributes {stable_mosaic.version = 11 : i64} {
  func.func @_matmul_kernel(%arg0: i32, %arg1: i32, %arg2: i32, %arg3: memref<64x512xbf16, #tpu.memory_space<vmem>>, %arg4: memref<512x128xbf16, #tpu.memory_space<vmem>>, %arg5: memref<64x1xf32, #tpu.memory_space<vmem>>, %arg6: memref<64x128xbf16, #tpu.memory_space<vmem>>, %arg7: memref<64x128xf32, #tpu.memory_space<vmem>>) attributes {dimension_semantics = [#tpu.dimension_semantics<parallel>, #tpu.dimension_semantics<parallel>, #tpu.dimension_semantics<arbitrary>], iteration_bounds = array<i64: 1, 1, 1>, scalar_prefetch = 0 : i64, scratch_operands = 1 : i64, tpu.core_type = #tpu.core_type<tc>, window_params = [{transform_indices = @transform_0, window_bounds = array<i64: 64, 512>}, {transform_indices = @transform_1, window_bounds = array<i64: 512, 128>}, {transform_indices = @transform_2, window_bounds = array<i64: 64, 1>}, {transform_indices = @transform_3, window_bounds = array<i64: 64, 128>}]} {
    %c0_i32 = arith.constant 0 : i32
    %0 = arith.cmpi eq, %arg2, %c0_i32 : i32
    %1 = arith.extui %0 : i1 to i32
    %c0_i32_0 = arith.constant 0 : i32
    %2 = arith.cmpi ne, %1, %c0_i32_0 : i32
    scf.if %2 {
      %cst_10 = arith.constant 0.000000e+00 : f32
      %12 = vector.broadcast %cst_10 : f32 to vector<64x128xf32>
      %c0_11 = arith.constant 0 : index
      %c0_12 = arith.constant 0 : index
      %13 = vector.load %arg7[%c0_11, %c0_12] : memref<64x128xf32, #tpu.memory_space<vmem>>, vector<64x128xf32>
      tpu.vector_store %arg7[%c0_11, %c0_12], %12 {strides = array<i32>} : memref<64x128xf32, #tpu.memory_space<vmem>>, vector<64x128xf32>,
    } else {
    }
    %c0 = arith.constant 0 : index
    %c0_1 = arith.constant 0 : index
    %3 = vector.load %arg7[%c0, %c0_1] : memref<64x128xf32, #tpu.memory_space<vmem>>, vector<64x128xf32>
    %c0_2 = arith.constant 0 : index
    %c0_3 = arith.constant 0 : index
    %4 = vector.load %arg3[%c0_2, %c0_3] : memref<64x512xbf16, #tpu.memory_space<vmem>>, vector<64x512xbf16>
    %c0_4 = arith.constant 0 : index
    %c0_5 = arith.constant 0 : index
    %5 = vector.load %arg4[%c0_4, %c0_5] : memref<512x128xbf16, #tpu.memory_space<vmem>>, vector<512x128xbf16>
    %cst = arith.constant dense<0.000000e+00> : vector<64x128xf32>
    %6 = tpu.matmul %4, %5, %cst {dimension_numbers = #tpu.dot_dimension_numbers<[1], [0], [0], [1], [0, 0, 1, 1], [], []>} : vector<64x512xbf16>, vector<512x128xbf16>, vector<64x128xf32> -> vector<64x128xf32>
    %7 = arith.addf %3, %6 : vector<64x128xf32>
    %c0_6 = arith.constant 0 : index
    %c0_7 = arith.constant 0 : index
    %8 = vector.load %arg7[%c0_6, %c0_7] : memref<64x128xf32, #tpu.memory_space<vmem>>, vector<64x128xf32>
    tpu.vector_store %arg7[%c0_6, %c0_7], %7 {strides = array<i32>} : memref<64x128xf32, #tpu.memory_space<vmem>>, vector<64x128xf32>,
    %c0_i32_8 = arith.constant 0 : i32
    %9 = arith.cmpi eq, %arg2, %c0_i32_8 : i32
    %10 = arith.extui %9 : i1 to i32
    %c0_i32_9 = arith.constant 0 : i32
    %11 = arith.cmpi ne, %10, %c0_i32_9 : i32
    scf.if %11 {
      %c0_10 = arith.constant 0 : index
      %c0_11 = arith.constant 0 : index
      %12 = vector.load %arg7[%c0_10, %c0_11] : memref<64x128xf32, #tpu.memory_space<vmem>>, vector<64x128xf32>
      %c0_12 = arith.constant 0 : index
      %c0_13 = arith.constant 0 : index
      %13 = vector.load %arg5[%c0_12, %c0_13] : memref<64x1xf32, #tpu.memory_space<vmem>>, vector<64x1xf32>
      %14 = vector.broadcast %13 : vector<64x1xf32> to vector<64x128xf32>
      %15 = arith.addf %12, %14 : vector<64x128xf32>
      %cst_14 = arith.constant 0.000000e+00 : f32
      %16 = vector.broadcast %cst_14 : f32 to vector<64x128xf32>
      %17 = arith.maximumf %15, %16 : vector<64x128xf32>
      %18 = arith.truncf %17 : vector<64x128xf32> to vector<64x128xbf16>
      %c0_15 = arith.constant 0 : index
      %c0_16 = arith.constant 0 : index
      %19 = vector.load %arg6[%c0_15, %c0_16] : memref<64x128xbf16, #tpu.memory_space<vmem>>, vector<64x128xbf16>
      tpu.vector_store %arg6[%c0_15, %c0_16], %18 {strides = array<i32>} : memref<64x128xbf16, #tpu.memory_space<vmem>>, vector<64x128xbf16>,
    } else {
    }
    return
  }
  func.func @transform_0(%arg0: i32, %arg1: i32, %arg2: i32) -> (i32, i32) {
    %c0_i32 = arith.constant 0 : i32
    return %arg0, %arg2 : i32, i32
  }
  func.func @transform_1(%arg0: i32, %arg1: i32, %arg2: i32) -> (i32, i32) {
    %c0_i32 = arith.constant 0 : i32
    return %arg2, %arg1 : i32, i32
  }
  func.func @transform_2(%arg0: i32, %arg1: i32, %arg2: i32) -> (i32, i32) {
    %c0_i32 = arith.constant 0 : i32
    %c0_i32_0 = arith.constant 0 : i32
    return %arg0, %c0_i32 : i32, i32
  }
  func.func @transform_3(%arg0: i32, %arg1: i32, %arg2: i32) -> (i32, i32) {
    %c0_i32 = arith.constant 0 : i32
    return %arg0, %arg1 : i32, i32
  }
}

module attributes {stable_mosaic.version = 11 : i64} {
  func.func @_matmul_kernel(%arg0: i32, %arg1: i32, %arg2: i32, %arg3: memref<64x512xbf16, #tpu.memory_space<vmem>>, %arg4: memref<512x128xbf16, #tpu.memory_space<vmem>>, %arg5: memref<64x1xf32, #tpu.memory_space<vmem>>, %arg6: memref<64x128xbf16, #tpu.memory_space<vmem>>, %arg7: memref<64x128xf32, #tpu.memory_space<vmem>>) attributes {dimension_semantics = [#tpu.dimension_semantics<parallel>, #tpu.dimension_semantics<parallel>, #tpu.dimension_semantics<arbitrary>], iteration_bounds = array<i64: 1, 1, 2>, scalar_prefetch = 0 : i64, scratch_operands = 1 : i64, tpu.core_type = #tpu.core_type<tc>, window_params = [{transform_indices = @transform_0, window_bounds = array<i64: 64, 512>}, {transform_indices = @transform_1, window_bounds = array<i64: 512, 128>}, {transform_indices = @transform_2, window_bounds = array<i64: 64, 1>}, {transform_indices = @transform_3, window_bounds = array<i64: 64, 128>}]} {
    %c0_i32 = arith.constant 0 : i32
    %0 = arith.cmpi eq, %arg2, %c0_i32 : i32
    %1 = arith.extui %0 : i1 to i32
    %c0_i32_0 = arith.constant 0 : i32
    %2 = arith.cmpi ne, %1, %c0_i32_0 : i32
    scf.if %2 {
      %cst_9 = arith.constant 0.000000e+00 : f32
      %12 = vector.broadcast %cst_9 : f32 to vector<64x128xf32>
      %c0_10 = arith.constant 0 : index
      %c0_11 = arith.constant 0 : index
      %13 = vector.load %arg7[%c0_10, %c0_11] : memref<64x128xf32, #tpu.memory_space<vmem>>, vector<64x128xf32>
      tpu.vector_store %arg7[%c0_10, %c0_11], %12 {strides = array<i32>} : memref<64x128xf32, #tpu.memory_space<vmem>>, vector<64x128xf32>,
    } else {
    }
    %c0 = arith.constant 0 : index
    %c0_1 = arith.constant 0 : index
    %3 = vector.load %arg7[%c0, %c0_1] : memref<64x128xf32, #tpu.memory_space<vmem>>, vector<64x128xf32>
    %c0_2 = arith.constant 0 : index
    %c0_3 = arith.constant 0 : index
    %4 = vector.load %arg3[%c0_2, %c0_3] : memref<64x512xbf16, #tpu.memory_space<vmem>>, vector<64x512xbf16>
    %c0_4 = arith.constant 0 : index
    %c0_5 = arith.constant 0 : index
    %5 = vector.load %arg4[%c0_4, %c0_5] : memref<512x128xbf16, #tpu.memory_space<vmem>>, vector<512x128xbf16>
    %cst = arith.constant dense<0.000000e+00> : vector<64x128xf32>
    %6 = tpu.matmul %4, %5, %cst {dimension_numbers = #tpu.dot_dimension_numbers<[1], [0], [0], [1], [0, 0, 1, 1], [], []>} : vector<64x512xbf16>, vector<512x128xbf16>, vector<64x128xf32> -> vector<64x128xf32>
    %7 = arith.addf %3, %6 : vector<64x128xf32>
    %c0_6 = arith.constant 0 : index
    %c0_7 = arith.constant 0 : index
    %8 = vector.load %arg7[%c0_6, %c0_7] : memref<64x128xf32, #tpu.memory_space<vmem>>, vector<64x128xf32>
    tpu.vector_store %arg7[%c0_6, %c0_7], %7 {strides = array<i32>} : memref<64x128xf32, #tpu.memory_space<vmem>>, vector<64x128xf32>,
    %c1_i32 = arith.constant 1 : i32
    %9 = arith.cmpi eq, %arg2, %c1_i32 : i32
    %10 = arith.extui %9 : i1 to i32
    %c0_i32_8 = arith.constant 0 : i32
    %11 = arith.cmpi ne, %10, %c0_i32_8 : i32
    scf.if %11 {
      %c0_9 = arith.constant 0 : index
      %c0_10 = arith.constant 0 : index
      %12 = vector.load %arg7[%c0_9, %c0_10] : memref<64x128xf32, #tpu.memory_space<vmem>>, vector<64x128xf32>
      %c0_11 = arith.constant 0 : index
      %c0_12 = arith.constant 0 : index
      %13 = vector.load %arg5[%c0_11, %c0_12] : memref<64x1xf32, #tpu.memory_space<vmem>>, vector<64x1xf32>
      %14 = vector.broadcast %13 : vector<64x1xf32> to vector<64x128xf32>
      %15 = arith.addf %12, %14 : vector<64x128xf32>
      %cst_13 = arith.constant 0.000000e+00 : f32
      %16 = vector.broadcast %cst_13 : f32 to vector<64x128xf32>
      %17 = arith.maximumf %15, %16 : vector<64x128xf32>
      %18 = arith.truncf %17 : vector<64x128xf32> to vector<64x128xbf16>
      %c0_14 = arith.constant 0 : index
      %c0_15 = arith.constant 0 : index
      %19 = vector.load %arg6[%c0_14, %c0_15] : memref<64x128xbf16, #tpu.memory_space<vmem>>, vector<64x128xbf16>
      tpu.vector_store %arg6[%c0_14, %c0_15], %18 {strides = array<i32>} : memref<64x128xbf16, #tpu.memory_space<vmem>>, vector<64x128xbf16>,
    } else {
    }
    return
  }
  func.func @transform_0(%arg0: i32, %arg1: i32, %arg2: i32) -> (i32, i32) {
    %c0_i32 = arith.constant 0 : i32
    return %arg0, %arg2 : i32, i32
  }
  func.func @transform_1(%arg0: i32, %arg1: i32, %arg2: i32) -> (i32, i32) {
    %c0_i32 = arith.constant 0 : i32
    return %arg2, %arg1 : i32, i32
  }
  func.func @transform_2(%arg0: i32, %arg1: i32, %arg2: i32) -> (i32, i32) {
    %c0_i32 = arith.constant 0 : i32
    %c0_i32_0 = arith.constant 0 : i32
    return %arg0, %c0_i32 : i32, i32
  }
  func.func @transform_3(%arg0: i32, %arg1: i32, %arg2: i32) -> (i32, i32) {
    %c0_i32 = arith.constant 0 : i32
    return %arg0, %arg1 : i32, i32
  }
}

module attributes {stable_mosaic.version = 11 : i64} {
  func.func @_noisy_matmul_kernel(%arg0: i32, %arg1: i32, %arg2: i32, %arg3: memref<8x64xbf16, #tpu.memory_space<vmem>>, %arg4: memref<512x64xf32, #tpu.memory_space<vmem>>, %arg5: memref<512x64xf32, #tpu.memory_space<vmem>>, %arg6: memref<512x64xf32, #tpu.memory_space<vmem>>, %arg7: memref<1x512xf32, #tpu.memory_space<vmem>>, %arg8: memref<8x512xbf16, #tpu.memory_space<vmem>>, %arg9: memref<8x512xf32, #tpu.memory_space<vmem>>) attributes {dimension_semantics = [#tpu.dimension_semantics<parallel>, #tpu.dimension_semantics<parallel>, #tpu.dimension_semantics<arbitrary>], iteration_bounds = array<i64: 1, 1, 1>, scalar_prefetch = 0 : i64, scratch_operands = 1 : i64, tpu.core_type = #tpu.core_type<tc>, window_params = [{transform_indices = @transform_0, window_bounds = array<i64: 8, 64>}, {transform_indices = @transform_1, window_bounds = array<i64: 512, 64>}, {transform_indices = @transform_2, window_bounds = array<i64: 512, 64>}, {transform_indices = @transform_3, window_bounds = array<i64: 512, 64>}, {transform_indices = @transform_4, window_bounds = array<i64: 1, 512>}, {transform_indices = @transform_5, window_bounds = array<i64: 8, 512>}]} {
    %c0_i32 = arith.constant 0 : i32
    %0 = arith.cmpi eq, %arg2, %c0_i32 : i32
    %1 = arith.extui %0 : i1 to i32
    %c0_i32_0 = arith.constant 0 : i32
    %2 = arith.cmpi ne, %1, %c0_i32_0 : i32
    scf.if %2 {
      %cst_14 = arith.constant 0.000000e+00 : f32
      %17 = vector.broadcast %cst_14 : f32 to vector<8x512xf32>
      %c0_15 = arith.constant 0 : index
      %c0_16 = arith.constant 0 : index
      %18 = vector.load %arg9[%c0_15, %c0_16] : memref<8x512xf32, #tpu.memory_space<vmem>>, vector<8x512xf32>
      tpu.vector_store %arg9[%c0_15, %c0_16], %17 {strides = array<i32>} : memref<8x512xf32, #tpu.memory_space<vmem>>, vector<8x512xf32>,
    } else {
    }
    %c0 = arith.constant 0 : index
    %c0_1 = arith.constant 0 : index
    %3 = vector.load %arg4[%c0, %c0_1] : memref<512x64xf32, #tpu.memory_space<vmem>>, vector<512x64xf32>
    %c0_2 = arith.constant 0 : index
    %c0_3 = arith.constant 0 : index
    %4 = vector.load %arg5[%c0_2, %c0_3] : memref<512x64xf32, #tpu.memory_space<vmem>>, vector<512x64xf32>
    %c0_4 = arith.constant 0 : index
    %c0_5 = arith.constant 0 : index
    %5 = vector.load %arg6[%c0_4, %c0_5] : memref<512x64xf32, #tpu.memory_space<vmem>>, vector<512x64xf32>
    %6 = arith.mulf %4, %5 : vector<512x64xf32>
    %7 = arith.addf %3, %6 : vector<512x64xf32>
    %8 = arith.truncf %7 : vector<512x64xf32> to vector<512x64xbf16>
    %c0_6 = arith.constant 0 : index
    %c0_7 = arith.constant 0 : index
    %9 = vector.load %arg9[%c0_6, %c0_7] : memref<8x512xf32, #tpu.memory_space<vmem>>, vector<8x512xf32>
    %c0_8 = arith.constant 0 : index
    %c0_9 = arith.constant 0 : index
    %10 = vector.load %arg3[%c0_8, %c0_9] : memref<8x64xbf16, #tpu.memory_space<vmem>>, vector<8x64xbf16>
    %cst = arith.constant dense<0.000000e+00> : vector<8x512xf32>
    %11 = tpu.matmul %10, %8, %cst {dimension_numbers = #tpu.dot_dimension_numbers<[1], [1], [0], [0], [0, 0, 1, 0], [], []>} : vector<8x64xbf16>, vector<512x64xbf16>, vector<8x512xf32> -> vector<8x512xf32>
    %12 = arith.addf %9, %11 : vector<8x512xf32>
    %c0_10 = arith.constant 0 : index
    %c0_11 = arith.constant 0 : index
    %13 = vector.load %arg9[%c0_10, %c0_11] : memref<8x512xf32, #tpu.memory_space<vmem>>, vector<8x512xf32>
    tpu.vector_store %arg9[%c0_10, %c0_11], %12 {strides = array<i32>} : memref<8x512xf32, #tpu.memory_space<vmem>>, vector<8x512xf32>,
    %c0_i32_12 = arith.constant 0 : i32
    %14 = arith.cmpi eq, %arg2, %c0_i32_12 : i32
    %15 = arith.extui %14 : i1 to i32
    %c0_i32_13 = arith.constant 0 : i32
    %16 = arith.cmpi ne, %15, %c0_i32_13 : i32
    scf.if %16 {
      %c0_14 = arith.constant 0 : index
      %c0_15 = arith.constant 0 : index
      %17 = vector.load %arg9[%c0_14, %c0_15] : memref<8x512xf32, #tpu.memory_space<vmem>>, vector<8x512xf32>
      %c0_16 = arith.constant 0 : index
      %c0_17 = arith.constant 0 : index
      %18 = vector.load %arg7[%c0_16, %c0_17] : memref<1x512xf32, #tpu.memory_space<vmem>>, vector<1x512xf32>
      %19 = vector.broadcast %18 : vector<1x512xf32> to vector<8x512xf32>
      %20 = arith.addf %17, %19 : vector<8x512xf32>
      %cst_18 = arith.constant 0.000000e+00 : f32
      %21 = vector.broadcast %cst_18 : f32 to vector<8x512xf32>
      %22 = arith.maximumf %20, %21 : vector<8x512xf32>
      %23 = arith.truncf %22 : vector<8x512xf32> to vector<8x512xbf16>
      %c0_19 = arith.constant 0 : index
      %c0_20 = arith.constant 0 : index
      %24 = vector.load %arg8[%c0_19, %c0_20] : memref<8x512xbf16, #tpu.memory_space<vmem>>, vector<8x512xbf16>
      tpu.vector_store %arg8[%c0_19, %c0_20], %23 {strides = array<i32>} : memref<8x512xbf16, #tpu.memory_space<vmem>>, vector<8x512xbf16>,
    } else {
    }
    return
  }
  func.func @transform_0(%arg0: i32, %arg1: i32, %arg2: i32) -> (i32, i32) {
    %c0_i32 = arith.constant 0 : i32
    return %arg0, %arg2 : i32, i32
  }
  func.func @transform_1(%arg0: i32, %arg1: i32, %arg2: i32) -> (i32, i32) {
    %c0_i32 = arith.constant 0 : i32
    return %arg1, %arg2 : i32, i32
  }
  func.func @transform_2(%arg0: i32, %arg1: i32, %arg2: i32) -> (i32, i32) {
    %c0_i32 = arith.constant 0 : i32
    return %arg1, %arg2 : i32, i32
  }
  func.func @transform_3(%arg0: i32, %arg1: i32, %arg2: i32) -> (i32, i32) {
    %c0_i32 = arith.constant 0 : i32
    return %arg1, %arg2 : i32, i32
  }
  func.func @transform_4(%arg0: i32, %arg1: i32, %arg2: i32) -> (i32, i32) {
    %c0_i32 = arith.constant 0 : i32
    %c0_i32_0 = arith.constant 0 : i32
    return %c0_i32, %arg1 : i32, i32
  }
  func.func @transform_5(%arg0: i32, %arg1: i32, %arg2: i32) -> (i32, i32) {
    %c0_i32 = arith.constant 0 : i32
    return %arg0, %arg1 : i32, i32
  }
}

module attributes {stable_mosaic.version = 11 : i64} {
  func.func @_noisy_matmul_kernel(%arg0: i32, %arg1: i32, %arg2: i32, %arg3: memref<8x512xbf16, #tpu.memory_space<vmem>>, %arg4: memref<128x512xf32, #tpu.memory_space<vmem>>, %arg5: memref<128x512xf32, #tpu.memory_space<vmem>>, %arg6: memref<128x512xf32, #tpu.memory_space<vmem>>, %arg7: memref<1x128xf32, #tpu.memory_space<vmem>>, %arg8: memref<8x128xf32, #tpu.memory_space<vmem>>, %arg9: memref<8x128xf32, #tpu.memory_space<vmem>>) attributes {dimension_semantics = [#tpu.dimension_semantics<parallel>, #tpu.dimension_semantics<parallel>, #tpu.dimension_semantics<arbitrary>], iteration_bounds = array<i64: 1, 1, 1>, scalar_prefetch = 0 : i64, scratch_operands = 1 : i64, tpu.core_type = #tpu.core_type<tc>, window_params = [{transform_indices = @transform_0, window_bounds = array<i64: 8, 512>}, {transform_indices = @transform_1, window_bounds = array<i64: 128, 512>}, {transform_indices = @transform_2, window_bounds = array<i64: 128, 512>}, {transform_indices = @transform_3, window_bounds = array<i64: 128, 512>}, {transform_indices = @transform_4, window_bounds = array<i64: 1, 128>}, {transform_indices = @transform_5, window_bounds = array<i64: 8, 128>}]} {
    %c0_i32 = arith.constant 0 : i32
    %0 = arith.cmpi eq, %arg2, %c0_i32 : i32
    %1 = arith.extui %0 : i1 to i32
    %c0_i32_0 = arith.constant 0 : i32
    %2 = arith.cmpi ne, %1, %c0_i32_0 : i32
    scf.if %2 {
      %cst_14 = arith.constant 0.000000e+00 : f32
      %17 = vector.broadcast %cst_14 : f32 to vector<8x128xf32>
      %c0_15 = arith.constant 0 : index
      %c0_16 = arith.constant 0 : index
      %18 = vector.load %arg9[%c0_15, %c0_16] : memref<8x128xf32, #tpu.memory_space<vmem>>, vector<8x128xf32>
      tpu.vector_store %arg9[%c0_15, %c0_16], %17 {strides = array<i32>} : memref<8x128xf32, #tpu.memory_space<vmem>>, vector<8x128xf32>,
    } else {
    }
    %c0 = arith.constant 0 : index
    %c0_1 = arith.constant 0 : index
    %3 = vector.load %arg4[%c0, %c0_1] : memref<128x512xf32, #tpu.memory_space<vmem>>, vector<128x512xf32>
    %c0_2 = arith.constant 0 : index
    %c0_3 = arith.constant 0 : index
    %4 = vector.load %arg5[%c0_2, %c0_3] : memref<128x512xf32, #tpu.memory_space<vmem>>, vector<128x512xf32>
    %c0_4 = arith.constant 0 : index
    %c0_5 = arith.constant 0 : index
    %5 = vector.load %arg6[%c0_4, %c0_5] : memref<128x512xf32, #tpu.memory_space<vmem>>, vector<128x512xf32>
    %6 = arith.mulf %4, %5 : vector<128x512xf32>
    %7 = arith.addf %3, %6 : vector<128x512xf32>
    %8 = arith.truncf %7 : vector<128x512xf32> to vector<128x512xbf16>
    %c0_6 = arith.constant 0 : index
    %c0_7 = arith.constant 0 : index
    %9 = vector.load %arg9[%c0_6, %c0_7] : memref<8x128xf32, #tpu.memory_space<vmem>>, vector<8x128xf32>
    %c0_8 = arith.constant 0 : index
    %c0_9 = arith.constant 0 : index
    %10 = vector.load %arg3[%c0_8, %c0_9] : memref<8x512xbf16, #tpu.memory_space<vmem>>, vector<8x512xbf16>
    %cst = arith.constant dense<0.000000e+00> : vector<8x128xf32>
    %11 = tpu.matmul %10, %8, %cst {dimension_numbers = #tpu.dot_dimension_numbers<[1], [1], [0], [0], [0, 0, 1, 0], [], []>} : vector<8x512xbf16>, vector<128x512xbf16>, vector<8x128xf32> -> vector<8x128xf32>
    %12 = arith.addf %9, %11 : vector<8x128xf32>
    %c0_10 = arith.constant 0 : index
    %c0_11 = arith.constant 0 : index
    %13 = vector.load %arg9[%c0_10, %c0_11] : memref<8x128xf32, #tpu.memory_space<vmem>>, vector<8x128xf32>
    tpu.vector_store %arg9[%c0_10, %c0_11], %12 {strides = array<i32>} : memref<8x128xf32, #tpu.memory_space<vmem>>, vector<8x128xf32>,
    %c0_i32_12 = arith.constant 0 : i32
    %14 = arith.cmpi eq, %arg2, %c0_i32_12 : i32
    %15 = arith.extui %14 : i1 to i32
    %c0_i32_13 = arith.constant 0 : i32
    %16 = arith.cmpi ne, %15, %c0_i32_13 : i32
    scf.if %16 {
      %c0_14 = arith.constant 0 : index
      %c0_15 = arith.constant 0 : index
      %17 = vector.load %arg9[%c0_14, %c0_15] : memref<8x128xf32, #tpu.memory_space<vmem>>, vector<8x128xf32>
      %c0_16 = arith.constant 0 : index
      %c0_17 = arith.constant 0 : index
      %18 = vector.load %arg7[%c0_16, %c0_17] : memref<1x128xf32, #tpu.memory_space<vmem>>, vector<1x128xf32>
      %19 = vector.broadcast %18 : vector<1x128xf32> to vector<8x128xf32>
      %20 = arith.addf %17, %19 : vector<8x128xf32>
      %c0_18 = arith.constant 0 : index
      %c0_19 = arith.constant 0 : index
      %21 = vector.load %arg8[%c0_18, %c0_19] : memref<8x128xf32, #tpu.memory_space<vmem>>, vector<8x128xf32>
      tpu.vector_store %arg8[%c0_18, %c0_19], %20 {strides = array<i32>} : memref<8x128xf32, #tpu.memory_space<vmem>>, vector<8x128xf32>,
    } else {
    }
    return
  }
  func.func @transform_0(%arg0: i32, %arg1: i32, %arg2: i32) -> (i32, i32) {
    %c0_i32 = arith.constant 0 : i32
    return %arg0, %arg2 : i32, i32
  }
  func.func @transform_1(%arg0: i32, %arg1: i32, %arg2: i32) -> (i32, i32) {
    %c0_i32 = arith.constant 0 : i32
    return %arg1, %arg2 : i32, i32
  }
  func.func @transform_2(%arg0: i32, %arg1: i32, %arg2: i32) -> (i32, i32) {
    %c0_i32 = arith.constant 0 : i32
    return %arg1, %arg2 : i32, i32
  }
  func.func @transform_3(%arg0: i32, %arg1: i32, %arg2: i32) -> (i32, i32) {
    %c0_i32 = arith.constant 0 : i32
    return %arg1, %arg2 : i32, i32
  }
  func.func @transform_4(%arg0: i32, %arg1: i32, %arg2: i32) -> (i32, i32) {
    %c0_i32 = arith.constant 0 : i32
    %c0_i32_0 = arith.constant 0 : i32
    return %c0_i32, %arg1 : i32, i32
  }
  func.func @transform_5(%arg0: i32, %arg1: i32, %arg2: i32) -> (i32, i32) {
    %c0_i32 = arith.constant 0 : i32
    return %arg0, %arg1 : i32, i32
  }
}

</mosaic_0001>

<llo_original>
// kernel: noisy_dqn_forward.7
$region0: #{noisy_dqn_forward.7}
  #allocation0 [shape = 'u32[]', space=smem, size = 0x4, offset = 0x4, fixed_abs, tag = 'smem constant byte address 0x4 - core index']
  #allocation1 [shape = 'u32[144,128]{1,0:T(1,128)}', space=vmem, size = 0x12000, scoped, tag = 'internal scratch']
  #allocation2 [shape = 'f32[32,128]{1,0:T(8,128)}', space=vmem, size = 0x4000, scoped, tag = 'scratch operand']
  %s0 = inlined_call_operand.vmem [shape: bf16[32,256], index: 0, kind: input, shape index: {}]
  %s1 = inlined_call_operand.vmem [shape: bf16[256,128], index: 1, kind: input, shape index: {}]
  %s2 = inlined_call_operand.vmem [shape: f32[32,1], index: 2, kind: input, shape index: {}]
  %s3 = inlined_call_operand.vmem [shape: bf16[32,128], index: 3, kind: output, shape index: {}]
  %s4 = sld [smem:[#allocation0]]
  $region30: #{noisy_dqn_forward.7} parent=0
    _
  %s6 = ssub.s32 1, %s4
  %s7 = scalar_select 0, %s6, %s4
  // Predicated region
  $region2: #{noisy_dqn_forward.7} parent=0 // pred_check
    _
  $region3: #{noisy_dqn_forward.7} parent=0 // pred_check_branch
    %9 = sbr.rel (0) target = $region5
  $region4: #{noisy_dqn_forward.7} parent=0 // pred_region
    _
  $region5: #{noisy_dqn_forward.7} parent=0 // pred_fallthru
    _
  // Predicated region
  $region6: #{noisy_dqn_forward.7} parent=0 // pred_check
    _
  $region7: #{noisy_dqn_forward.7} parent=0 // pred_check_branch
    %11 = sbr.rel (0) target = $region9
  $region8: #{noisy_dqn_forward.7} parent=0 // pred_region
    _
  $region9: #{noisy_dqn_forward.7} parent=0 // pred_fallthru
    _
  // Predicated region
  $region10: #{noisy_dqn_forward.7} parent=0 // pred_check
    _
  $region11: #{noisy_dqn_forward.7} parent=0 // pred_check_branch
    %13 = sbr.rel (0) target = $region13
  $region12: #{noisy_dqn_forward.7} parent=0 // pred_region
    _
  $region13: #{noisy_dqn_forward.7} parent=0 // pred_fallthru
    _
  %p15 = scmp.eq.s32.totalorder 0, 0
  // Predicated region
  $region14: #{noisy_dqn_forward.7} parent=0 // pred_check
    %p16 = pneg %p15
  $region15: #{noisy_dqn_forward.7} parent=0 // pred_check_branch
    %18 = sbr.rel (%p16) target = $region17
  $region16: #{noisy_dqn_forward.7} parent=0 // pred_region
    %19 = vst [vmem:[#allocation2] sm:$0xff] 0.0
    %20 = vst [vmem:[#allocation2 + $0x8] sm:$0xff] 0.0
    %21 = vst [vmem:[#allocation2 + $0x10] sm:$0xff] 0.0
    %22 = vst [vmem:[#allocation2 + $0x18] sm:$0xff] 0.0
  $region17: #{noisy_dqn_forward.7} parent=0 // pred_fallthru
    _
  %v23 = vld [vmem:[#allocation2] sm:$0xff]
  %v24 = vld [vmem:[#allocation2 + $0x8] sm:$0xff]
  %v25 = vld [vmem:[#allocation2 + $0x10] sm:$0xff]
  %v26 = vld [vmem:[#allocation2 + $0x18] sm:$0xff]
  %v27 = vld [vmem:[%s0] sm:$0xff]
  %v28 = vld [vmem:[%s0 + $0x8] sm:$0xff]
  %v29 = vld [vmem:[%s0 + $0x10] sm:$0xff]
  %v30 = vld [vmem:[%s0 + $0x18] sm:$0xff]
  %v31 = vld [vmem:[%s1] sm:$0xf]
  %v32 = vld [vmem:[%s1 + $0x4] sm:$0xf]
  %v33 = vld [vmem:[%s1 + $0x8] sm:$0xf]
  %v34 = vld [vmem:[%s1 + $0xc] sm:$0xf]
  %v35 = vld [vmem:[%s1 + $0x10] sm:$0xf]
  %v36 = vld [vmem:[%s1 + $0x14] sm:$0xf]
  %v37 = vld [vmem:[%s1 + $0x18] sm:$0xf]
  %v38 = vld [vmem:[%s1 + $0x1c] sm:$0xf]
  %v39 = vld [vmem:[%s1 + $0x20] sm:$0xf]
  %v40 = vld [vmem:[%s1 + $0x24] sm:$0xf]
  %v41 = vld [vmem:[%s1 + $0x28] sm:$0xf]
  %v42 = vld [vmem:[%s1 + $0x2c] sm:$0xf]
  %v43 = vld [vmem:[%s1 + $0x30] sm:$0xf]
  %v44 = vld [vmem:[%s1 + $0x34] sm:$0xf]
  %v45 = vld [vmem:[%s1 + $0x38] sm:$0xf]
  %v46 = vld [vmem:[%s1 + $0x3c] sm:$0xf]
  %v47 = vld [vmem:[%s1 + $0x40] sm:$0xf]
  %v48 = vld [vmem:[%s1 + $0x44] sm:$0xf]
  %v49 = vld [vmem:[%s1 + $0x48] sm:$0xf]
  %v50 = vld [vmem:[%s1 + $0x4c] sm:$0xf]
  %v51 = vld [vmem:[%s1 + $0x50] sm:$0xf]
  %v52 = vld [vmem:[%s1 + $0x54] sm:$0xf]
  %v53 = vld [vmem:[%s1 + $0x58] sm:$0xf]
  %v54 = vld [vmem:[%s1 + $0x5c] sm:$0xf]
  %v55 = vld [vmem:[%s1 + $0x60] sm:$0xf]
  %v56 = vld [vmem:[%s1 + $0x64] sm:$0xf]
  %v57 = vld [vmem:[%s1 + $0x68] sm:$0xf]
  %v58 = vld [vmem:[%s1 + $0x6c] sm:$0xf]
  %v59 = vld [vmem:[%s1 + $0x70] sm:$0xf]
  %v60 = vld [vmem:[%s1 + $0x74] sm:$0xf]
  %v61 = vld [vmem:[%s1 + $0x78] sm:$0xf]
  %v62 = vld [vmem:[%s1 + $0x7c] sm:$0xf]
  %v67 = vunpack.c.l.b16 %v27
  %v68 = vunpack.c.h.b16 %v27
  %v69 = vunpack.c.l.b16 %v28
  %v70 = vunpack.c.h.b16 %v28
  %v71 = vunpack.c.l.b16 %v29
  %v72 = vunpack.c.h.b16 %v29
  %v73 = vunpack.c.l.b16 %v30
  %v74 = vunpack.c.h.b16 %v30
  %v75 = vpack.c.b16 %v69, %v67
  %v76 = vpack.c.b16 %v70, %v68
  %v77 = vpack.c.b16 %v73, %v71
  %v78 = vpack.c.b16 %v74, %v72
  %v115 = vunpack.c.l.b16 %v31
  %v116 = vunpack.c.l.b16 %v32
  %v117 = vunpack.c.l.b16 %v33
  %v118 = vunpack.c.l.b16 %v34
  %v119 = vunpack.c.l.b16 %v35
  %v120 = vunpack.c.l.b16 %v36
  %v121 = vunpack.c.l.b16 %v37
  %v122 = vunpack.c.l.b16 %v38
  %v123 = vunpack.c.l.b16 %v39
  %v124 = vunpack.c.l.b16 %v40
  %v125 = vunpack.c.l.b16 %v41
  %v126 = vunpack.c.l.b16 %v42
  %v127 = vunpack.c.l.b16 %v43
  %v128 = vunpack.c.l.b16 %v44
  %v129 = vunpack.c.l.b16 %v45
  %v130 = vunpack.c.l.b16 %v46
  %v131 = vunpack.c.l.b16 %v47
  %v132 = vunpack.c.l.b16 %v48
  %v133 = vunpack.c.l.b16 %v49
  %v134 = vunpack.c.l.b16 %v50
  %v135 = vunpack.c.l.b16 %v51
  %v136 = vunpack.c.l.b16 %v52
  %v137 = vunpack.c.l.b16 %v53
  %v138 = vunpack.c.l.b16 %v54
  %v139 = vunpack.c.l.b16 %v55
  %v140 = vunpack.c.l.b16 %v56
  %v141 = vunpack.c.l.b16 %v57
  %v142 = vunpack.c.l.b16 %v58
  %v143 = vunpack.c.l.b16 %v59
  %v144 = vunpack.c.l.b16 %v60
  %v145 = vunpack.c.l.b16 %v61
  %v146 = vunpack.c.l.b16 %v62
  %v147 = vpack.c.b16 %v116, %v115
  %v148 = vpack.c.b16 %v118, %v117
  %v149 = vpack.c.b16 %v120, %v119
  %v150 = vpack.c.b16 %v122, %v121
  %v151 = vpack.c.b16 %v124, %v123
  %v152 = vpack.c.b16 %v126, %v125
  %v153 = vpack.c.b16 %v128, %v127
  %v154 = vpack.c.b16 %v130, %v129
  %v155 = vpack.c.b16 %v132, %v131
  %v156 = vpack.c.b16 %v134, %v133
  %v157 = vpack.c.b16 %v136, %v135
  %v158 = vpack.c.b16 %v138, %v137
  %v159 = vpack.c.b16 %v140, %v139
  %v160 = vpack.c.b16 %v142, %v141
  %v161 = vpack.c.b16 %v144, %v143
  %v162 = vpack.c.b16 %v146, %v145
  %179 = vmatprep.subr.bf16.mxu0 0
  %180 = vmatpush1.bf16.msra.mxu0 %v147
  %181 = vmatprep.subr.bf16.mxu0 0
  %182 = vmatpush1.bf16.msra.mxu0 %v148
  %183 = vmatprep.subr.bf16.mxu0 0
  %184 = vmatpush1.bf16.msra.mxu0 %v149
  %185 = vmatprep.subr.bf16.mxu0 0
  %186 = vmatpush1.bf16.msra.mxu0 %v150
  %187 = vmatprep.subr.bf16.mxu0 0
  %188 = vmatpush1.bf16.msra.mxu0 %v151
  %189 = vmatprep.subr.bf16.mxu0 0
  %190 = vmatpush1.bf16.msra.mxu0 %v152
  %191 = vmatprep.subr.bf16.mxu0 0
  %192 = vmatpush1.bf16.msra.mxu0 %v153
  %193 = vmatprep.subr.bf16.mxu0 0
  %194 = vmatpush1.bf16.msra.mxu0 %v154
  %195 = vmatprep.subr.bf16.mxu0 0
  %196 = vmatpush1.bf16.msra.mxu0 %v155
  %197 = vmatprep.subr.bf16.mxu0 0
  %198 = vmatpush1.bf16.msra.mxu0 %v156
  %199 = vmatprep.subr.bf16.mxu0 0
  %200 = vmatpush1.bf16.msra.mxu0 %v157
  %201 = vmatprep.subr.bf16.mxu0 0
  %202 = vmatpush1.bf16.msra.mxu0 %v158
  %203 = vmatprep.subr.bf16.mxu0 0
  %204 = vmatpush1.bf16.msra.mxu0 %v159
  %205 = vmatprep.subr.bf16.mxu0 0
  %206 = vmatpush1.bf16.msra.mxu0 %v160
  %207 = vmatprep.subr.bf16.mxu0 0
  %208 = vmatpush1.bf16.msra.mxu0 %v161
  %209 = vmatprep.subr.bf16.mxu0 0
  %210 = vmatpush1.bf16.msra.mxu0 %v162
  %211 = vmatprep.mubr.bf16.mxu0 %v76
  %212 = vmatmul.mubr.bf16.gmra.mrb[0].mxu0 %v75
  %v213 = vpop.f32.mrb[0].mxu0
  %v214 = vadd.f32 0.0, %v213
  %v215 = vpop.f32.mrb[0].mxu0
  %v216 = vpop.f32.mrb[0].mxu0
  %v217 = vadd.f32 0.0, %v216
  %v218 = vpop.f32.mrb[0].mxu0
  %219 = vmatprep.mubr.bf16.mxu0 %v78
  %220 = vmatmul.mubr.bf16.gmra.mrb[0].mxu0 %v77
  %v221 = vpop.f32.mrb[0].mxu0
  %v222 = vadd.f32 0.0, %v221
  %v223 = vpop.f32.mrb[0].mxu0
  %v224 = vpop.f32.mrb[0].mxu0
  %v225 = vadd.f32 0.0, %v224
  %v226 = vpop.f32.mrb[0].mxu0
  %227 = vdwg.mxu0
  %v228 = vadd.f32 %v23, %v214
  %v229 = vadd.f32 %v24, %v217
  %v230 = vadd.f32 %v25, %v222
  %v231 = vadd.f32 %v26, %v225
  %232 = vst [vmem:[#allocation2] sm:$0xff] %v228
  %233 = vst [vmem:[#allocation2 + $0x8] sm:$0xff] %v229
  %234 = vst [vmem:[#allocation2 + $0x10] sm:$0xff] %v230
  %235 = vst [vmem:[#allocation2 + $0x18] sm:$0xff] %v231
  // Predicated region
  $region18: #{noisy_dqn_forward.7} parent=0 // pred_check
    %p236 = pneg %p15
  $region19: #{noisy_dqn_forward.7} parent=0 // pred_check_branch
    %238 = sbr.rel (%p236) target = $region21
  $region20: #{noisy_dqn_forward.7} parent=0 // pred_region
    %v239 = vld [vmem:[#allocation2] sm:$0xff]
    %v240 = vld [vmem:[#allocation2 + $0x8] sm:$0xff]
    %v241 = vld [vmem:[#allocation2 + $0x10] sm:$0xff]
    %v242 = vld [vmem:[#allocation2 + $0x18] sm:$0xff]
    %v243 = vld [vmem:[%s2] sm:$0xff]
    %v244 = vld [vmem:[%s2 + $0x8] sm:$0xff]
    %v245 = vld [vmem:[%s2 + $0x10] sm:$0xff]
    %v246 = vld [vmem:[%s2 + $0x18] sm:$0xff]
    %248 = vset.pattern.permute.xlu0 0
    %249 = vperm.xlu0 %248, %v243
    %v250 = vpop.permute.xlu0 %249
    %253 = vset.pattern.permute.xlu0 0
    %254 = vperm.xlu0 %253, %v244
    %v255 = vpop.permute.xlu0 %254
    %258 = vset.pattern.permute.xlu0 0
    %259 = vperm.xlu0 %258, %v245
    %v260 = vpop.permute.xlu0 %259
    %263 = vset.pattern.permute.xlu0 0
    %264 = vperm.xlu0 %263, %v246
    %v265 = vpop.permute.xlu0 %264
    %v267 = vadd.f32 %v239, %v250
    %v268 = vadd.f32 %v240, %v255
    %v269 = vadd.f32 %v241, %v260
    %v270 = vadd.f32 %v242, %v265
    %v271 = vmax.f32 %v267, 0.0
    %v272 = vmax.f32 %v268, 0.0
    %v273 = vmax.f32 %v269, 0.0
    %v274 = vmax.f32 %v270, 0.0
    %v275 = vpack.c.bf16 %v272, %v271
    %v276 = vpack.c.bf16 %v274, %v273
    %v279 = vunpack.c.l.b16 %v275
    %v280 = vunpack.c.h.b16 %v275
    %v281 = vunpack.c.l.b16 %v276
    %v282 = vunpack.c.h.b16 %v276
    %v283 = vpack.c.b16 %v279, %v279
    %v284 = vpack.c.b16 %v280, %v280
    %v285 = vpack.c.b16 %v281, %v281
    %v286 = vpack.c.b16 %v282, %v282
    %291 = vst [vmem:[%s3] sm:$0xf] %v283
    %292 = vst [vmem:[%s3 + $0x4] sm:$0xf] %v284
    %293 = vst [vmem:[%s3 + $0x8] sm:$0xf] %v285
    %294 = vst [vmem:[%s3 + $0xc] sm:$0xf] %v286
  $region21: #{noisy_dqn_forward.7} parent=0 // pred_fallthru
    _
  // Predicated region
  $region22: #{noisy_dqn_forward.7} parent=0 // pred_check
    _
  $region23: #{noisy_dqn_forward.7} parent=0 // pred_check_branch
    %296 = sbr.rel (0) target = $region25
  $region24: #{noisy_dqn_forward.7} parent=0 // pred_region
    _
  $region25: #{noisy_dqn_forward.7} parent=0 // pred_fallthru
    _
  // Predicated region
  $region26: #{noisy_dqn_forward.7} parent=0 // pred_check
    _
  $region27: #{noisy_dqn_forward.7} parent=0 // pred_check_branch
    %298 = sbr.rel (0) target = $region29
  $region28: #{noisy_dqn_forward.7} parent=0 // pred_region
    _
  $region29: #{noisy_dqn_forward.7} parent=0 // pred_fallthru
    _

// kernel: noisy_dqn_forward.8
$region0: #{noisy_dqn_forward.8}
  #allocation0 [shape = 'u32[]', space=smem, size = 0x4, offset = 0x4, fixed_abs, tag = 'smem constant byte address 0x4 - core index']
  #allocation1 [shape = 'u32[144,128]{1,0:T(1,128)}', space=vmem, size = 0x12000, scoped, tag = 'internal scratch']
  #allocation2 [shape = 'f32[64,128]{1,0:T(8,128)}', space=vmem, size = 0x8000, scoped, tag = 'scratch operand']
  %s0 = inlined_call_operand.vmem [shape: bf16[64,512], index: 0, kind: input, shape index: {}]
  %s1 = inlined_call_operand.vmem [shape: bf16[512,128], index: 1, kind: input, shape index: {}]
  %s2 = inlined_call_operand.vmem [shape: f32[64,1], index: 2, kind: input, shape index: {}]
  %s3 = inlined_call_operand.vmem [shape: bf16[64,128], index: 3, kind: output, shape index: {}]
  %s4 = sld [smem:[#allocation0]]
  $region30: #{noisy_dqn_forward.8} parent=0
    _
  %s6 = ssub.s32 1, %s4
  %s7 = scalar_select 0, %s6, %s4
  // Predicated region
  $region2: #{noisy_dqn_forward.8} parent=0 // pred_check
    _
  $region3: #{noisy_dqn_forward.8} parent=0 // pred_check_branch
    %9 = sbr.rel (0) target = $region5
  $region4: #{noisy_dqn_forward.8} parent=0 // pred_region
    _
  $region5: #{noisy_dqn_forward.8} parent=0 // pred_fallthru
    _
  // Predicated region
  $region6: #{noisy_dqn_forward.8} parent=0 // pred_check
    _
  $region7: #{noisy_dqn_forward.8} parent=0 // pred_check_branch
    %11 = sbr.rel (0) target = $region9
  $region8: #{noisy_dqn_forward.8} parent=0 // pred_region
    _
  $region9: #{noisy_dqn_forward.8} parent=0 // pred_fallthru
    _
  // Predicated region
  $region10: #{noisy_dqn_forward.8} parent=0 // pred_check
    _
  $region11: #{noisy_dqn_forward.8} parent=0 // pred_check_branch
    %13 = sbr.rel (0) target = $region13
  $region12: #{noisy_dqn_forward.8} parent=0 // pred_region
    _
  $region13: #{noisy_dqn_forward.8} parent=0 // pred_fallthru
    _
  %p15 = scmp.eq.s32.totalorder 0, 0
  // Predicated region
  $region14: #{noisy_dqn_forward.8} parent=0 // pred_check
    %p16 = pneg %p15
  $region15: #{noisy_dqn_forward.8} parent=0 // pred_check_branch
    %18 = sbr.rel (%p16) target = $region17
  $region16: #{noisy_dqn_forward.8} parent=0 // pred_region
    %19 = vst [vmem:[#allocation2] sm:$0xff] 0.0
    %20 = vst [vmem:[#allocation2 + $0x8] sm:$0xff] 0.0
    %21 = vst [vmem:[#allocation2 + $0x10] sm:$0xff] 0.0
    %22 = vst [vmem:[#allocation2 + $0x18] sm:$0xff] 0.0
    %23 = vst [vmem:[#allocation2 + $0x20] sm:$0xff] 0.0
    %24 = vst [vmem:[#allocation2 + $0x28] sm:$0xff] 0.0
    %25 = vst [vmem:[#allocation2 + $0x30] sm:$0xff] 0.0
    %26 = vst [vmem:[#allocation2 + $0x38] sm:$0xff] 0.0
  $region17: #{noisy_dqn_forward.8} parent=0 // pred_fallthru
    _
  %v27 = vld [vmem:[#allocation2] sm:$0xff]
  %v28 = vld [vmem:[#allocation2 + $0x8] sm:$0xff]
  %v29 = vld [vmem:[#allocation2 + $0x10] sm:$0xff]
  %v30 = vld [vmem:[#allocation2 + $0x18] sm:$0xff]
  %v31 = vld [vmem:[#allocation2 + $0x20] sm:$0xff]
  %v32 = vld [vmem:[#allocation2 + $0x28] sm:$0xff]
  %v33 = vld [vmem:[#allocation2 + $0x30] sm:$0xff]
  %v34 = vld [vmem:[#allocation2 + $0x38] sm:$0xff]
  %v35 = vld [vmem:[%s0] sm:$0xff]
  %v36 = vld [vmem:[%s0 + $0x8] sm:$0xff]
  %v37 = vld [vmem:[%s0 + $0x10] sm:$0xff]
  %v38 = vld [vmem:[%s0 + $0x18] sm:$0xff]
  %v39 = vld [vmem:[%s0 + $0x20] sm:$0xff]
  %v40 = vld [vmem:[%s0 + $0x28] sm:$0xff]
  %v41 = vld [vmem:[%s0 + $0x30] sm:$0xff]
  %v42 = vld [vmem:[%s0 + $0x38] sm:$0xff]
  %v43 = vld [vmem:[%s0 + $0x40] sm:$0xff]
  %v44 = vld [vmem:[%s0 + $0x48] sm:$0xff]
  %v45 = vld [vmem:[%s0 + $0x50] sm:$0xff]
  %v46 = vld [vmem:[%s0 + $0x58] sm:$0xff]
  %v47 = vld [vmem:[%s0 + $0x60] sm:$0xff]
  %v48 = vld [vmem:[%s0 + $0x68] sm:$0xff]
  %v49 = vld [vmem:[%s0 + $0x70] sm:$0xff]
  %v50 = vld [vmem:[%s0 + $0x78] sm:$0xff]
  %v51 = vld [vmem:[%s1] sm:$0xf]
  %v52 = vld [vmem:[%s1 + $0x4] sm:$0xf]
  %v53 = vld [vmem:[%s1 + $0x8] sm:$0xf]
  %v54 = vld [vmem:[%s1 + $0xc] sm:$0xf]
  %v55 = vld [vmem:[%s1 + $0x10] sm:$0xf]
  %v56 = vld [vmem:[%s1 + $0x14] sm:$0xf]
  %v57 = vld [vmem:[%s1 + $0x18] sm:$0xf]
  %v58 = vld [vmem:[%s1 + $0x1c] sm:$0xf]
  %v59 = vld [vmem:[%s1 + $0x20] sm:$0xf]
  %v60 = vld [vmem:[%s1 + $0x24] sm:$0xf]
  %v61 = vld [vmem:[%s1 + $0x28] sm:$0xf]
  %v62 = vld [vmem:[%s1 + $0x2c] sm:$0xf]
  %v63 = vld [vmem:[%s1 + $0x30] sm:$0xf]
  %v64 = vld [vmem:[%s1 + $0x34] sm:$0xf]
  %v65 = vld [vmem:[%s1 + $0x38] sm:$0xf]
  %v66 = vld [vmem:[%s1 + $0x3c] sm:$0xf]
  %v67 = vld [vmem:[%s1 + $0x40] sm:$0xf]
  %v68 = vld [vmem:[%s1 + $0x44] sm:$0xf]
  %v69 = vld [vmem:[%s1 + $0x48] sm:$0xf]
  %v70 = vld [vmem:[%s1 + $0x4c] sm:$0xf]
  %v71 = vld [vmem:[%s1 + $0x50] sm:$0xf]
  %v72 = vld [vmem:[%s1 + $0x54] sm:$0xf]
  %v73 = vld [vmem:[%s1 + $0x58] sm:$0xf]
  %v74 = vld [vmem:[%s1 + $0x5c] sm:$0xf]
  %v75 = vld [vmem:[%s1 + $0x60] sm:$0xf]
  %v76 = vld [vmem:[%s1 + $0x64] sm:$0xf]
  %v77 = vld [vmem:[%s1 + $0x68] sm:$0xf]
  %v78 = vld [vmem:[%s1 + $0x6c] sm:$0xf]
  %v79 = vld [vmem:[%s1 + $0x70] sm:$0xf]
  %v80 = vld [vmem:[%s1 + $0x74] sm:$0xf]
  %v81 = vld [vmem:[%s1 + $0x78] sm:$0xf]
  %v82 = vld [vmem:[%s1 + $0x7c] sm:$0xf]
  %v83 = vld [vmem:[%s1 + $0x80] sm:$0xf]
  %v84 = vld [vmem:[%s1 + $0x84] sm:$0xf]
  %v85 = vld [vmem:[%s1 + $0x88] sm:$0xf]
  %v86 = vld [vmem:[%s1 + $0x8c] sm:$0xf]
  %v87 = vld [vmem:[%s1 + $0x90] sm:$0xf]
  %v88 = vld [vmem:[%s1 + $0x94] sm:$0xf]
  %v89 = vld [vmem:[%s1 + $0x98] sm:$0xf]
  %v90 = vld [vmem:[%s1 + $0x9c] sm:$0xf]
  %v91 = vld [vmem:[%s1 + $0xa0] sm:$0xf]
  %v92 = vld [vmem:[%s1 + $0xa4] sm:$0xf]
  %v93 = vld [vmem:[%s1 + $0xa8] sm:$0xf]
  %v94 = vld [vmem:[%s1 + $0xac] sm:$0xf]
  %v95 = vld [vmem:[%s1 + $0xb0] sm:$0xf]
  %v96 = vld [vmem:[%s1 + $0xb4] sm:$0xf]
  %v97 = vld [vmem:[%s1 + $0xb8] sm:$0xf]
  %v98 = vld [vmem:[%s1 + $0xbc] sm:$0xf]
  %v99 = vld [vmem:[%s1 + $0xc0] sm:$0xf]
  %v100 = vld [vmem:[%s1 + $0xc4] sm:$0xf]
  %v101 = vld [vmem:[%s1 + $0xc8] sm:$0xf]
  %v102 = vld [vmem:[%s1 + $0xcc] sm:$0xf]
  %v103 = vld [vmem:[%s1 + $0xd0] sm:$0xf]
  %v104 = vld [vmem:[%s1 + $0xd4] sm:$0xf]
  %v105 = vld [vmem:[%s1 + $0xd8] sm:$0xf]
  %v106 = vld [vmem:[%s1 + $0xdc] sm:$0xf]
  %v107 = vld [vmem:[%s1 + $0xe0] sm:$0xf]
  %v108 = vld [vmem:[%s1 + $0xe4] sm:$0xf]
  %v109 = vld [vmem:[%s1 + $0xe8] sm:$0xf]
  %v110 = vld [vmem:[%s1 + $0xec] sm:$0xf]
  %v111 = vld [vmem:[%s1 + $0xf0] sm:$0xf]
  %v112 = vld [vmem:[%s1 + $0xf4] sm:$0xf]
  %v113 = vld [vmem:[%s1 + $0xf8] sm:$0xf]
  %v114 = vld [vmem:[%s1 + $0xfc] sm:$0xf]
  %v131 = vunpack.c.l.b16 %v35
  %v132 = vunpack.c.h.b16 %v35
  %v133 = vunpack.c.l.b16 %v36
  %v134 = vunpack.c.h.b16 %v36
  %v135 = vunpack.c.l.b16 %v37
  %v136 = vunpack.c.h.b16 %v37
  %v137 = vunpack.c.l.b16 %v38
  %v138 = vunpack.c.h.b16 %v38
  %v139 = vunpack.c.l.b16 %v39
  %v140 = vunpack.c.h.b16 %v39
  %v141 = vunpack.c.l.b16 %v40
  %v142 = vunpack.c.h.b16 %v40
  %v143 = vunpack.c.l.b16 %v41
  %v144 = vunpack.c.h.b16 %v41
  %v145 = vunpack.c.l.b16 %v42
  %v146 = vunpack.c.h.b16 %v42
  %v147 = vunpack.c.l.b16 %v43
  %v148 = vunpack.c.h.b16 %v43
  %v149 = vunpack.c.l.b16 %v44
  %v150 = vunpack.c.h.b16 %v44
  %v151 = vunpack.c.l.b16 %v45
  %v152 = vunpack.c.h.b16 %v45
  %v153 = vunpack.c.l.b16 %v46
  %v154 = vunpack.c.h.b16 %v46
  %v155 = vunpack.c.l.b16 %v47
  %v156 = vunpack.c.h.b16 %v47
  %v157 = vunpack.c.l.b16 %v48
  %v158 = vunpack.c.h.b16 %v48
  %v159 = vunpack.c.l.b16 %v49
  %v160 = vunpack.c.h.b16 %v49
  %v161 = vunpack.c.l.b16 %v50
  %v162 = vunpack.c.h.b16 %v50
  %v163 = vpack.c.b16 %v135, %v131
  %v164 = vpack.c.b16 %v136, %v132
  %v165 = vpack.c.b16 %v137, %v133
  %v166 = vpack.c.b16 %v138, %v134
  %v167 = vpack.c.b16 %v143, %v139
  %v168 = vpack.c.b16 %v144, %v140
  %v169 = vpack.c.b16 %v145, %v141
  %v170 = vpack.c.b16 %v146, %v142
  %v171 = vpack.c.b16 %v151, %v147
  %v172 = vpack.c.b16 %v152, %v148
  %v173 = vpack.c.b16 %v153, %v149
  %v174 = vpack.c.b16 %v154, %v150
  %v175 = vpack.c.b16 %v159, %v155
  %v176 = vpack.c.b16 %v160, %v156
  %v177 = vpack.c.b16 %v161, %v157
  %v178 = vpack.c.b16 %v162, %v158
  %v259 = vunpack.c.l.b16 %v51
  %v260 = vunpack.c.l.b16 %v52
  %v261 = vunpack.c.l.b16 %v53
  %v262 = vunpack.c.l.b16 %v54
  %v263 = vunpack.c.l.b16 %v55
  %v264 = vunpack.c.l.b16 %v56
  %v265 = vunpack.c.l.b16 %v57
  %v266 = vunpack.c.l.b16 %v58
  %v267 = vunpack.c.l.b16 %v59
  %v268 = vunpack.c.l.b16 %v60
  %v269 = vunpack.c.l.b16 %v61
  %v270 = vunpack.c.l.b16 %v62
  %v271 = vunpack.c.l.b16 %v63
  %v272 = vunpack.c.l.b16 %v64
  %v273 = vunpack.c.l.b16 %v65
  %v274 = vunpack.c.l.b16 %v66
  %v275 = vunpack.c.l.b16 %v67
  %v276 = vunpack.c.l.b16 %v68
  %v277 = vunpack.c.l.b16 %v69
  %v278 = vunpack.c.l.b16 %v70
  %v279 = vunpack.c.l.b16 %v71
  %v280 = vunpack.c.l.b16 %v72
  %v281 = vunpack.c.l.b16 %v73
  %v282 = vunpack.c.l.b16 %v74
  %v283 = vunpack.c.l.b16 %v75
  %v284 = vunpack.c.l.b16 %v76
  %v285 = vunpack.c.l.b16 %v77
  %v286 = vunpack.c.l.b16 %v78
  %v287 = vunpack.c.l.b16 %v79
  %v288 = vunpack.c.l.b16 %v80
  %v289 = vunpack.c.l.b16 %v81
  %v290 = vunpack.c.l.b16 %v82
  %v291 = vunpack.c.l.b16 %v83
  %v292 = vunpack.c.l.b16 %v84
  %v293 = vunpack.c.l.b16 %v85
  %v294 = vunpack.c.l.b16 %v86
  %v295 = vunpack.c.l.b16 %v87
  %v296 = vunpack.c.l.b16 %v88
  %v297 = vunpack.c.l.b16 %v89
  %v298 = vunpack.c.l.b16 %v90
  %v299 = vunpack.c.l.b16 %v91
  %v300 = vunpack.c.l.b16 %v92
  %v301 = vunpack.c.l.b16 %v93
  %v302 = vunpack.c.l.b16 %v94
  %v303 = vunpack.c.l.b16 %v95
  %v304 = vunpack.c.l.b16 %v96
  %v305 = vunpack.c.l.b16 %v97
  %v306 = vunpack.c.l.b16 %v98
  %v307 = vunpack.c.l.b16 %v99
  %v308 = vunpack.c.l.b16 %v100
  %v309 = vunpack.c.l.b16 %v101
  %v310 = vunpack.c.l.b16 %v102
  %v311 = vunpack.c.l.b16 %v103
  %v312 = vunpack.c.l.b16 %v104
  %v313 = vunpack.c.l.b16 %v105
  %v314 = vunpack.c.l.b16 %v106
  %v315 = vunpack.c.l.b16 %v107
  %v316 = vunpack.c.l.b16 %v108
  %v317 = vunpack.c.l.b16 %v109
  %v318 = vunpack.c.l.b16 %v110
  %v319 = vunpack.c.l.b16 %v111
  %v320 = vunpack.c.l.b16 %v112
  %v321 = vunpack.c.l.b16 %v113
  %v322 = vunpack.c.l.b16 %v114
  %v323 = vpack.c.b16 %v260, %v259
  %v324 = vpack.c.b16 %v262, %v261
  %v325 = vpack.c.b16 %v264, %v263
  %v326 = vpack.c.b16 %v266, %v265
  %v327 = vpack.c.b16 %v268, %v267
  %v328 = vpack.c.b16 %v270, %v269
  %v329 = vpack.c.b16 %v272, %v271
  %v330 = vpack.c.b16 %v274, %v273
  %v331 = vpack.c.b16 %v276, %v275
  %v332 = vpack.c.b16 %v278, %v277
  %v333 = vpack.c.b16 %v280, %v279
  %v334 = vpack.c.b16 %v282, %v281
  %v335 = vpack.c.b16 %v284, %v283
  %v336 = vpack.c.b16 %v286, %v285
  %v337 = vpack.c.b16 %v288, %v287
  %v338 = vpack.c.b16 %v290, %v289
  %v339 = vpack.c.b16 %v292, %v291
  %v340 = vpack.c.b16 %v294, %v293
  %v341 = vpack.c.b16 %v296, %v295
  %v342 = vpack.c.b16 %v298, %v297
  %v343 = vpack.c.b16 %v300, %v299
  %v344 = vpack.c.b16 %v302, %v301
  %v345 = vpack.c.b16 %v304, %v303
  %v346 = vpack.c.b16 %v306, %v305
  %v347 = vpack.c.b16 %v308, %v307
  %v348 = vpack.c.b16 %v310, %v309
  %v349 = vpack.c.b16 %v312, %v311
  %v350 = vpack.c.b16 %v314, %v313
  %v351 = vpack.c.b16 %v316, %v315
  %v352 = vpack.c.b16 %v318, %v317
  %v353 = vpack.c.b16 %v320, %v319
  %v354 = vpack.c.b16 %v322, %v321
  %387 = vmatprep.subr.bf16.mxu0 0
  %388 = vmatpush1.bf16.msra.mxu0 %v323
  %389 = vmatprep.subr.bf16.mxu0 0
  %390 = vmatpush1.bf16.msra.mxu0 %v324
  %391 = vmatprep.subr.bf16.mxu0 0
  %392 = vmatpush1.bf16.msra.mxu0 %v325
  %393 = vmatprep.subr.bf16.mxu0 0
  %394 = vmatpush1.bf16.msra.mxu0 %v326
  %395 = vmatprep.subr.bf16.mxu0 0
  %396 = vmatpush1.bf16.msra.mxu0 %v327
  %397 = vmatprep.subr.bf16.mxu0 0
  %398 = vmatpush1.bf16.msra.mxu0 %v328
  %399 = vmatprep.subr.bf16.mxu0 0
  %400 = vmatpush1.bf16.msra.mxu0 %v329
  %401 = vmatprep.subr.bf16.mxu0 0
  %402 = vmatpush1.bf16.msra.mxu0 %v330
  %403 = vmatprep.subr.bf16.mxu0 0
  %404 = vmatpush1.bf16.msra.mxu0 %v331
  %405 = vmatprep.subr.bf16.mxu0 0
  %406 = vmatpush1.bf16.msra.mxu0 %v332
  %407 = vmatprep.subr.bf16.mxu0 0
  %408 = vmatpush1.bf16.msra.mxu0 %v333
  %409 = vmatprep.subr.bf16.mxu0 0
  %410 = vmatpush1.bf16.msra.mxu0 %v334
  %411 = vmatprep.subr.bf16.mxu0 0
  %412 = vmatpush1.bf16.msra.mxu0 %v335
  %413 = vmatprep.subr.bf16.mxu0 0
  %414 = vmatpush1.bf16.msra.mxu0 %v336
  %415 = vmatprep.subr.bf16.mxu0 0
  %416 = vmatpush1.bf16.msra.mxu0 %v337
  %417 = vmatprep.subr.bf16.mxu0 0
  %418 = vmatpush1.bf16.msra.mxu0 %v338
  %419 = vmatprep.mubr.bf16.mxu0 %v164
  %420 = vmatmul.mubr.bf16.gmra.mrb[0].mxu0 %v163
  %v421 = vpop.f32.mrb[0].mxu0
  %v422 = vadd.f32 0.0, %v421
  %v423 = vpop.f32.mrb[0].mxu0
  %v424 = vpop.f32.mrb[0].mxu0
  %v425 = vadd.f32 0.0, %v424
  %v426 = vpop.f32.mrb[0].mxu0
  %427 = vmatprep.mubr.bf16.mxu0 %v168
  %428 = vmatmul.mubr.bf16.gmra.mrb[0].mxu0 %v167
  %v429 = vpop.f32.mrb[0].mxu0
  %v430 = vadd.f32 0.0, %v429
  %v431 = vpop.f32.mrb[0].mxu0
  %v432 = vpop.f32.mrb[0].mxu0
  %v433 = vadd.f32 0.0, %v432
  %v434 = vpop.f32.mrb[0].mxu0
  %435 = vmatprep.mubr.bf16.mxu0 %v172
  %436 = vmatmul.mubr.bf16.gmra.mrb[0].mxu0 %v171
  %v437 = vpop.f32.mrb[0].mxu0
  %v438 = vadd.f32 0.0, %v437
  %v439 = vpop.f32.mrb[0].mxu0
  %v440 = vpop.f32.mrb[0].mxu0
  %v441 = vadd.f32 0.0, %v440
  %v442 = vpop.f32.mrb[0].mxu0
  %443 = vmatprep.mubr.bf16.mxu0 %v176
  %444 = vmatmul.mubr.bf16.gmra.mrb[0].mxu0 %v175
  %v445 = vpop.f32.mrb[0].mxu0
  %v446 = vadd.f32 0.0, %v445
  %v447 = vpop.f32.mrb[0].mxu0
  %v448 = vpop.f32.mrb[0].mxu0
  %v449 = vadd.f32 0.0, %v448
  %v450 = vpop.f32.mrb[0].mxu0
  %451 = vdwg.mxu0
  %452 = vmatprep.subr.bf16.mxu0 0
  %453 = vmatpush1.bf16.msra.mxu0 %v339
  %454 = vmatprep.subr.bf16.mxu0 0
  %455 = vmatpush1.bf16.msra.mxu0 %v340
  %456 = vmatprep.subr.bf16.mxu0 0
  %457 = vmatpush1.bf16.msra.mxu0 %v341
  %458 = vmatprep.subr.bf16.mxu0 0
  %459 = vmatpush1.bf16.msra.mxu0 %v342
  %460 = vmatprep.subr.bf16.mxu0 0
  %461 = vmatpush1.bf16.msra.mxu0 %v343
  %462 = vmatprep.subr.bf16.mxu0 0
  %463 = vmatpush1.bf16.msra.mxu0 %v344
  %464 = vmatprep.subr.bf16.mxu0 0
  %465 = vmatpush1.bf16.msra.mxu0 %v345
  %466 = vmatprep.subr.bf16.mxu0 0
  %467 = vmatpush1.bf16.msra.mxu0 %v346
  %468 = vmatprep.subr.bf16.mxu0 0
  %469 = vmatpush1.bf16.msra.mxu0 %v347
  %470 = vmatprep.subr.bf16.mxu0 0
  %471 = vmatpush1.bf16.msra.mxu0 %v348
  %472 = vmatprep.subr.bf16.mxu0 0
  %473 = vmatpush1.bf16.msra.mxu0 %v349
  %474 = vmatprep.subr.bf16.mxu0 0
  %475 = vmatpush1.bf16.msra.mxu0 %v350
  %476 = vmatprep.subr.bf16.mxu0 0
  %477 = vmatpush1.bf16.msra.mxu0 %v351
  %478 = vmatprep.subr.bf16.mxu0 0
  %479 = vmatpush1.bf16.msra.mxu0 %v352
  %480 = vmatprep.subr.bf16.mxu0 0
  %481 = vmatpush1.bf16.msra.mxu0 %v353
  %482 = vmatprep.subr.bf16.mxu0 0
  %483 = vmatpush1.bf16.msra.mxu0 %v354
  %484 = vmatprep.mubr.bf16.mxu0 %v166
  %485 = vmatmul.mubr.bf16.gmra.mrb[0].mxu0 %v165
  %v486 = vpop.f32.mrb[0].mxu0
  %v487 = vadd.f32 %v422, %v486
  %v488 = vpop.f32.mrb[0].mxu0
  %v489 = vpop.f32.mrb[0].mxu0
  %v490 = vadd.f32 %v425, %v489
  %v491 = vpop.f32.mrb[0].mxu0
  %492 = vmatprep.mubr.bf16.mxu0 %v170
  %493 = vmatmul.mubr.bf16.gmra.mrb[0].mxu0 %v169
  %v494 = vpop.f32.mrb[0].mxu0
  %v495 = vadd.f32 %v430, %v494
  %v496 = vpop.f32.mrb[0].mxu0
  %v497 = vpop.f32.mrb[0].mxu0
  %v498 = vadd.f32 %v433, %v497
  %v499 = vpop.f32.mrb[0].mxu0
  %500 = vmatprep.mubr.bf16.mxu0 %v174
  %501 = vmatmul.mubr.bf16.gmra.mrb[0].mxu0 %v173
  %v502 = vpop.f32.mrb[0].mxu0
  %v503 = vadd.f32 %v438, %v502
  %v504 = vpop.f32.mrb[0].mxu0
  %v505 = vpop.f32.mrb[0].mxu0
  %v506 = vadd.f32 %v441, %v505
  %v507 = vpop.f32.mrb[0].mxu0
  %508 = vmatprep.mubr.bf16.mxu0 %v178
  %509 = vmatmul.mubr.bf16.gmra.mrb[0].mxu0 %v177
  %v510 = vpop.f32.mrb[0].mxu0
  %v511 = vadd.f32 %v446, %v510
  %v512 = vpop.f32.mrb[0].mxu0
  %v513 = vpop.f32.mrb[0].mxu0
  %v514 = vadd.f32 %v449, %v513
  %v515 = vpop.f32.mrb[0].mxu0
  %516 = vdwg.mxu0
  %v517 = vadd.f32 %v27, %v487
  %v518 = vadd.f32 %v28, %v490
  %v519 = vadd.f32 %v29, %v495
  %v520 = vadd.f32 %v30, %v498
  %v521 = vadd.f32 %v31, %v503
  %v522 = vadd.f32 %v32, %v506
  %v523 = vadd.f32 %v33, %v511
  %v524 = vadd.f32 %v34, %v514
  %525 = vst [vmem:[#allocation2] sm:$0xff] %v517
  %526 = vst [vmem:[#allocation2 + $0x8] sm:$0xff] %v518
  %527 = vst [vmem:[#allocation2 + $0x10] sm:$0xff] %v519
  %528 = vst [vmem:[#allocation2 + $0x18] sm:$0xff] %v520
  %529 = vst [vmem:[#allocation2 + $0x20] sm:$0xff] %v521
  %530 = vst [vmem:[#allocation2 + $0x28] sm:$0xff] %v522
  %531 = vst [vmem:[#allocation2 + $0x30] sm:$0xff] %v523
  %532 = vst [vmem:[#allocation2 + $0x38] sm:$0xff] %v524
  // Predicated region
  $region18: #{noisy_dqn_forward.8} parent=0 // pred_check
    %p533 = pneg %p15
  $region19: #{noisy_dqn_forward.8} parent=0 // pred_check_branch
    %535 = sbr.rel (%p533) target = $region21
  $region20: #{noisy_dqn_forward.8} parent=0 // pred_region
    %v536 = vld [vmem:[#allocation2] sm:$0xff]
    %v537 = vld [vmem:[#allocation2 + $0x8] sm:$0xff]
    %v538 = vld [vmem:[#allocation2 + $0x10] sm:$0xff]
    %v539 = vld [vmem:[#allocation2 + $0x18] sm:$0xff]
    %v540 = vld [vmem:[#allocation2 + $0x20] sm:$0xff]
    %v541 = vld [vmem:[#allocation2 + $0x28] sm:$0xff]
    %v542 = vld [vmem:[#allocation2 + $0x30] sm:$0xff]
    %v543 = vld [vmem:[#allocation2 + $0x38] sm:$0xff]
    %v544 = vld [vmem:[%s2] sm:$0xff]
    %v545 = vld [vmem:[%s2 + $0x8] sm:$0xff]
    %v546 = vld [vmem:[%s2 + $0x10] sm:$0xff]
    %v547 = vld [vmem:[%s2 + $0x18] sm:$0xff]
    %v548 = vld [vmem:[%s2 + $0x20] sm:$0xff]
    %v549 = vld [vmem:[%s2 + $0x28] sm:$0xff]
    %v550 = vld [vmem:[%s2 + $0x30] sm:$0xff]
    %v551 = vld [vmem:[%s2 + $0x38] sm:$0xff]
    %553 = vset.pattern.permute.xlu0 0
    %554 = vperm.xlu0 %553, %v544
    %v555 = vpop.permute.xlu0 %554
    %558 = vset.pattern.permute.xlu0 0
    %559 = vperm.xlu0 %558, %v545
    %v560 = vpop.permute.xlu0 %559
    %563 = vset.pattern.permute.xlu0 0
    %564 = vperm.xlu0 %563, %v546
    %v565 = vpop.permute.xlu0 %564
    %568 = vset.pattern.permute.xlu0 0
    %569 = vperm.xlu0 %568, %v547
    %v570 = vpop.permute.xlu0 %569
    %573 = vset.pattern.permute.xlu0 0
    %574 = vperm.xlu0 %573, %v548
    %v575 = vpop.permute.xlu0 %574
    %578 = vset.pattern.permute.xlu0 0
    %579 = vperm.xlu0 %578, %v549
    %v580 = vpop.permute.xlu0 %579
    %583 = vset.pattern.permute.xlu0 0
    %584 = vperm.xlu0 %583, %v550
    %v585 = vpop.permute.xlu0 %584
    %588 = vset.pattern.permute.xlu0 0
    %589 = vperm.xlu0 %588, %v551
    %v590 = vpop.permute.xlu0 %589
    %v592 = vadd.f32 %v536, %v555
    %v593 = vadd.f32 %v537, %v560
    %v594 = vadd.f32 %v538, %v565
    %v595 = vadd.f32 %v539, %v570
    %v596 = vadd.f32 %v540, %v575
    %v597 = vadd.f32 %v541, %v580
    %v598 = vadd.f32 %v542, %v585
    %v599 = vadd.f32 %v543, %v590
    %v600 = vmax.f32 %v592, 0.0
    %v601 = vmax.f32 %v593, 0.0
    %v602 = vmax.f32 %v594, 0.0
    %v603 = vmax.f32 %v595, 0.0
    %v604 = vmax.f32 %v596, 0.0
    %v605 = vmax.f32 %v597, 0.0
    %v606 = vmax.f32 %v598, 0.0
    %v607 = vmax.f32 %v599, 0.0
    %v608 = vpack.c.bf16 %v601, %v600
    %v609 = vpack.c.bf16 %v603, %v602
    %v610 = vpack.c.bf16 %v605, %v604
    %v611 = vpack.c.bf16 %v607, %v606
    %v616 = vunpack.c.l.b16 %v608
    %v617 = vunpack.c.h.b16 %v608
    %v618 = vunpack.c.l.b16 %v609
    %v619 = vunpack.c.h.b16 %v609
    %v620 = vunpack.c.l.b16 %v610
    %v621 = vunpack.c.h.b16 %v610
    %v622 = vunpack.c.l.b16 %v611
    %v623 = vunpack.c.h.b16 %v611
    %v624 = vpack.c.b16 %v616, %v616
    %v625 = vpack.c.b16 %v617, %v617
    %v626 = vpack.c.b16 %v618, %v618
    %v627 = vpack.c.b16 %v619, %v619
    %v628 = vpack.c.b16 %v620, %v620
    %v629 = vpack.c.b16 %v621, %v621
    %v630 = vpack.c.b16 %v622, %v622
    %v631 = vpack.c.b16 %v623, %v623
    %640 = vst [vmem:[%s3] sm:$0xf] %v624
    %641 = vst [vmem:[%s3 + $0x4] sm:$0xf] %v625
    %642 = vst [vmem:[%s3 + $0x8] sm:$0xf] %v626
    %643 = vst [vmem:[%s3 + $0xc] sm:$0xf] %v627
    %644 = vst [vmem:[%s3 + $0x10] sm:$0xf] %v628
    %645 = vst [vmem:[%s3 + $0x14] sm:$0xf] %v629
    %646 = vst [vmem:[%s3 + $0x18] sm:$0xf] %v630
    %647 = vst [vmem:[%s3 + $0x1c] sm:$0xf] %v631
  $region21: #{noisy_dqn_forward.8} parent=0 // pred_fallthru
    _
  // Predicated region
  $region22: #{noisy_dqn_forward.8} parent=0 // pred_check
    _
  $region23: #{noisy_dqn_forward.8} parent=0 // pred_check_branch
    %649 = sbr.rel (0) target = $region25
  $region24: #{noisy_dqn_forward.8} parent=0 // pred_region
    _
  $region25: #{noisy_dqn_forward.8} parent=0 // pred_fallthru
    _
  // Predicated region
  $region26: #{noisy_dqn_forward.8} parent=0 // pred_check
    _
  $region27: #{noisy_dqn_forward.8} parent=0 // pred_check_branch
    %651 = sbr.rel (0) target = $region29
  $region28: #{noisy_dqn_forward.8} parent=0 // pred_region
    _
  $region29: #{noisy_dqn_forward.8} parent=0 // pred_fallthru
    _

// kernel: noisy_dqn_forward.9
$region0: #{noisy_dqn_forward.9}
  #allocation0 [shape = 'u32[]', space=smem, size = 0x4, offset = 0x4, fixed_abs, tag = 'smem constant byte address 0x4 - core index']
  #allocation1 [shape = 'u32[144,128]{1,0:T(1,128)}', space=vmem, size = 0x12000, scoped, tag = 'internal scratch']
  #allocation2 [shape = 'f32[64,128]{1,0:T(8,128)}', space=vmem, size = 0x8000, scoped, tag = 'scratch operand']
  %s0 = inlined_call_operand.vmem [shape: bf16[64,1024], index: 0, kind: input, shape index: {}]
  %s1 = inlined_call_operand.vmem [shape: bf16[1024,128], index: 1, kind: input, shape index: {}]
  %s2 = inlined_call_operand.vmem [shape: f32[64,1], index: 2, kind: input, shape index: {}]
  %s3 = inlined_call_operand.vmem [shape: bf16[64,128], index: 3, kind: output, shape index: {}]
  %s4 = sld [smem:[#allocation0]]
  $region76: #{noisy_dqn_forward.9} parent=0
    _
  %s6 = ssub.s32 1, %s4
  %s7 = scalar_select 0, %s6, %s4
  $region1: #{noisy_dqn_forward.9} parent=0
    #allocation3 [shape = 'u8[131072]{0}', space=vmem, size = 0x20000, scoped, tag = 'input window, operand 0']
    loop: start=0, step=1, limit=4
    $region2: #{noisy_dqn_forward.9} parent=1 // loop_pre_header
      _
    $region3: #{noisy_dqn_forward.9} parent=1 // loop_header
      %s9 = sphi 0, %s13
      %p10 = scmp.ge.s32.totalorder %s9, 4
      %s16 = sphi 0, %s35
      %s17 = sphi 0, %s31
      %s18 = sphi 0, %s27
      %s19 = sphi 0, %s16
      %s20 = sphi 0, %s17
      %s21 = sphi 0, %s18
      %s22 = sphi 0, %s19
      %s23 = sphi 0, %s20
      %s24 = sphi 0, %s21
      %s40 = sphi 0, %s42
      %s43 = sphi 0, %s40
      %s44 = sphi 0, %s43
      %s60 = sphi 0, %s44
      %s68 = sphi 0, %s70
      %s71 = sphi 0, %s68
      %s72 = sphi 0, %s71
      %s88 = sphi 0, %s72
      %s94 = sphi 0, %s96
      %s97 = sphi 0, %s94
      %s98 = sphi 0, %s97
      %s114 = sphi 0, %s98
      %s122 = sphi 0, %s124
      %s125 = sphi 0, %s122
      %s126 = sphi 0, %s125
      %s142 = sphi 0, %s126
    $region4: #{noisy_dqn_forward.9} parent=1 // loop_header_branch
      %12 = sbr.rel (%p10) target = $region8
    $region5: #{noisy_dqn_forward.9} parent=1 // loop_body
      %s14 = ssub.s32 %s9, 1
      %s15 = ssub.s32 %s9, 2
      %s25 = sadd.s32 1, %s18
      %p26 = scmp.ge.s32.totalorder %s25, 2
      %s27 = scalar_select %p26, 0, %s25
      %s28 = sadd.s32 1, %s17
      %s29 = scalar_select %p26, %s28, %s17
      %p30 = scmp.ge.s32.totalorder %s29, 1
      %s31 = scalar_select %p30, 0, %s29
      %s32 = sadd.s32 1, %s16
      %s33 = scalar_select %p30, %s32, %s16
      %p34 = scmp.ge.s32.totalorder %s33, 1
      %s35 = scalar_select %p34, 0, %s33
      %s36 = ssub.s32 %s16, %s35
      %s37 = ssub.s32 %s18, %s27
      %s38 = sor.u32 %s36, %s37
      %p39 = scmp.eq.s32.totalorder %s38, 0
      %s41 = sadd.s32 %s40, 1
      %s42 = scalar_select %p39, %s40, %s41
      %p45 = pneg %p39
      %p46 = scmp.eq.s32.totalorder %s9, 1
      %p47 = por %p45, %p46
      %p48 = scmp.ne.s32.totalorder %s40, %s43
      %p49 = scmp.eq.s32.totalorder %s9, 0
      %p50 = por %p48, %p49
      %p51 = scmp.ne.s32.totalorder %s40, %s43
      %p52 = scmp.eq.s32.totalorder %s14, 1
      %p53 = por %p51, %p52
      %p54 = scmp.ne.s32.totalorder %s43, %s44
      %p55 = scmp.eq.s32.totalorder %s14, 0
      %p56 = por %p54, %p55
      %p57 = scmp.ne.s32.totalorder %s43, %s44
      %p58 = scmp.eq.s32.totalorder %s15, 1
      %p59 = por %p57, %p58
      %p61 = scmp.ne.s32.totalorder %s44, %s60
      %p62 = scmp.eq.s32.totalorder %s15, 0
      %p63 = por %p61, %p62
      %s64 = ssub.s32 %s18, %s27
      %s65 = ssub.s32 %s17, %s31
      %s66 = sor.u32 %s64, %s65
      %p67 = scmp.eq.s32.totalorder %s66, 0
      %s69 = sadd.s32 %s68, 1
      %s70 = scalar_select %p67, %s68, %s69
      %p73 = pneg %p67
      %p74 = scmp.eq.s32.totalorder %s9, 1
      %p75 = por %p73, %p74
      %p76 = scmp.ne.s32.totalorder %s68, %s71
      %p77 = scmp.eq.s32.totalorder %s9, 0
      %p78 = por %p76, %p77
      %p79 = scmp.ne.s32.totalorder %s68, %s71
      %p80 = scmp.eq.s32.totalorder %s14, 1
      %p81 = por %p79, %p80
      %p82 = scmp.ne.s32.totalorder %s71, %s72
      %p83 = scmp.eq.s32.totalorder %s14, 0
      %p84 = por %p82, %p83
      %p85 = scmp.ne.s32.totalorder %s71, %s72
      %p86 = scmp.eq.s32.totalorder %s15, 1
      %p87 = por %p85, %p86
      %p89 = scmp.ne.s32.totalorder %s72, %s88
      %p90 = scmp.eq.s32.totalorder %s15, 0
      %p91 = por %p89, %p90
      %s92 = ssub.s32 %s16, %s35
      %p93 = scmp.eq.s32.totalorder %s92, 0
      %s95 = sadd.s32 %s94, 1
      %s96 = scalar_select %p93, %s94, %s95
      %p99 = pneg %p93
      %p100 = scmp.eq.s32.totalorder %s9, 1
      %p101 = por %p99, %p100
      %p102 = scmp.ne.s32.totalorder %s94, %s97
      %p103 = scmp.eq.s32.totalorder %s9, 0
      %p104 = por %p102, %p103
      %p105 = scmp.ne.s32.totalorder %s94, %s97
      %p106 = scmp.eq.s32.totalorder %s14, 1
      %p107 = por %p105, %p106
      %p108 = scmp.ne.s32.totalorder %s97, %s98
      %p109 = scmp.eq.s32.totalorder %s14, 0
      %p110 = por %p108, %p109
      %p111 = scmp.ne.s32.totalorder %s97, %s98
      %p112 = scmp.eq.s32.totalorder %s15, 1
      %p113 = por %p111, %p112
      %p115 = scmp.ne.s32.totalorder %s98, %s114
      %p116 = scmp.eq.s32.totalorder %s15, 0
      %p117 = por %p115, %p116
      %s118 = ssub.s32 %s16, %s35
      %s119 = ssub.s32 %s17, %s31
      %s120 = sor.u32 %s118, %s119
      %p121 = scmp.eq.s32.totalorder %s120, 0
      %s123 = sadd.s32 %s122, 1
      %s124 = scalar_select %p121, %s122, %s123
      %p127 = pneg %p121
      %p128 = scmp.eq.s32.totalorder %s9, 1
      %p129 = por %p127, %p128
      %p130 = scmp.ne.s32.totalorder %s122, %s125
      %p131 = scmp.eq.s32.totalorder %s9, 0
      %p132 = por %p130, %p131
      %p133 = scmp.ne.s32.totalorder %s122, %s125
      %p134 = scmp.eq.s32.totalorder %s14, 1
      %p135 = por %p133, %p134
      %p136 = scmp.ne.s32.totalorder %s125, %s126
      %p137 = scmp.eq.s32.totalorder %s14, 0
      %p138 = por %p136, %p137
      %p139 = scmp.ne.s32.totalorder %s125, %s126
      %p140 = scmp.eq.s32.totalorder %s15, 1
      %p141 = por %p139, %p140
      %p143 = scmp.ne.s32.totalorder %s126, %s142
      %p144 = scmp.eq.s32.totalorder %s15, 0
      %p145 = por %p143, %p144
      %p146 = scmp.le.s32.totalorder 1, %s9
      %p147 = scmp.lt.s32.totalorder %s9, 3
      %p148 = pnand %p146, %p147
      %p149 = pneg %p148
      // Predicated region
      $region9: #{noisy_dqn_forward.9} parent=5 // pred_check
        _
      $region10: #{noisy_dqn_forward.9} parent=5 // pred_check_branch
        %151 = sbr.rel (%p148) target = $region12
      $region11: #{noisy_dqn_forward.9} parent=5 // pred_region
        %s152 = ssub.s32 %s9, 1
        // Predicated region
        $region13: #{noisy_dqn_forward.9} parent=11 // pred_check
          %p153 = pneg %p110
        $region14: #{noisy_dqn_forward.9} parent=11 // pred_check_branch
          %155 = sbr.rel (%p153) target = $region16
        $region15: #{noisy_dqn_forward.9} parent=11 // pred_region
          %s156 = smul.u32 8, %s19
          %p157 = scmp.lt.s32.totalorder %s156, 7
          %s158 = scalar_select %p157, %s156, 7
          %s159 = smul.addr %s158, 8
          %s160 = scalar_lea.vmem %s2, %s159
          %s161 = smul.u32 8, %s19
        $region16: #{noisy_dqn_forward.9} parent=11 // pred_fallthru
          _
      $region12: #{noisy_dqn_forward.9} parent=5 // pred_fallthru
        _
      %p162 = scmp.lt.s32.totalorder %s9, 2
      // Predicated region
      $region17: #{noisy_dqn_forward.9} parent=5 // pred_check
        %p163 = pneg %p162
      $region18: #{noisy_dqn_forward.9} parent=5 // pred_check_branch
        %165 = sbr.rel (%p163) target = $region20
      $region19: #{noisy_dqn_forward.9} parent=5 // pred_region
        // Predicated region
        $region21: #{noisy_dqn_forward.9} parent=19 // pred_check
          %p166 = pneg %p50
        $region22: #{noisy_dqn_forward.9} parent=19 // pred_check_branch
          %168 = sbr.rel (%p166) target = $region24
        $region23: #{noisy_dqn_forward.9} parent=19 // pred_region
          %s169 = sand.u32 %s40, 1
          %s170 = sand.u32 %s40, 1
          %s171 = smul.addr %s170, 128
          %s172 = scalar_lea.vmem [#allocation3], %s171
          %s173 = smul.u32 8, %s16
          %s174 = smul.u32 4, %s18
          %s175 = smul.addr %s173, 8
          %s176 = sadd.s32 %s174, %s175
          %s177 = smul.addr %s176, 4
          %s178 = scalar_lea.vmem %s0, %s177
          // Predicated region
          $region25: #{noisy_dqn_forward.9} parent=23 // pred_check
            _
          $region26: #{noisy_dqn_forward.9} parent=23 // pred_check_branch
            %180 = sbr.rel (0) target = $region28
          $region27: #{noisy_dqn_forward.9} parent=23 // pred_region
            // Predicated region
            $region29: #{noisy_dqn_forward.9} parent=27 // pred_check
              _
            $region30: #{noisy_dqn_forward.9} parent=27 // pred_check_branch
              %182 = sbr.rel (0) target = $region32
            $region31: #{noisy_dqn_forward.9} parent=27 // pred_region
              loop: start=0, step=1, limit=1
              $region33: #{noisy_dqn_forward.9} parent=31 // loop_pre_header
                _
              $region34: #{noisy_dqn_forward.9} parent=31 // loop_header
                %s184 = sphi 0, %s188
                %p185 = scmp.ge.s32.totalorder %s184, 1
                %s189 = sphi %s178, %s178
                %s190 = sphi %s172, %s172
              $region35: #{noisy_dqn_forward.9} parent=31 // loop_header_branch
                %187 = sbr.rel (%p185) target = $region39
              $region36: #{noisy_dqn_forward.9} parent=31 // loop_body
                %v191 = vld [vmem:[%s189] sm:$0xff]
                %192 = vst [vmem:[%s190] sm:$0xff] %v191
                %v193 = vld [vmem:[%s189 + $0x8] sm:$0xff]
                %194 = vst [vmem:[%s190 + $0x8] sm:$0xff] %v193
                %v195 = vld [vmem:[%s189 + $0x20] sm:$0xff]
                %196 = vst [vmem:[%s190 + $0x10] sm:$0xff] %v195
                %v197 = vld [vmem:[%s189 + $0x28] sm:$0xff]
                %198 = vst [vmem:[%s190 + $0x18] sm:$0xff] %v197
                %v199 = vld [vmem:[%s189 + $0x40] sm:$0xff]
                %200 = vst [vmem:[%s190 + $0x20] sm:$0xff] %v199
                %v201 = vld [vmem:[%s189 + $0x48] sm:$0xff]
                %202 = vst [vmem:[%s190 + $0x28] sm:$0xff] %v201
                %v203 = vld [vmem:[%s189 + $0x60] sm:$0xff]
                %204 = vst [vmem:[%s190 + $0x30] sm:$0xff] %v203
                %v205 = vld [vmem:[%s189 + $0x68] sm:$0xff]
                %206 = vst [vmem:[%s190 + $0x38] sm:$0xff] %v205
                %v207 = vld [vmem:[%s189 + $0x80] sm:$0xff]
                %208 = vst [vmem:[%s190 + $0x40] sm:$0xff] %v207
                %v209 = vld [vmem:[%s189 + $0x88] sm:$0xff]
                %210 = vst [vmem:[%s190 + $0x48] sm:$0xff] %v209
                %v211 = vld [vmem:[%s189 + $0xa0] sm:$0xff]
                %212 = vst [vmem:[%s190 + $0x50] sm:$0xff] %v211
                %v213 = vld [vmem:[%s189 + $0xa8] sm:$0xff]
                %214 = vst [vmem:[%s190 + $0x58] sm:$0xff] %v213
                %v215 = vld [vmem:[%s189 + $0xc0] sm:$0xff]
                %216 = vst [vmem:[%s190 + $0x60] sm:$0xff] %v215
                %v217 = vld [vmem:[%s189 + $0xc8] sm:$0xff]
                %218 = vst [vmem:[%s190 + $0x68] sm:$0xff] %v217
                %v219 = vld [vmem:[%s189 + $0xe0] sm:$0xff]
                %220 = vst [vmem:[%s190 + $0x70] sm:$0xff] %v219
                %v221 = vld [vmem:[%s189 + $0xe8] sm:$0xff]
                %222 = vst [vmem:[%s190 + $0x78] sm:$0xff] %v221
              $region37: #{noisy_dqn_forward.9} parent=31 // loop_footer
                %s188 = sadd.s32 1, %s184
              $region38: #{noisy_dqn_forward.9} parent=31 // loop_footer_branch
                %183 = sbr.rel target = $region34
              $region39: #{noisy_dqn_forward.9} parent=31 // loop_exit
                _
            $region32: #{noisy_dqn_forward.9} parent=27 // pred_fallthru
              _
            // Predicated region
            $region40: #{noisy_dqn_forward.9} parent=27 // pred_check
              _
            $region41: #{noisy_dqn_forward.9} parent=27 // pred_check_branch
              %224 = sbr.rel target = $region43
            $region42: #{noisy_dqn_forward.9} parent=27 // pred_region
              _
            $region43: #{noisy_dqn_forward.9} parent=27 // pred_fallthru
              _
          $region28: #{noisy_dqn_forward.9} parent=23 // pred_fallthru
            _
          %225 = vnop
        $region24: #{noisy_dqn_forward.9} parent=19 // pred_fallthru
          _
        // Predicated region
        $region44: #{noisy_dqn_forward.9} parent=19 // pred_check
          %p226 = pneg %p78
        $region45: #{noisy_dqn_forward.9} parent=19 // pred_check_branch
          %228 = sbr.rel (%p226) target = $region47
        $region46: #{noisy_dqn_forward.9} parent=19 // pred_region
          %s229 = smul.u32 64, %s18
          %p230 = scmp.lt.s32.totalorder %s229, 127
          %s231 = scalar_select %p230, %s229, 127
          %p232 = scmp.lt.s32.totalorder %s17, 0
          %s233 = scalar_select %p232, %s17, 0
          %s234 = sadd.s32 %s233, %s231
          %s235 = smul.addr %s234, 4
          %s236 = scalar_lea.vmem %s1, %s235
          %s237 = smul.u32 64, %s18
        $region47: #{noisy_dqn_forward.9} parent=19 // pred_fallthru
          _
      $region20: #{noisy_dqn_forward.9} parent=5 // pred_fallthru
        _
      %p238 = scmp.le.s32.totalorder 1, %s9
      %p239 = scmp.lt.s32.totalorder %s9, 3
      %p240 = pnand %p238, %p239
      %p241 = pneg %p240
      // Predicated region
      $region48: #{noisy_dqn_forward.9} parent=5 // pred_check
        _
      $region49: #{noisy_dqn_forward.9} parent=5 // pred_check_branch
        %243 = sbr.rel (%p240) target = $region51
      $region50: #{noisy_dqn_forward.9} parent=5 // pred_region
        %s244 = ssub.s32 %s9, 1
        %s245 = sand.u32 %s43, 1
        %s246 = sand.u32 %s43, 1
        %s247 = smul.addr %s246, 128
        %s248 = scalar_lea.vmem [#allocation3], %s247
        // Predicated region
        $region52: #{noisy_dqn_forward.9} parent=50 // pred_check
          %p249 = pneg %p56
        $region53: #{noisy_dqn_forward.9} parent=50 // pred_check_branch
          %251 = sbr.rel (%p249) target = $region55
        $region54: #{noisy_dqn_forward.9} parent=50 // pred_region
          _
        $region55: #{noisy_dqn_forward.9} parent=50 // pred_fallthru
          _
        %s252 = sand.u32 %s43, 1
        %s253 = sand.u32 %s43, 1
        %s254 = smul.addr %s253, 128
        %s255 = scalar_lea.vmem [#allocation3], %s254
        %p256 = pneg %p56
        %p257 = pneg %p53
        %s258 = smul.u32 64, %s21
        %p259 = scmp.lt.s32.totalorder %s258, 127
        %s260 = scalar_select %p259, %s258, 127
        %p261 = scmp.lt.s32.totalorder %s20, 0
        %s262 = scalar_select %p261, %s20, 0
        %s263 = sadd.s32 %s262, %s260
        %s264 = smul.addr %s263, 4
        %s265 = scalar_lea.vmem %s1, %s264
        %p266 = pneg %p84
        %p267 = pneg %p81
        %s268 = smul.u32 8, %s19
        %p269 = scmp.lt.s32.totalorder %s268, 7
        %s270 = scalar_select %p269, %s268, 7
        %s271 = smul.addr %s270, 8
        %s272 = scalar_lea.vmem %s2, %s271
        %p273 = pneg %p110
        %p274 = pneg %p107
        %p275 = pneg %p138
        %p276 = pneg %p135
        %s277 = smul.u32 8, %s19
        %p278 = scmp.lt.s32.totalorder %s277, 7
        %s279 = scalar_select %p278, %s277, 7
        %p280 = scmp.lt.s32.totalorder %s20, 0
        %s281 = scalar_select %p280, %s20, 0
        %s282 = sadd.s32 %s281, %s279
        %s283 = smul.addr %s282, 4
        %s284 = scalar_lea.vmem %s3, %s283
        %s285 = smul.u32 8, %s19
        %s286 = smul.u32 4, %s21
        %s287 = smul.u32 64, %s21
        %p288 = scmp.lt.s32.totalorder %s287, 127
        %s289 = scalar_select %p288, %s287, 127
        %p290 = scmp.lt.s32.totalorder %s20, 0
        %s291 = scalar_select %p290, %s20, 0
        %s292 = sadd.s32 %s291, %s289
        %s293 = smul.addr %s292, 4
        %s294 = scalar_lea.vmem %s1, %s293
        %s295 = smul.u32 64, %s21
        %s296 = smul.u32 8, %s19
        %p297 = scmp.lt.s32.totalorder %s296, 7
        %s298 = scalar_select %p297, %s296, 7
        %s299 = smul.addr %s298, 8
        %s300 = scalar_lea.vmem %s2, %s299
        %s301 = smul.u32 8, %s19
        %s302 = smul.u32 8, %s19
        %p303 = scmp.lt.s32.totalorder %s302, 7
        %s304 = scalar_select %p303, %s302, 7
        %p305 = scmp.lt.s32.totalorder %s20, 0
        %s306 = scalar_select %p305, %s20, 0
        %s307 = sadd.s32 %s306, %s304
        %s308 = smul.addr %s307, 4
        %s309 = scalar_lea.vmem %s3, %s308
        %s310 = smul.u32 8, %s19
        %p312 = scmp.eq.s32.totalorder %s21, 0
        // Predicated region
        $region56: #{noisy_dqn_forward.9} parent=50 // pred_check
          %p313 = pneg %p312
        $region57: #{noisy_dqn_forward.9} parent=50 // pred_check_branch
          %315 = sbr.rel (%p313) target = $region59
        $region58: #{noisy_dqn_forward.9} parent=50 // pred_region
          %316 = vst [vmem:[#allocation2] sm:$0xff] 0.0
          %317 = vst [vmem:[#allocation2 + $0x8] sm:$0xff] 0.0
          %318 = vst [vmem:[#allocation2 + $0x10] sm:$0xff] 0.0
          %319 = vst [vmem:[#allocation2 + $0x18] sm:$0xff] 0.0
          %320 = vst [vmem:[#allocation2 + $0x20] sm:$0xff] 0.0
          %321 = vst [vmem:[#allocation2 + $0x28] sm:$0xff] 0.0
          %322 = vst [vmem:[#allocation2 + $0x30] sm:$0xff] 0.0
          %323 = vst [vmem:[#allocation2 + $0x38] sm:$0xff] 0.0
        $region59: #{noisy_dqn_forward.9} parent=50 // pred_fallthru
          _
        %v324 = vld [vmem:[#allocation2] sm:$0xff]
        %v325 = vld [vmem:[#allocation2 + $0x8] sm:$0xff]
        %v326 = vld [vmem:[#allocation2 + $0x10] sm:$0xff]
        %v327 = vld [vmem:[#allocation2 + $0x18] sm:$0xff]
        %v328 = vld [vmem:[#allocation2 + $0x20] sm:$0xff]
        %v329 = vld [vmem:[#allocation2 + $0x28] sm:$0xff]
        %v330 = vld [vmem:[#allocation2 + $0x30] sm:$0xff]
        %v331 = vld [vmem:[#allocation2 + $0x38] sm:$0xff]
        %v332 = vld [vmem:[%s248] sm:$0xff]
        %v333 = vld [vmem:[%s248 + $0x8] sm:$0xff]
        %v334 = vld [vmem:[%s248 + $0x10] sm:$0xff]
        %v335 = vld [vmem:[%s248 + $0x18] sm:$0xff]
        %v336 = vld [vmem:[%s248 + $0x20] sm:$0xff]
        %v337 = vld [vmem:[%s248 + $0x28] sm:$0xff]
        %v338 = vld [vmem:[%s248 + $0x30] sm:$0xff]
        %v339 = vld [vmem:[%s248 + $0x38] sm:$0xff]
        %v340 = vld [vmem:[%s248 + $0x40] sm:$0xff]
        %v341 = vld [vmem:[%s248 + $0x48] sm:$0xff]
        %v342 = vld [vmem:[%s248 + $0x50] sm:$0xff]
        %v343 = vld [vmem:[%s248 + $0x58] sm:$0xff]
        %v344 = vld [vmem:[%s248 + $0x60] sm:$0xff]
        %v345 = vld [vmem:[%s248 + $0x68] sm:$0xff]
        %v346 = vld [vmem:[%s248 + $0x70] sm:$0xff]
        %v347 = vld [vmem:[%s248 + $0x78] sm:$0xff]
        %v348 = vld [vmem:[%s294] sm:$0xf]
        %v349 = vld [vmem:[%s294 + $0x4] sm:$0xf]
        %v350 = vld [vmem:[%s294 + $0x8] sm:$0xf]
        %v351 = vld [vmem:[%s294 + $0xc] sm:$0xf]
        %v352 = vld [vmem:[%s294 + $0x10] sm:$0xf]
        %v353 = vld [vmem:[%s294 + $0x14] sm:$0xf]
        %v354 = vld [vmem:[%s294 + $0x18] sm:$0xf]
        %v355 = vld [vmem:[%s294 + $0x1c] sm:$0xf]
        %v356 = vld [vmem:[%s294 + $0x20] sm:$0xf]
        %v357 = vld [vmem:[%s294 + $0x24] sm:$0xf]
        %v358 = vld [vmem:[%s294 + $0x28] sm:$0xf]
        %v359 = vld [vmem:[%s294 + $0x2c] sm:$0xf]
        %v360 = vld [vmem:[%s294 + $0x30] sm:$0xf]
        %v361 = vld [vmem:[%s294 + $0x34] sm:$0xf]
        %v362 = vld [vmem:[%s294 + $0x38] sm:$0xf]
        %v363 = vld [vmem:[%s294 + $0x3c] sm:$0xf]
        %v364 = vld [vmem:[%s294 + $0x40] sm:$0xf]
        %v365 = vld [vmem:[%s294 + $0x44] sm:$0xf]
        %v366 = vld [vmem:[%s294 + $0x48] sm:$0xf]
        %v367 = vld [vmem:[%s294 + $0x4c] sm:$0xf]
        %v368 = vld [vmem:[%s294 + $0x50] sm:$0xf]
        %v369 = vld [vmem:[%s294 + $0x54] sm:$0xf]
        %v370 = vld [vmem:[%s294 + $0x58] sm:$0xf]
        %v371 = vld [vmem:[%s294 + $0x5c] sm:$0xf]
        %v372 = vld [vmem:[%s294 + $0x60] sm:$0xf]
        %v373 = vld [vmem:[%s294 + $0x64] sm:$0xf]
        %v374 = vld [vmem:[%s294 + $0x68] sm:$0xf]
        %v375 = vld [vmem:[%s294 + $0x6c] sm:$0xf]
        %v376 = vld [vmem:[%s294 + $0x70] sm:$0xf]
        %v377 = vld [vmem:[%s294 + $0x74] sm:$0xf]
        %v378 = vld [vmem:[%s294 + $0x78] sm:$0xf]
        %v379 = vld [vmem:[%s294 + $0x7c] sm:$0xf]
        %v380 = vld [vmem:[%s294 + $0x80] sm:$0xf]
        %v381 = vld [vmem:[%s294 + $0x84] sm:$0xf]
        %v382 = vld [vmem:[%s294 + $0x88] sm:$0xf]
        %v383 = vld [vmem:[%s294 + $0x8c] sm:$0xf]
        %v384 = vld [vmem:[%s294 + $0x90] sm:$0xf]
        %v385 = vld [vmem:[%s294 + $0x94] sm:$0xf]
        %v386 = vld [vmem:[%s294 + $0x98] sm:$0xf]
        %v387 = vld [vmem:[%s294 + $0x9c] sm:$0xf]
        %v388 = vld [vmem:[%s294 + $0xa0] sm:$0xf]
        %v389 = vld [vmem:[%s294 + $0xa4] sm:$0xf]
        %v390 = vld [vmem:[%s294 + $0xa8] sm:$0xf]
        %v391 = vld [vmem:[%s294 + $0xac] sm:$0xf]
        %v392 = vld [vmem:[%s294 + $0xb0] sm:$0xf]
        %v393 = vld [vmem:[%s294 + $0xb4] sm:$0xf]
        %v394 = vld [vmem:[%s294 + $0xb8] sm:$0xf]
        %v395 = vld [vmem:[%s294 + $0xbc] sm:$0xf]
        %v396 = vld [vmem:[%s294 + $0xc0] sm:$0xf]
        %v397 = vld [vmem:[%s294 + $0xc4] sm:$0xf]
        %v398 = vld [vmem:[%s294 + $0xc8] sm:$0xf]
        %v399 = vld [vmem:[%s294 + $0xcc] sm:$0xf]
        %v400 = vld [vmem:[%s294 + $0xd0] sm:$0xf]
        %v401 = vld [vmem:[%s294 + $0xd4] sm:$0xf]
        %v402 = vld [vmem:[%s294 + $0xd8] sm:$0xf]
        %v403 = vld [vmem:[%s294 + $0xdc] sm:$0xf]
        %v404 = vld [vmem:[%s294 + $0xe0] sm:$0xf]
        %v405 = vld [vmem:[%s294 + $0xe4] sm:$0xf]
        %v406 = vld [vmem:[%s294 + $0xe8] sm:$0xf]
        %v407 = vld [vmem:[%s294 + $0xec] sm:$0xf]
        %v408 = vld [vmem:[%s294 + $0xf0] sm:$0xf]
        %v409 = vld [vmem:[%s294 + $0xf4] sm:$0xf]
        %v410 = vld [vmem:[%s294 + $0xf8] sm:$0xf]
        %v411 = vld [vmem:[%s294 + $0xfc] sm:$0xf]
        %v428 = vunpack.c.l.b16 %v332
        %v429 = vunpack.c.h.b16 %v332
        %v430 = vunpack.c.l.b16 %v333
        %v431 = vunpack.c.h.b16 %v333
        %v432 = vunpack.c.l.b16 %v334
        %v433 = vunpack.c.h.b16 %v334
        %v434 = vunpack.c.l.b16 %v335
        %v435 = vunpack.c.h.b16 %v335
        %v436 = vunpack.c.l.b16 %v336
        %v437 = vunpack.c.h.b16 %v336
        %v438 = vunpack.c.l.b16 %v337
        %v439 = vunpack.c.h.b16 %v337
        %v440 = vunpack.c.l.b16 %v338
        %v441 = vunpack.c.h.b16 %v338
        %v442 = vunpack.c.l.b16 %v339
        %v443 = vunpack.c.h.b16 %v339
        %v444 = vunpack.c.l.b16 %v340
        %v445 = vunpack.c.h.b16 %v340
        %v446 = vunpack.c.l.b16 %v341
        %v447 = vunpack.c.h.b16 %v341
        %v448 = vunpack.c.l.b16 %v342
        %v449 = vunpack.c.h.b16 %v342
        %v450 = vunpack.c.l.b16 %v343
        %v451 = vunpack.c.h.b16 %v343
        %v452 = vunpack.c.l.b16 %v344
        %v453 = vunpack.c.h.b16 %v344
        %v454 = vunpack.c.l.b16 %v345
        %v455 = vunpack.c.h.b16 %v345
        %v456 = vunpack.c.l.b16 %v346
        %v457 = vunpack.c.h.b16 %v346
        %v458 = vunpack.c.l.b16 %v347
        %v459 = vunpack.c.h.b16 %v347
        %v460 = vpack.c.b16 %v432, %v428
        %v461 = vpack.c.b16 %v433, %v429
        %v462 = vpack.c.b16 %v434, %v430
        %v463 = vpack.c.b16 %v435, %v431
        %v464 = vpack.c.b16 %v440, %v436
        %v465 = vpack.c.b16 %v441, %v437
        %v466 = vpack.c.b16 %v442, %v438
        %v467 = vpack.c.b16 %v443, %v439
        %v468 = vpack.c.b16 %v448, %v444
        %v469 = vpack.c.b16 %v449, %v445
        %v470 = vpack.c.b16 %v450, %v446
        %v471 = vpack.c.b16 %v451, %v447
        %v472 = vpack.c.b16 %v456, %v452
        %v473 = vpack.c.b16 %v457, %v453
        %v474 = vpack.c.b16 %v458, %v454
        %v475 = vpack.c.b16 %v459, %v455
        %v556 = vunpack.c.l.b16 %v348
        %v557 = vunpack.c.l.b16 %v349
        %v558 = vunpack.c.l.b16 %v350
        %v559 = vunpack.c.l.b16 %v351
        %v560 = vunpack.c.l.b16 %v352
        %v561 = vunpack.c.l.b16 %v353
        %v562 = vunpack.c.l.b16 %v354
        %v563 = vunpack.c.l.b16 %v355
        %v564 = vunpack.c.l.b16 %v356
        %v565 = vunpack.c.l.b16 %v357
        %v566 = vunpack.c.l.b16 %v358
        %v567 = vunpack.c.l.b16 %v359
        %v568 = vunpack.c.l.b16 %v360
        %v569 = vunpack.c.l.b16 %v361
        %v570 = vunpack.c.l.b16 %v362
        %v571 = vunpack.c.l.b16 %v363
        %v572 = vunpack.c.l.b16 %v364
        %v573 = vunpack.c.l.b16 %v365
        %v574 = vunpack.c.l.b16 %v366
        %v575 = vunpack.c.l.b16 %v367
        %v576 = vunpack.c.l.b16 %v368
        %v577 = vunpack.c.l.b16 %v369
        %v578 = vunpack.c.l.b16 %v370
        %v579 = vunpack.c.l.b16 %v371
        %v580 = vunpack.c.l.b16 %v372
        %v581 = vunpack.c.l.b16 %v373
        %v582 = vunpack.c.l.b16 %v374
        %v583 = vunpack.c.l.b16 %v375
        %v584 = vunpack.c.l.b16 %v376
        %v585 = vunpack.c.l.b16 %v377
        %v586 = vunpack.c.l.b16 %v378
        %v587 = vunpack.c.l.b16 %v379
        %v588 = vunpack.c.l.b16 %v380
        %v589 = vunpack.c.l.b16 %v381
        %v590 = vunpack.c.l.b16 %v382
        %v591 = vunpack.c.l.b16 %v383
        %v592 = vunpack.c.l.b16 %v384
        %v593 = vunpack.c.l.b16 %v385
        %v594 = vunpack.c.l.b16 %v386
        %v595 = vunpack.c.l.b16 %v387
        %v596 = vunpack.c.l.b16 %v388
        %v597 = vunpack.c.l.b16 %v389
        %v598 = vunpack.c.l.b16 %v390
        %v599 = vunpack.c.l.b16 %v391
        %v600 = vunpack.c.l.b16 %v392
        %v601 = vunpack.c.l.b16 %v393
        %v602 = vunpack.c.l.b16 %v394
        %v603 = vunpack.c.l.b16 %v395
        %v604 = vunpack.c.l.b16 %v396
        %v605 = vunpack.c.l.b16 %v397
        %v606 = vunpack.c.l.b16 %v398
        %v607 = vunpack.c.l.b16 %v399
        %v608 = vunpack.c.l.b16 %v400
        %v609 = vunpack.c.l.b16 %v401
        %v610 = vunpack.c.l.b16 %v402
        %v611 = vunpack.c.l.b16 %v403
        %v612 = vunpack.c.l.b16 %v404
        %v613 = vunpack.c.l.b16 %v405
        %v614 = vunpack.c.l.b16 %v406
        %v615 = vunpack.c.l.b16 %v407
        %v616 = vunpack.c.l.b16 %v408
        %v617 = vunpack.c.l.b16 %v409
        %v618 = vunpack.c.l.b16 %v410
        %v619 = vunpack.c.l.b16 %v411
        %v620 = vpack.c.b16 %v557, %v556
        %v621 = vpack.c.b16 %v559, %v558
        %v622 = vpack.c.b16 %v561, %v560
        %v623 = vpack.c.b16 %v563, %v562
        %v624 = vpack.c.b16 %v565, %v564
        %v625 = vpack.c.b16 %v567, %v566
        %v626 = vpack.c.b16 %v569, %v568
        %v627 = vpack.c.b16 %v571, %v570
        %v628 = vpack.c.b16 %v573, %v572
        %v629 = vpack.c.b16 %v575, %v574
        %v630 = vpack.c.b16 %v577, %v576
        %v631 = vpack.c.b16 %v579, %v578
        %v632 = vpack.c.b16 %v581, %v580
        %v633 = vpack.c.b16 %v583, %v582
        %v634 = vpack.c.b16 %v585, %v584
        %v635 = vpack.c.b16 %v587, %v586
        %v636 = vpack.c.b16 %v589, %v588
        %v637 = vpack.c.b16 %v591, %v590
        %v638 = vpack.c.b16 %v593, %v592
        %v639 = vpack.c.b16 %v595, %v594
        %v640 = vpack.c.b16 %v597, %v596
        %v641 = vpack.c.b16 %v599, %v598
        %v642 = vpack.c.b16 %v601, %v600
        %v643 = vpack.c.b16 %v603, %v602
        %v644 = vpack.c.b16 %v605, %v604
        %v645 = vpack.c.b16 %v607, %v606
        %v646 = vpack.c.b16 %v609, %v608
        %v647 = vpack.c.b16 %v611, %v610
        %v648 = vpack.c.b16 %v613, %v612
        %v649 = vpack.c.b16 %v615, %v614
        %v650 = vpack.c.b16 %v617, %v616
        %v651 = vpack.c.b16 %v619, %v618
        %684 = vmatprep.subr.bf16.mxu0 0
        %685 = vmatpush1.bf16.msra.mxu0 %v620
        %686 = vmatprep.subr.bf16.mxu0 0
        %687 = vmatpush1.bf16.msra.mxu0 %v621
        %688 = vmatprep.subr.bf16.mxu0 0
        %689 = vmatpush1.bf16.msra.mxu0 %v622
        %690 = vmatprep.subr.bf16.mxu0 0
        %691 = vmatpush1.bf16.msra.mxu0 %v623
        %692 = vmatprep.subr.bf16.mxu0 0
        %693 = vmatpush1.bf16.msra.mxu0 %v624
        %694 = vmatprep.subr.bf16.mxu0 0
        %695 = vmatpush1.bf16.msra.mxu0 %v625
        %696 = vmatprep.subr.bf16.mxu0 0
        %697 = vmatpush1.bf16.msra.mxu0 %v626
        %698 = vmatprep.subr.bf16.mxu0 0
        %699 = vmatpush1.bf16.msra.mxu0 %v627
        %700 = vmatprep.subr.bf16.mxu0 0
        %701 = vmatpush1.bf16.msra.mxu0 %v628
        %702 = vmatprep.subr.bf16.mxu0 0
        %703 = vmatpush1.bf16.msra.mxu0 %v629
        %704 = vmatprep.subr.bf16.mxu0 0
        %705 = vmatpush1.bf16.msra.mxu0 %v630
        %706 = vmatprep.subr.bf16.mxu0 0
        %707 = vmatpush1.bf16.msra.mxu0 %v631
        %708 = vmatprep.subr.bf16.mxu0 0
        %709 = vmatpush1.bf16.msra.mxu0 %v632
        %710 = vmatprep.subr.bf16.mxu0 0
        %711 = vmatpush1.bf16.msra.mxu0 %v633
        %712 = vmatprep.subr.bf16.mxu0 0
        %713 = vmatpush1.bf16.msra.mxu0 %v634
        %714 = vmatprep.subr.bf16.mxu0 0
        %715 = vmatpush1.bf16.msra.mxu0 %v635
        %716 = vmatprep.mubr.bf16.mxu0 %v461
        %717 = vmatmul.mubr.bf16.gmra.mrb[0].mxu0 %v460
        %v718 = vpop.f32.mrb[0].mxu0
        %v719 = vadd.f32 0.0, %v718
        %v720 = vpop.f32.mrb[0].mxu0
        %v721 = vpop.f32.mrb[0].mxu0
        %v722 = vadd.f32 0.0, %v721
        %v723 = vpop.f32.mrb[0].mxu0
        %724 = vmatprep.mubr.bf16.mxu0 %v465
        %725 = vmatmul.mubr.bf16.gmra.mrb[0].mxu0 %v464
        %v726 = vpop.f32.mrb[0].mxu0
        %v727 = vadd.f32 0.0, %v726
        %v728 = vpop.f32.mrb[0].mxu0
        %v729 = vpop.f32.mrb[0].mxu0
        %v730 = vadd.f32 0.0, %v729
        %v731 = vpop.f32.mrb[0].mxu0
        %732 = vmatprep.mubr.bf16.mxu0 %v469
        %733 = vmatmul.mubr.bf16.gmra.mrb[0].mxu0 %v468
        %v734 = vpop.f32.mrb[0].mxu0
        %v735 = vadd.f32 0.0, %v734
        %v736 = vpop.f32.mrb[0].mxu0
        %v737 = vpop.f32.mrb[0].mxu0
        %v738 = vadd.f32 0.0, %v737
        %v739 = vpop.f32.mrb[0].mxu0
        %740 = vmatprep.mubr.bf16.mxu0 %v473
        %741 = vmatmul.mubr.bf16.gmra.mrb[0].mxu0 %v472
        %v742 = vpop.f32.mrb[0].mxu0
        %v743 = vadd.f32 0.0, %v742
        %v744 = vpop.f32.mrb[0].mxu0
        %v745 = vpop.f32.mrb[0].mxu0
        %v746 = vadd.f32 0.0, %v745
        %v747 = vpop.f32.mrb[0].mxu0
        %748 = vdwg.mxu0
        %749 = vmatprep.subr.bf16.mxu0 0
        %750 = vmatpush1.bf16.msra.mxu0 %v636
        %751 = vmatprep.subr.bf16.mxu0 0
        %752 = vmatpush1.bf16.msra.mxu0 %v637
        %753 = vmatprep.subr.bf16.mxu0 0
        %754 = vmatpush1.bf16.msra.mxu0 %v638
        %755 = vmatprep.subr.bf16.mxu0 0
        %756 = vmatpush1.bf16.msra.mxu0 %v639
        %757 = vmatprep.subr.bf16.mxu0 0
        %758 = vmatpush1.bf16.msra.mxu0 %v640
        %759 = vmatprep.subr.bf16.mxu0 0
        %760 = vmatpush1.bf16.msra.mxu0 %v641
        %761 = vmatprep.subr.bf16.mxu0 0
        %762 = vmatpush1.bf16.msra.mxu0 %v642
        %763 = vmatprep.subr.bf16.mxu0 0
        %764 = vmatpush1.bf16.msra.mxu0 %v643
        %765 = vmatprep.subr.bf16.mxu0 0
        %766 = vmatpush1.bf16.msra.mxu0 %v644
        %767 = vmatprep.subr.bf16.mxu0 0
        %768 = vmatpush1.bf16.msra.mxu0 %v645
        %769 = vmatprep.subr.bf16.mxu0 0
        %770 = vmatpush1.bf16.msra.mxu0 %v646
        %771 = vmatprep.subr.bf16.mxu0 0
        %772 = vmatpush1.bf16.msra.mxu0 %v647
        %773 = vmatprep.subr.bf16.mxu0 0
        %774 = vmatpush1.bf16.msra.mxu0 %v648
        %775 = vmatprep.subr.bf16.mxu0 0
        %776 = vmatpush1.bf16.msra.mxu0 %v649
        %777 = vmatprep.subr.bf16.mxu0 0
        %778 = vmatpush1.bf16.msra.mxu0 %v650
        %779 = vmatprep.subr.bf16.mxu0 0
        %780 = vmatpush1.bf16.msra.mxu0 %v651
        %781 = vmatprep.mubr.bf16.mxu0 %v463
        %782 = vmatmul.mubr.bf16.gmra.mrb[0].mxu0 %v462
        %v783 = vpop.f32.mrb[0].mxu0
        %v784 = vadd.f32 %v719, %v783
        %v785 = vpop.f32.mrb[0].mxu0
        %v786 = vpop.f32.mrb[0].mxu0
        %v787 = vadd.f32 %v722, %v786
        %v788 = vpop.f32.mrb[0].mxu0
        %789 = vmatprep.mubr.bf16.mxu0 %v467
        %790 = vmatmul.mubr.bf16.gmra.mrb[0].mxu0 %v466
        %v791 = vpop.f32.mrb[0].mxu0
        %v792 = vadd.f32 %v727, %v791
        %v793 = vpop.f32.mrb[0].mxu0
        %v794 = vpop.f32.mrb[0].mxu0
        %v795 = vadd.f32 %v730, %v794
        %v796 = vpop.f32.mrb[0].mxu0
        %797 = vmatprep.mubr.bf16.mxu0 %v471
        %798 = vmatmul.mubr.bf16.gmra.mrb[0].mxu0 %v470
        %v799 = vpop.f32.mrb[0].mxu0
        %v800 = vadd.f32 %v735, %v799
        %v801 = vpop.f32.mrb[0].mxu0
        %v802 = vpop.f32.mrb[0].mxu0
        %v803 = vadd.f32 %v738, %v802
        %v804 = vpop.f32.mrb[0].mxu0
        %805 = vmatprep.mubr.bf16.mxu0 %v475
        %806 = vmatmul.mubr.bf16.gmra.mrb[0].mxu0 %v474
        %v807 = vpop.f32.mrb[0].mxu0
        %v808 = vadd.f32 %v743, %v807
        %v809 = vpop.f32.mrb[0].mxu0
        %v810 = vpop.f32.mrb[0].mxu0
        %v811 = vadd.f32 %v746, %v810
        %v812 = vpop.f32.mrb[0].mxu0
        %813 = vdwg.mxu0
        %v814 = vadd.f32 %v324, %v784
        %v815 = vadd.f32 %v325, %v787
        %v816 = vadd.f32 %v326, %v792
        %v817 = vadd.f32 %v327, %v795
        %v818 = vadd.f32 %v328, %v800
        %v819 = vadd.f32 %v329, %v803
        %v820 = vadd.f32 %v330, %v808
        %v821 = vadd.f32 %v331, %v811
        %822 = vst [vmem:[#allocation2] sm:$0xff] %v814
        %823 = vst [vmem:[#allocation2 + $0x8] sm:$0xff] %v815
        %824 = vst [vmem:[#allocation2 + $0x10] sm:$0xff] %v816
        %825 = vst [vmem:[#allocation2 + $0x18] sm:$0xff] %v817
        %826 = vst [vmem:[#allocation2 + $0x20] sm:$0xff] %v818
        %827 = vst [vmem:[#allocation2 + $0x28] sm:$0xff] %v819
        %828 = vst [vmem:[#allocation2 + $0x30] sm:$0xff] %v820
        %829 = vst [vmem:[#allocation2 + $0x38] sm:$0xff] %v821
        %p830 = scmp.eq.s32.totalorder %s21, 1
        // Predicated region
        $region60: #{noisy_dqn_forward.9} parent=50 // pred_check
          %p831 = pneg %p830
        $region61: #{noisy_dqn_forward.9} parent=50 // pred_check_branch
          %833 = sbr.rel (%p831) target = $region63
        $region62: #{noisy_dqn_forward.9} parent=50 // pred_region
          %v834 = vld [vmem:[#allocation2] sm:$0xff]
          %v835 = vld [vmem:[#allocation2 + $0x8] sm:$0xff]
          %v836 = vld [vmem:[#allocation2 + $0x10] sm:$0xff]
          %v837 = vld [vmem:[#allocation2 + $0x18] sm:$0xff]
          %v838 = vld [vmem:[#allocation2 + $0x20] sm:$0xff]
          %v839 = vld [vmem:[#allocation2 + $0x28] sm:$0xff]
          %v840 = vld [vmem:[#allocation2 + $0x30] sm:$0xff]
          %v841 = vld [vmem:[#allocation2 + $0x38] sm:$0xff]
          %v842 = vld [vmem:[%s300] sm:$0xff]
          %v843 = vld [vmem:[%s300 + $0x8] sm:$0xff]
          %v844 = vld [vmem:[%s300 + $0x10] sm:$0xff]
          %v845 = vld [vmem:[%s300 + $0x18] sm:$0xff]
          %v846 = vld [vmem:[%s300 + $0x20] sm:$0xff]
          %v847 = vld [vmem:[%s300 + $0x28] sm:$0xff]
          %v848 = vld [vmem:[%s300 + $0x30] sm:$0xff]
          %v849 = vld [vmem:[%s300 + $0x38] sm:$0xff]
          %851 = vset.pattern.permute.xlu0 0
          %852 = vperm.xlu0 %851, %v842
          %v853 = vpop.permute.xlu0 %852
          %856 = vset.pattern.permute.xlu0 0
          %857 = vperm.xlu0 %856, %v843
          %v858 = vpop.permute.xlu0 %857
          %861 = vset.pattern.permute.xlu0 0
          %862 = vperm.xlu0 %861, %v844
          %v863 = vpop.permute.xlu0 %862
          %866 = vset.pattern.permute.xlu0 0
          %867 = vperm.xlu0 %866, %v845
          %v868 = vpop.permute.xlu0 %867
          %871 = vset.pattern.permute.xlu0 0
          %872 = vperm.xlu0 %871, %v846
          %v873 = vpop.permute.xlu0 %872
          %876 = vset.pattern.permute.xlu0 0
          %877 = vperm.xlu0 %876, %v847
          %v878 = vpop.permute.xlu0 %877
          %881 = vset.pattern.permute.xlu0 0
          %882 = vperm.xlu0 %881, %v848
          %v883 = vpop.permute.xlu0 %882
          %886 = vset.pattern.permute.xlu0 0
          %887 = vperm.xlu0 %886, %v849
          %v888 = vpop.permute.xlu0 %887
          %v890 = vadd.f32 %v834, %v853
          %v891 = vadd.f32 %v835, %v858
          %v892 = vadd.f32 %v836, %v863
          %v893 = vadd.f32 %v837, %v868
          %v894 = vadd.f32 %v838, %v873
          %v895 = vadd.f32 %v839, %v878
          %v896 = vadd.f32 %v840, %v883
          %v897 = vadd.f32 %v841, %v888
          %v898 = vmax.f32 %v890, 0.0
          %v899 = vmax.f32 %v891, 0.0
          %v900 = vmax.f32 %v892, 0.0
          %v901 = vmax.f32 %v893, 0.0
          %v902 = vmax.f32 %v894, 0.0
          %v903 = vmax.f32 %v895, 0.0
          %v904 = vmax.f32 %v896, 0.0
          %v905 = vmax.f32 %v897, 0.0
          %v906 = vpack.c.bf16 %v899, %v898
          %v907 = vpack.c.bf16 %v901, %v900
          %v908 = vpack.c.bf16 %v903, %v902
          %v909 = vpack.c.bf16 %v905, %v904
          %v914 = vunpack.c.l.b16 %v906
          %v915 = vunpack.c.h.b16 %v906
          %v916 = vunpack.c.l.b16 %v907
          %v917 = vunpack.c.h.b16 %v907
          %v918 = vunpack.c.l.b16 %v908
          %v919 = vunpack.c.h.b16 %v908
          %v920 = vunpack.c.l.b16 %v909
          %v921 = vunpack.c.h.b16 %v909
          %v922 = vpack.c.b16 %v914, %v914
          %v923 = vpack.c.b16 %v915, %v915
          %v924 = vpack.c.b16 %v916, %v916
          %v925 = vpack.c.b16 %v917, %v917
          %v926 = vpack.c.b16 %v918, %v918
          %v927 = vpack.c.b16 %v919, %v919
          %v928 = vpack.c.b16 %v920, %v920
          %v929 = vpack.c.b16 %v921, %v921
          %938 = vst [vmem:[%s309] sm:$0xf] %v922
          %939 = vst [vmem:[%s309 + $0x4] sm:$0xf] %v923
          %940 = vst [vmem:[%s309 + $0x8] sm:$0xf] %v924
          %941 = vst [vmem:[%s309 + $0xc] sm:$0xf] %v925
          %942 = vst [vmem:[%s309 + $0x10] sm:$0xf] %v926
          %943 = vst [vmem:[%s309 + $0x14] sm:$0xf] %v927
          %944 = vst [vmem:[%s309 + $0x18] sm:$0xf] %v928
          %945 = vst [vmem:[%s309 + $0x1c] sm:$0xf] %v929
        $region63: #{noisy_dqn_forward.9} parent=50 // pred_fallthru
          _
        %s946 = smul.u32 8, %s19
        %p947 = scmp.lt.s32.totalorder %s946, 7
        %s948 = scalar_select %p947, %s946, 7
        %p949 = scmp.lt.s32.totalorder %s20, 0
        %s950 = scalar_select %p949, %s20, 0
        %s951 = sadd.s32 %s950, %s948
        %s952 = smul.addr %s951, 4
        %s953 = scalar_lea.vmem %s3, %s952
        // Predicated region
        $region64: #{noisy_dqn_forward.9} parent=50 // pred_check
          %p954 = pneg %p135
        $region65: #{noisy_dqn_forward.9} parent=50 // pred_check_branch
          %956 = sbr.rel (%p954) target = $region67
        $region66: #{noisy_dqn_forward.9} parent=50 // pred_region
          %s957 = smul.u32 8, %s19
        $region67: #{noisy_dqn_forward.9} parent=50 // pred_fallthru
          _
        // Predicated region
        $region68: #{noisy_dqn_forward.9} parent=50 // pred_check
          %p958 = pneg %p135
        $region69: #{noisy_dqn_forward.9} parent=50 // pred_check_branch
          %960 = sbr.rel (%p958) target = $region71
        $region70: #{noisy_dqn_forward.9} parent=50 // pred_region
          %s961 = smul.u32 8, %s19
          %p962 = scmp.lt.s32.totalorder %s961, 7
          %s963 = scalar_select %p962, %s961, 7
          %p964 = scmp.lt.s32.totalorder %s20, 0
          %s965 = scalar_select %p964, %s20, 0
          %s966 = sadd.s32 %s965, %s963
          %s967 = smul.addr %s966, 4
          %s968 = scalar_lea.vmem %s3, %s967
        $region71: #{noisy_dqn_forward.9} parent=50 // pred_fallthru
          _
      $region51: #{noisy_dqn_forward.9} parent=5 // pred_fallthru
        _
      %p969 = scmp.le.s32.totalorder 2, %s9
      // Predicated region
      $region72: #{noisy_dqn_forward.9} parent=5 // pred_check
        %p970 = pneg %p969
      $region73: #{noisy_dqn_forward.9} parent=5 // pred_check_branch
        %972 = sbr.rel (%p970) target = $region75
      $region74: #{noisy_dqn_forward.9} parent=5 // pred_region
        %s973 = ssub.s32 %s9, 2
      $region75: #{noisy_dqn_forward.9} parent=5 // pred_fallthru
        _
    $region6: #{noisy_dqn_forward.9} parent=1 // loop_footer
      %s13 = sadd.s32 1, %s9
    $region7: #{noisy_dqn_forward.9} parent=1 // loop_footer_branch
      %8 = sbr.rel target = $region3
    $region8: #{noisy_dqn_forward.9} parent=1 // loop_exit
      _

// kernel: noisy_dqn_forward.10
$region0: #{noisy_dqn_forward.10}
  #allocation0 [shape = 'u32[]', space=smem, size = 0x4, offset = 0x4, fixed_abs, tag = 'smem constant byte address 0x4 - core index']
  #allocation1 [shape = 'u32[144,128]{1,0:T(1,128)}', space=vmem, size = 0x12000, scoped, tag = 'internal scratch']
  #allocation2 [shape = 'f32[8,512]{1,0:T(8,128)}', space=vmem, size = 0x4000, scoped, tag = 'scratch operand']
  %s0 = inlined_call_operand.vmem [shape: bf16[8,64], index: 0, kind: input, shape index: {}]
  %s1 = inlined_call_operand.vmem [shape: f32[512,64], index: 1, kind: input, shape index: {}]
  %s2 = inlined_call_operand.vmem [shape: f32[512,64], index: 2, kind: input, shape index: {}]
  %s3 = inlined_call_operand.vmem [shape: f32[512,64], index: 3, kind: input, shape index: {}]
  %s4 = inlined_call_operand.vmem [shape: f32[1,512], index: 4, kind: input, shape index: {}]
  %s5 = inlined_call_operand.vmem [shape: bf16[8,512], index: 5, kind: output, shape index: {}]
  %s6 = sld [smem:[#allocation0]]
  $region38: #{noisy_dqn_forward.10} parent=0
    _
  %s8 = ssub.s32 1, %s6
  %s9 = scalar_select 0, %s8, %s6
  // Predicated region
  $region2: #{noisy_dqn_forward.10} parent=0 // pred_check
    _
  $region3: #{noisy_dqn_forward.10} parent=0 // pred_check_branch
    %11 = sbr.rel (0) target = $region5
  $region4: #{noisy_dqn_forward.10} parent=0 // pred_region
    _
  $region5: #{noisy_dqn_forward.10} parent=0 // pred_fallthru
    _
  // Predicated region
  $region6: #{noisy_dqn_forward.10} parent=0 // pred_check
    _
  $region7: #{noisy_dqn_forward.10} parent=0 // pred_check_branch
    %13 = sbr.rel (0) target = $region9
  $region8: #{noisy_dqn_forward.10} parent=0 // pred_region
    _
  $region9: #{noisy_dqn_forward.10} parent=0 // pred_fallthru
    _
  // Predicated region
  $region10: #{noisy_dqn_forward.10} parent=0 // pred_check
    _
  $region11: #{noisy_dqn_forward.10} parent=0 // pred_check_branch
    %15 = sbr.rel (0) target = $region13
  $region12: #{noisy_dqn_forward.10} parent=0 // pred_region
    _
  $region13: #{noisy_dqn_forward.10} parent=0 // pred_fallthru
    _
  // Predicated region
  $region14: #{noisy_dqn_forward.10} parent=0 // pred_check
    _
  $region15: #{noisy_dqn_forward.10} parent=0 // pred_check_branch
    %17 = sbr.rel (0) target = $region17
  $region16: #{noisy_dqn_forward.10} parent=0 // pred_region
    _
  $region17: #{noisy_dqn_forward.10} parent=0 // pred_fallthru
    _
  // Predicated region
  $region18: #{noisy_dqn_forward.10} parent=0 // pred_check
    _
  $region19: #{noisy_dqn_forward.10} parent=0 // pred_check_branch
    %19 = sbr.rel (0) target = $region21
  $region20: #{noisy_dqn_forward.10} parent=0 // pred_region
    _
  $region21: #{noisy_dqn_forward.10} parent=0 // pred_fallthru
    _
  %p21 = scmp.eq.s32.totalorder 0, 0
  // Predicated region
  $region22: #{noisy_dqn_forward.10} parent=0 // pred_check
    %p22 = pneg %p21
  $region23: #{noisy_dqn_forward.10} parent=0 // pred_check_branch
    %24 = sbr.rel (%p22) target = $region25
  $region24: #{noisy_dqn_forward.10} parent=0 // pred_region
    %25 = vst [vmem:[#allocation2] sm:$0xff] 0.0
    %26 = vst [vmem:[#allocation2 + $0x8] sm:$0xff] 0.0
    %27 = vst [vmem:[#allocation2 + $0x10] sm:$0xff] 0.0
    %28 = vst [vmem:[#allocation2 + $0x18] sm:$0xff] 0.0
  $region25: #{noisy_dqn_forward.10} parent=0 // pred_fallthru
    _
  %v29 = vld [vmem:[%s1] sm:$0xff]
  %v30 = vld [vmem:[%s1 + $0x8] sm:$0xff]
  %v31 = vld [vmem:[%s1 + $0x10] sm:$0xff]
  %v32 = vld [vmem:[%s1 + $0x18] sm:$0xff]
  %v33 = vld [vmem:[%s1 + $0x20] sm:$0xff]
  %v34 = vld [vmem:[%s1 + $0x28] sm:$0xff]
  %v35 = vld [vmem:[%s1 + $0x30] sm:$0xff]
  %v36 = vld [vmem:[%s1 + $0x38] sm:$0xff]
  %v37 = vld [vmem:[%s1 + $0x40] sm:$0xff]
  %v38 = vld [vmem:[%s1 + $0x48] sm:$0xff]
  %v39 = vld [vmem:[%s1 + $0x50] sm:$0xff]
  %v40 = vld [vmem:[%s1 + $0x58] sm:$0xff]
  %v41 = vld [vmem:[%s1 + $0x60] sm:$0xff]
  %v42 = vld [vmem:[%s1 + $0x68] sm:$0xff]
  %v43 = vld [vmem:[%s1 + $0x70] sm:$0xff]
  %v44 = vld [vmem:[%s1 + $0x78] sm:$0xff]
  %v45 = vld [vmem:[%s1 + $0x80] sm:$0xff]
  %v46 = vld [vmem:[%s1 + $0x88] sm:$0xff]
  %v47 = vld [vmem:[%s1 + $0x90] sm:$0xff]
  %v48 = vld [vmem:[%s1 + $0x98] sm:$0xff]
  %v49 = vld [vmem:[%s1 + $0xa0] sm:$0xff]
  %v50 = vld [vmem:[%s1 + $0xa8] sm:$0xff]
  %v51 = vld [vmem:[%s1 + $0xb0] sm:$0xff]
  %v52 = vld [vmem:[%s1 + $0xb8] sm:$0xff]
  %v53 = vld [vmem:[%s1 + $0xc0] sm:$0xff]
  %v54 = vld [vmem:[%s1 + $0xc8] sm:$0xff]
  %v55 = vld [vmem:[%s1 + $0xd0] sm:$0xff]
  %v56 = vld [vmem:[%s1 + $0xd8] sm:$0xff]
  %v57 = vld [vmem:[%s1 + $0xe0] sm:$0xff]
  %v58 = vld [vmem:[%s1 + $0xe8] sm:$0xff]
  %v59 = vld [vmem:[%s1 + $0xf0] sm:$0xff]
  %v60 = vld [vmem:[%s1 + $0xf8] sm:$0xff]
  %v61 = vld [vmem:[%s1 + $0x100] sm:$0xff]
  %v62 = vld [vmem:[%s1 + $0x108] sm:$0xff]
  %v63 = vld [vmem:[%s1 + $0x110] sm:$0xff]
  %v64 = vld [vmem:[%s1 + $0x118] sm:$0xff]
  %v65 = vld [vmem:[%s1 + $0x120] sm:$0xff]
  %v66 = vld [vmem:[%s1 + $0x128] sm:$0xff]
  %v67 = vld [vmem:[%s1 + $0x130] sm:$0xff]
  %v68 = vld [vmem:[%s1 + $0x138] sm:$0xff]
  %v69 = vld [vmem:[%s1 + $0x140] sm:$0xff]
  %v70 = vld [vmem:[%s1 + $0x148] sm:$0xff]
  %v71 = vld [vmem:[%s1 + $0x150] sm:$0xff]
  %v72 = vld [vmem:[%s1 + $0x158] sm:$0xff]
  %v73 = vld [vmem:[%s1 + $0x160] sm:$0xff]
  %v74 = vld [vmem:[%s1 + $0x168] sm:$0xff]
  %v75 = vld [vmem:[%s1 + $0x170] sm:$0xff]
  %v76 = vld [vmem:[%s1 + $0x178] sm:$0xff]
  %v77 = vld [vmem:[%s1 + $0x180] sm:$0xff]
  %v78 = vld [vmem:[%s1 + $0x188] sm:$0xff]
  %v79 = vld [vmem:[%s1 + $0x190] sm:$0xff]
  %v80 = vld [vmem:[%s1 + $0x198] sm:$0xff]
  %v81 = vld [vmem:[%s1 + $0x1a0] sm:$0xff]
  %v82 = vld [vmem:[%s1 + $0x1a8] sm:$0xff]
  %v83 = vld [vmem:[%s1 + $0x1b0] sm:$0xff]
  %v84 = vld [vmem:[%s1 + $0x1b8] sm:$0xff]
  %v85 = vld [vmem:[%s1 + $0x1c0] sm:$0xff]
  %v86 = vld [vmem:[%s1 + $0x1c8] sm:$0xff]
  %v87 = vld [vmem:[%s1 + $0x1d0] sm:$0xff]
  %v88 = vld [vmem:[%s1 + $0x1d8] sm:$0xff]
  %v89 = vld [vmem:[%s1 + $0x1e0] sm:$0xff]
  %v90 = vld [vmem:[%s1 + $0x1e8] sm:$0xff]
  %v91 = vld [vmem:[%s1 + $0x1f0] sm:$0xff]
  %v92 = vld [vmem:[%s1 + $0x1f8] sm:$0xff]
  %v93 = vld [vmem:[%s2] sm:$0xff]
  %v94 = vld [vmem:[%s2 + $0x8] sm:$0xff]
  %v95 = vld [vmem:[%s2 + $0x10] sm:$0xff]
  %v96 = vld [vmem:[%s2 + $0x18] sm:$0xff]
  %v97 = vld [vmem:[%s2 + $0x20] sm:$0xff]
  %v98 = vld [vmem:[%s2 + $0x28] sm:$0xff]
  %v99 = vld [vmem:[%s2 + $0x30] sm:$0xff]
  %v100 = vld [vmem:[%s2 + $0x38] sm:$0xff]
  %v101 = vld [vmem:[%s2 + $0x40] sm:$0xff]
  %v102 = vld [vmem:[%s2 + $0x48] sm:$0xff]
  %v103 = vld [vmem:[%s2 + $0x50] sm:$0xff]
  %v104 = vld [vmem:[%s2 + $0x58] sm:$0xff]
  %v105 = vld [vmem:[%s2 + $0x60] sm:$0xff]
  %v106 = vld [vmem:[%s2 + $0x68] sm:$0xff]
  %v107 = vld [vmem:[%s2 + $0x70] sm:$0xff]
  %v108 = vld [vmem:[%s2 + $0x78] sm:$0xff]
  %v109 = vld [vmem:[%s2 + $0x80] sm:$0xff]
  %v110 = vld [vmem:[%s2 + $0x88] sm:$0xff]
  %v111 = vld [vmem:[%s2 + $0x90] sm:$0xff]
  %v112 = vld [vmem:[%s2 + $0x98] sm:$0xff]
  %v113 = vld [vmem:[%s2 + $0xa0] sm:$0xff]
  %v114 = vld [vmem:[%s2 + $0xa8] sm:$0xff]
  %v115 = vld [vmem:[%s2 + $0xb0] sm:$0xff]
  %v116 = vld [vmem:[%s2 + $0xb8] sm:$0xff]
  %v117 = vld [vmem:[%s2 + $0xc0] sm:$0xff]
  %v118 = vld [vmem:[%s2 + $0xc8] sm:$0xff]
  %v119 = vld [vmem:[%s2 + $0xd0] sm:$0xff]
  %v120 = vld [vmem:[%s2 + $0xd8] sm:$0xff]
  %v121 = vld [vmem:[%s2 + $0xe0] sm:$0xff]
  %v122 = vld [vmem:[%s2 + $0xe8] sm:$0xff]
  %v123 = vld [vmem:[%s2 + $0xf0] sm:$0xff]
  %v124 = vld [vmem:[%s2 + $0xf8] sm:$0xff]
  %v125 = vld [vmem:[%s2 + $0x100] sm:$0xff]
  %v126 = vld [vmem:[%s2 + $0x108] sm:$0xff]
  %v127 = vld [vmem:[%s2 + $0x110] sm:$0xff]
  %v128 = vld [vmem:[%s2 + $0x118] sm:$0xff]
  %v129 = vld [vmem:[%s2 + $0x120] sm:$0xff]
  %v130 = vld [vmem:[%s2 + $0x128] sm:$0xff]
  %v131 = vld [vmem:[%s2 + $0x130] sm:$0xff]
  %v132 = vld [vmem:[%s2 + $0x138] sm:$0xff]
  %v133 = vld [vmem:[%s2 + $0x140] sm:$0xff]
  %v134 = vld [vmem:[%s2 + $0x148] sm:$0xff]
  %v135 = vld [vmem:[%s2 + $0x150] sm:$0xff]
  %v136 = vld [vmem:[%s2 + $0x158] sm:$0xff]
  %v137 = vld [vmem:[%s2 + $0x160] sm:$0xff]
  %v138 = vld [vmem:[%s2 + $0x168] sm:$0xff]
  %v139 = vld [vmem:[%s2 + $0x170] sm:$0xff]
  %v140 = vld [vmem:[%s2 + $0x178] sm:$0xff]
  %v141 = vld [vmem:[%s2 + $0x180] sm:$0xff]
  %v142 = vld [vmem:[%s2 + $0x188] sm:$0xff]
  %v143 = vld [vmem:[%s2 + $0x190] sm:$0xff]
  %v144 = vld [vmem:[%s2 + $0x198] sm:$0xff]
  %v145 = vld [vmem:[%s2 + $0x1a0] sm:$0xff]
  %v146 = vld [vmem:[%s2 + $0x1a8] sm:$0xff]
  %v147 = vld [vmem:[%s2 + $0x1b0] sm:$0xff]
  %v148 = vld [vmem:[%s2 + $0x1b8] sm:$0xff]
  %v149 = vld [vmem:[%s2 + $0x1c0] sm:$0xff]
  %v150 = vld [vmem:[%s2 + $0x1c8] sm:$0xff]
  %v151 = vld [vmem:[%s2 + $0x1d0] sm:$0xff]
  %v152 = vld [vmem:[%s2 + $0x1d8] sm:$0xff]
  %v153 = vld [vmem:[%s2 + $0x1e0] sm:$0xff]
  %v154 = vld [vmem:[%s2 + $0x1e8] sm:$0xff]
  %v155 = vld [vmem:[%s2 + $0x1f0] sm:$0xff]
  %v156 = vld [vmem:[%s2 + $0x1f8] sm:$0xff]
  %v157 = vld [vmem:[%s3] sm:$0xff]
  %v158 = vld [vmem:[%s3 + $0x8] sm:$0xff]
  %v159 = vld [vmem:[%s3 + $0x10] sm:$0xff]
  %v160 = vld [vmem:[%s3 + $0x18] sm:$0xff]
  %v161 = vld [vmem:[%s3 + $0x20] sm:$0xff]
  %v162 = vld [vmem:[%s3 + $0x28] sm:$0xff]
  %v163 = vld [vmem:[%s3 + $0x30] sm:$0xff]
  %v164 = vld [vmem:[%s3 + $0x38] sm:$0xff]
  %v165 = vld [vmem:[%s3 + $0x40] sm:$0xff]
  %v166 = vld [vmem:[%s3 + $0x48] sm:$0xff]
  %v167 = vld [vmem:[%s3 + $0x50] sm:$0xff]
  %v168 = vld [vmem:[%s3 + $0x58] sm:$0xff]
  %v169 = vld [vmem:[%s3 + $0x60] sm:$0xff]
  %v170 = vld [vmem:[%s3 + $0x68] sm:$0xff]
  %v171 = vld [vmem:[%s3 + $0x70] sm:$0xff]
  %v172 = vld [vmem:[%s3 + $0x78] sm:$0xff]
  %v173 = vld [vmem:[%s3 + $0x80] sm:$0xff]
  %v174 = vld [vmem:[%s3 + $0x88] sm:$0xff]
  %v175 = vld [vmem:[%s3 + $0x90] sm:$0xff]
  %v176 = vld [vmem:[%s3 + $0x98] sm:$0xff]
  %v177 = vld [vmem:[%s3 + $0xa0] sm:$0xff]
  %v178 = vld [vmem:[%s3 + $0xa8] sm:$0xff]
  %v179 = vld [vmem:[%s3 + $0xb0] sm:$0xff]
  %v180 = vld [vmem:[%s3 + $0xb8] sm:$0xff]
  %v181 = vld [vmem:[%s3 + $0xc0] sm:$0xff]
  %v182 = vld [vmem:[%s3 + $0xc8] sm:$0xff]
  %v183 = vld [vmem:[%s3 + $0xd0] sm:$0xff]
  %v184 = vld [vmem:[%s3 + $0xd8] sm:$0xff]
  %v185 = vld [vmem:[%s3 + $0xe0] sm:$0xff]
  %v186 = vld [vmem:[%s3 + $0xe8] sm:$0xff]
  %v187 = vld [vmem:[%s3 + $0xf0] sm:$0xff]
  %v188 = vld [vmem:[%s3 + $0xf8] sm:$0xff]
  %v189 = vld [vmem:[%s3 + $0x100] sm:$0xff]
  %v190 = vld [vmem:[%s3 + $0x108] sm:$0xff]
  %v191 = vld [vmem:[%s3 + $0x110] sm:$0xff]
  %v192 = vld [vmem:[%s3 + $0x118] sm:$0xff]
  %v193 = vld [vmem:[%s3 + $0x120] sm:$0xff]
  %v194 = vld [vmem:[%s3 + $0x128] sm:$0xff]
  %v195 = vld [vmem:[%s3 + $0x130] sm:$0xff]
  %v196 = vld [vmem:[%s3 + $0x138] sm:$0xff]
  %v197 = vld [vmem:[%s3 + $0x140] sm:$0xff]
  %v198 = vld [vmem:[%s3 + $0x148] sm:$0xff]
  %v199 = vld [vmem:[%s3 + $0x150] sm:$0xff]
  %v200 = vld [vmem:[%s3 + $0x158] sm:$0xff]
  %v201 = vld [vmem:[%s3 + $0x160] sm:$0xff]
  %v202 = vld [vmem:[%s3 + $0x168] sm:$0xff]
  %v203 = vld [vmem:[%s3 + $0x170] sm:$0xff]
  %v204 = vld [vmem:[%s3 + $0x178] sm:$0xff]
  %v205 = vld [vmem:[%s3 + $0x180] sm:$0xff]
  %v206 = vld [vmem:[%s3 + $0x188] sm:$0xff]
  %v207 = vld [vmem:[%s3 + $0x190] sm:$0xff]
  %v208 = vld [vmem:[%s3 + $0x198] sm:$0xff]
  %v209 = vld [vmem:[%s3 + $0x1a0] sm:$0xff]
  %v210 = vld [vmem:[%s3 + $0x1a8] sm:$0xff]
  %v211 = vld [vmem:[%s3 + $0x1b0] sm:$0xff]
  %v212 = vld [vmem:[%s3 + $0x1b8] sm:$0xff]
  %v213 = vld [vmem:[%s3 + $0x1c0] sm:$0xff]
  %v214 = vld [vmem:[%s3 + $0x1c8] sm:$0xff]
  %v215 = vld [vmem:[%s3 + $0x1d0] sm:$0xff]
  %v216 = vld [vmem:[%s3 + $0x1d8] sm:$0xff]
  %v217 = vld [vmem:[%s3 + $0x1e0] sm:$0xff]
  %v218 = vld [vmem:[%s3 + $0x1e8] sm:$0xff]
  %v219 = vld [vmem:[%s3 + $0x1f0] sm:$0xff]
  %v220 = vld [vmem:[%s3 + $0x1f8] sm:$0xff]
  %v221 = vmul.f32 %v93, %v157
  %v222 = vmul.f32 %v94, %v158
  %v223 = vmul.f32 %v95, %v159
  %v224 = vmul.f32 %v96, %v160
  %v225 = vmul.f32 %v97, %v161
  %v226 = vmul.f32 %v98, %v162
  %v227 = vmul.f32 %v99, %v163
  %v228 = vmul.f32 %v100, %v164
  %v229 = vmul.f32 %v101, %v165
  %v230 = vmul.f32 %v102, %v166
  %v231 = vmul.f32 %v103, %v167
  %v232 = vmul.f32 %v104, %v168
  %v233 = vmul.f32 %v105, %v169
  %v234 = vmul.f32 %v106, %v170
  %v235 = vmul.f32 %v107, %v171
  %v236 = vmul.f32 %v108, %v172
  %v237 = vmul.f32 %v109, %v173
  %v238 = vmul.f32 %v110, %v174
  %v239 = vmul.f32 %v111, %v175
  %v240 = vmul.f32 %v112, %v176
  %v241 = vmul.f32 %v113, %v177
  %v242 = vmul.f32 %v114, %v178
  %v243 = vmul.f32 %v115, %v179
  %v244 = vmul.f32 %v116, %v180
  %v245 = vmul.f32 %v117, %v181
  %v246 = vmul.f32 %v118, %v182
  %v247 = vmul.f32 %v119, %v183
  %v248 = vmul.f32 %v120, %v184
  %v249 = vmul.f32 %v121, %v185
  %v250 = vmul.f32 %v122, %v186
  %v251 = vmul.f32 %v123, %v187
  %v252 = vmul.f32 %v124, %v188
  %v253 = vmul.f32 %v125, %v189
  %v254 = vmul.f32 %v126, %v190
  %v255 = vmul.f32 %v127, %v191
  %v256 = vmul.f32 %v128, %v192
  %v257 = vmul.f32 %v129, %v193
  %v258 = vmul.f32 %v130, %v194
  %v259 = vmul.f32 %v131, %v195
  %v260 = vmul.f32 %v132, %v196
  %v261 = vmul.f32 %v133, %v197
  %v262 = vmul.f32 %v134, %v198
  %v263 = vmul.f32 %v135, %v199
  %v264 = vmul.f32 %v136, %v200
  %v265 = vmul.f32 %v137, %v201
  %v266 = vmul.f32 %v138, %v202
  %v267 = vmul.f32 %v139, %v203
  %v268 = vmul.f32 %v140, %v204
  %v269 = vmul.f32 %v141, %v205
  %v270 = vmul.f32 %v142, %v206
  %v271 = vmul.f32 %v143, %v207
  %v272 = vmul.f32 %v144, %v208
  %v273 = vmul.f32 %v145, %v209
  %v274 = vmul.f32 %v146, %v210
  %v275 = vmul.f32 %v147, %v211
  %v276 = vmul.f32 %v148, %v212
  %v277 = vmul.f32 %v149, %v213
  %v278 = vmul.f32 %v150, %v214
  %v279 = vmul.f32 %v151, %v215
  %v280 = vmul.f32 %v152, %v216
  %v281 = vmul.f32 %v153, %v217
  %v282 = vmul.f32 %v154, %v218
  %v283 = vmul.f32 %v155, %v219
  %v284 = vmul.f32 %v156, %v220
  %v285 = vadd.f32 %v29, %v221
  %v286 = vadd.f32 %v30, %v222
  %v287 = vadd.f32 %v31, %v223
  %v288 = vadd.f32 %v32, %v224
  %v289 = vadd.f32 %v33, %v225
  %v290 = vadd.f32 %v34, %v226
  %v291 = vadd.f32 %v35, %v227
  %v292 = vadd.f32 %v36, %v228
  %v293 = vadd.f32 %v37, %v229
  %v294 = vadd.f32 %v38, %v230
  %v295 = vadd.f32 %v39, %v231
  %v296 = vadd.f32 %v40, %v232
  %v297 = vadd.f32 %v41, %v233
  %v298 = vadd.f32 %v42, %v234
  %v299 = vadd.f32 %v43, %v235
  %v300 = vadd.f32 %v44, %v236
  %v301 = vadd.f32 %v45, %v237
  %v302 = vadd.f32 %v46, %v238
  %v303 = vadd.f32 %v47, %v239
  %v304 = vadd.f32 %v48, %v240
  %v305 = vadd.f32 %v49, %v241
  %v306 = vadd.f32 %v50, %v242
  %v307 = vadd.f32 %v51, %v243
  %v308 = vadd.f32 %v52, %v244
  %v309 = vadd.f32 %v53, %v245
  %v310 = vadd.f32 %v54, %v246
  %v311 = vadd.f32 %v55, %v247
  %v312 = vadd.f32 %v56, %v248
  %v313 = vadd.f32 %v57, %v249
  %v314 = vadd.f32 %v58, %v250
  %v315 = vadd.f32 %v59, %v251
  %v316 = vadd.f32 %v60, %v252
  %v317 = vadd.f32 %v61, %v253
  %v318 = vadd.f32 %v62, %v254
  %v319 = vadd.f32 %v63, %v255
  %v320 = vadd.f32 %v64, %v256
  %v321 = vadd.f32 %v65, %v257
  %v322 = vadd.f32 %v66, %v258
  %v323 = vadd.f32 %v67, %v259
  %v324 = vadd.f32 %v68, %v260
  %v325 = vadd.f32 %v69, %v261
  %v326 = vadd.f32 %v70, %v262
  %v327 = vadd.f32 %v71, %v263
  %v328 = vadd.f32 %v72, %v264
  %v329 = vadd.f32 %v73, %v265
  %v330 = vadd.f32 %v74, %v266
  %v331 = vadd.f32 %v75, %v267
  %v332 = vadd.f32 %v76, %v268
  %v333 = vadd.f32 %v77, %v269
  %v334 = vadd.f32 %v78, %v270
  %v335 = vadd.f32 %v79, %v271
  %v336 = vadd.f32 %v80, %v272
  %v337 = vadd.f32 %v81, %v273
  %v338 = vadd.f32 %v82, %v274
  %v339 = vadd.f32 %v83, %v275
  %v340 = vadd.f32 %v84, %v276
  %v341 = vadd.f32 %v85, %v277
  %v342 = vadd.f32 %v86, %v278
  %v343 = vadd.f32 %v87, %v279
  %v344 = vadd.f32 %v88, %v280
  %v345 = vadd.f32 %v89, %v281
  %v346 = vadd.f32 %v90, %v282
  %v347 = vadd.f32 %v91, %v283
  %v348 = vadd.f32 %v92, %v284
  %v349 = vpack.c.bf16 %v286, %v285
  %v350 = vpack.c.bf16 %v288, %v287
  %v351 = vpack.c.bf16 %v290, %v289
  %v352 = vpack.c.bf16 %v292, %v291
  %v353 = vpack.c.bf16 %v294, %v293
  %v354 = vpack.c.bf16 %v296, %v295
  %v355 = vpack.c.bf16 %v298, %v297
  %v356 = vpack.c.bf16 %v300, %v299
  %v357 = vpack.c.bf16 %v302, %v301
  %v358 = vpack.c.bf16 %v304, %v303
  %v359 = vpack.c.bf16 %v306, %v305
  %v360 = vpack.c.bf16 %v308, %v307
  %v361 = vpack.c.bf16 %v310, %v309
  %v362 = vpack.c.bf16 %v312, %v311
  %v363 = vpack.c.bf16 %v314, %v313
  %v364 = vpack.c.bf16 %v316, %v315
  %v365 = vpack.c.bf16 %v318, %v317
  %v366 = vpack.c.bf16 %v320, %v319
  %v367 = vpack.c.bf16 %v322, %v321
  %v368 = vpack.c.bf16 %v324, %v323
  %v369 = vpack.c.bf16 %v326, %v325
  %v370 = vpack.c.bf16 %v328, %v327
  %v371 = vpack.c.bf16 %v330, %v329
  %v372 = vpack.c.bf16 %v332, %v331
  %v373 = vpack.c.bf16 %v334, %v333
  %v374 = vpack.c.bf16 %v336, %v335
  %v375 = vpack.c.bf16 %v338, %v337
  %v376 = vpack.c.bf16 %v340, %v339
  %v377 = vpack.c.bf16 %v342, %v341
  %v378 = vpack.c.bf16 %v344, %v343
  %v379 = vpack.c.bf16 %v346, %v345
  %v380 = vpack.c.bf16 %v348, %v347
  %v381 = vld [vmem:[#allocation2] sm:$0xff]
  %v382 = vld [vmem:[#allocation2 + $0x8] sm:$0xff]
  %v383 = vld [vmem:[#allocation2 + $0x10] sm:$0xff]
  %v384 = vld [vmem:[#allocation2 + $0x18] sm:$0xff]
  %v385 = vld [vmem:[%s0] sm:$0xf]
  %vm386 = vcmask 523264
  %v388 = vsel %vm386, %v385, 0
  %v391 = vsel %vm386, %v349, 0
  %v394 = vsel %vm386, %v350, 0
  %v397 = vsel %vm386, %v351, 0
  %v400 = vsel %vm386, %v352, 0
  %v403 = vsel %vm386, %v353, 0
  %v406 = vsel %vm386, %v354, 0
  %v409 = vsel %vm386, %v355, 0
  %v412 = vsel %vm386, %v356, 0
  %v415 = vsel %vm386, %v357, 0
  %v418 = vsel %vm386, %v358, 0
  %v421 = vsel %vm386, %v359, 0
  %v424 = vsel %vm386, %v360, 0
  %v427 = vsel %vm386, %v361, 0
  %v430 = vsel %vm386, %v362, 0
  %v433 = vsel %vm386, %v363, 0
  %v436 = vsel %vm386, %v364, 0
  %v439 = vsel %vm386, %v365, 0
  %v442 = vsel %vm386, %v366, 0
  %v445 = vsel %vm386, %v367, 0
  %v448 = vsel %vm386, %v368, 0
  %v451 = vsel %vm386, %v369, 0
  %v454 = vsel %vm386, %v370, 0
  %v457 = vsel %vm386, %v371, 0
  %v460 = vsel %vm386, %v372, 0
  %v463 = vsel %vm386, %v373, 0
  %v466 = vsel %vm386, %v374, 0
  %v469 = vsel %vm386, %v375, 0
  %v472 = vsel %vm386, %v376, 0
  %v475 = vsel %vm386, %v377, 0
  %v478 = vsel %vm386, %v378, 0
  %v481 = vsel %vm386, %v379, 0
  %v484 = vsel %vm386, %v380, 0
  %486 = vmatprep.subr.bf16.mxu0 0
  %487 = vmatpush1.bf16.xpose.msra.mxu0 %v391
  %488 = vmatprep.subr.bf16.mxu0 0
  %489 = vmatpush1.bf16.xpose.msra.mxu0 %v394
  %490 = vmatprep.subr.bf16.mxu0 0
  %491 = vmatpush1.bf16.xpose.msra.mxu0 %v397
  %492 = vmatprep.subr.bf16.mxu0 0
  %493 = vmatpush1.bf16.xpose.msra.mxu0 %v400
  %494 = vmatprep.subr.bf16.mxu0 0
  %495 = vmatpush1.bf16.xpose.msra.mxu0 %v403
  %496 = vmatprep.subr.bf16.mxu0 0
  %497 = vmatpush1.bf16.xpose.msra.mxu0 %v406
  %498 = vmatprep.subr.bf16.mxu0 0
  %499 = vmatpush1.bf16.xpose.msra.mxu0 %v409
  %500 = vmatprep.subr.bf16.mxu0 0
  %501 = vmatpush1.bf16.xpose.msra.mxu0 %v412
  %502 = vmatprep.subr.bf16.mxu0 0
  %503 = vmatpush1.bf16.xpose.msra.mxu0 %v415
  %504 = vmatprep.subr.bf16.mxu0 0
  %505 = vmatpush1.bf16.xpose.msra.mxu0 %v418
  %506 = vmatprep.subr.bf16.mxu0 0
  %507 = vmatpush1.bf16.xpose.msra.mxu0 %v421
  %508 = vmatprep.subr.bf16.mxu0 0
  %509 = vmatpush1.bf16.xpose.msra.mxu0 %v424
  %510 = vmatprep.subr.bf16.mxu0 0
  %511 = vmatpush1.bf16.xpose.msra.mxu0 %v427
  %512 = vmatprep.subr.bf16.mxu0 0
  %513 = vmatpush1.bf16.xpose.msra.mxu0 %v430
  %514 = vmatprep.subr.bf16.mxu0 0
  %515 = vmatpush1.bf16.xpose.msra.mxu0 %v433
  %516 = vmatprep.subr.bf16.mxu0 0
  %517 = vmatpush1.bf16.xpose.msra.mxu0 %v436
  %518 = vmatprep.mubr.bf16.mxu0 0
  %519 = vmatmul.mubr.bf16.gmra.mrb[0].mxu0 %v388
  %v520 = vpop.f32.mrb[0].mxu0
  %v521 = vadd.f32 0.0, %v520
  %v522 = vpop.f32.mrb[0].mxu0
  %v523 = vadd.f32 0.0, %v522
  %v524 = vpop.f32.mrb[0].mxu0
  %v525 = vpop.f32.mrb[0].mxu0
  %526 = vdwg.mxu0
  %527 = vmatprep.subr.bf16.mxu0 0
  %528 = vmatpush1.bf16.xpose.msra.mxu0 %v439
  %529 = vmatprep.subr.bf16.mxu0 0
  %530 = vmatpush1.bf16.xpose.msra.mxu0 %v442
  %531 = vmatprep.subr.bf16.mxu0 0
  %532 = vmatpush1.bf16.xpose.msra.mxu0 %v445
  %533 = vmatprep.subr.bf16.mxu0 0
  %534 = vmatpush1.bf16.xpose.msra.mxu0 %v448
  %535 = vmatprep.subr.bf16.mxu0 0
  %536 = vmatpush1.bf16.xpose.msra.mxu0 %v451
  %537 = vmatprep.subr.bf16.mxu0 0
  %538 = vmatpush1.bf16.xpose.msra.mxu0 %v454
  %539 = vmatprep.subr.bf16.mxu0 0
  %540 = vmatpush1.bf16.xpose.msra.mxu0 %v457
  %541 = vmatprep.subr.bf16.mxu0 0
  %542 = vmatpush1.bf16.xpose.msra.mxu0 %v460
  %543 = vmatprep.subr.bf16.mxu0 0
  %544 = vmatpush1.bf16.xpose.msra.mxu0 %v463
  %545 = vmatprep.subr.bf16.mxu0 0
  %546 = vmatpush1.bf16.xpose.msra.mxu0 %v466
  %547 = vmatprep.subr.bf16.mxu0 0
  %548 = vmatpush1.bf16.xpose.msra.mxu0 %v469
  %549 = vmatprep.subr.bf16.mxu0 0
  %550 = vmatpush1.bf16.xpose.msra.mxu0 %v472
  %551 = vmatprep.subr.bf16.mxu0 0
  %552 = vmatpush1.bf16.xpose.msra.mxu0 %v475
  %553 = vmatprep.subr.bf16.mxu0 0
  %554 = vmatpush1.bf16.xpose.msra.mxu0 %v478
  %555 = vmatprep.subr.bf16.mxu0 0
  %556 = vmatpush1.bf16.xpose.msra.mxu0 %v481
  %557 = vmatprep.subr.bf16.mxu0 0
  %558 = vmatpush1.bf16.xpose.msra.mxu0 %v484
  %559 = vmatprep.mubr.bf16.mxu0 0
  %560 = vmatmul.mubr.bf16.gmra.mrb[0].mxu0 %v388
  %v561 = vpop.f32.mrb[0].mxu0
  %v562 = vadd.f32 0.0, %v561
  %v563 = vpop.f32.mrb[0].mxu0
  %v564 = vadd.f32 0.0, %v563
  %v565 = vpop.f32.mrb[0].mxu0
  %v566 = vpop.f32.mrb[0].mxu0
  %567 = vdwg.mxu0
  %v568 = vadd.f32 %v381, %v521
  %v569 = vadd.f32 %v382, %v523
  %v570 = vadd.f32 %v383, %v562
  %v571 = vadd.f32 %v384, %v564
  %572 = vst [vmem:[#allocation2] sm:$0xff] %v568
  %573 = vst [vmem:[#allocation2 + $0x8] sm:$0xff] %v569
  %574 = vst [vmem:[#allocation2 + $0x10] sm:$0xff] %v570
  %575 = vst [vmem:[#allocation2 + $0x18] sm:$0xff] %v571
  // Predicated region
  $region26: #{noisy_dqn_forward.10} parent=0 // pred_check
    %p576 = pneg %p21
  $region27: #{noisy_dqn_forward.10} parent=0 // pred_check_branch
    %578 = sbr.rel (%p576) target = $region29
  $region28: #{noisy_dqn_forward.10} parent=0 // pred_region
    %v579 = vld [vmem:[#allocation2] sm:$0xff]
    %v580 = vld [vmem:[#allocation2 + $0x8] sm:$0xff]
    %v581 = vld [vmem:[#allocation2 + $0x10] sm:$0xff]
    %v582 = vld [vmem:[#allocation2 + $0x18] sm:$0xff]
    %v583 = vld [vmem:[%s4] sm:$0xf]
    %v585 = vlaneseq
    %v586 = vshrl.u32 %v585, 7
    %v587 = vsub.s32 0, %v586
    %v588 = vrot.slane %v583, %v587
    %v589 = vlaneseq
    %v590 = vshrl.u32 %v589, 7
    %v591 = vsub.s32 1, %v590
    %v592 = vrot.slane %v583, %v591
    %v593 = vlaneseq
    %v594 = vshrl.u32 %v593, 7
    %v595 = vsub.s32 2, %v594
    %v596 = vrot.slane %v583, %v595
    %v597 = vlaneseq
    %v598 = vshrl.u32 %v597, 7
    %v599 = vsub.s32 3, %v598
    %v600 = vrot.slane %v583, %v599
    %v605 = vadd.f32 %v579, %v588
    %v606 = vadd.f32 %v580, %v592
    %v607 = vadd.f32 %v581, %v596
    %v608 = vadd.f32 %v582, %v600
    %v609 = vmax.f32 %v605, 0.0
    %v610 = vmax.f32 %v606, 0.0
    %v611 = vmax.f32 %v607, 0.0
    %v612 = vmax.f32 %v608, 0.0
    %v613 = vpack.c.bf16 %v609, %v609
    %v614 = vpack.c.bf16 %v610, %v610
    %v615 = vpack.c.bf16 %v611, %v611
    %v616 = vpack.c.bf16 %v612, %v612
    %v621 = vunpack.c.l.b16 %v613
    %v622 = vunpack.c.l.b16 %v614
    %v623 = vunpack.c.l.b16 %v615
    %v624 = vunpack.c.l.b16 %v616
    %v625 = vpack.c.b16 %v622, %v621
    %v626 = vpack.c.b16 %v624, %v623
    %629 = vst [vmem:[%s5] sm:$0xff] %v625
    %630 = vst [vmem:[%s5 + $0x8] sm:$0xff] %v626
  $region29: #{noisy_dqn_forward.10} parent=0 // pred_fallthru
    _
  // Predicated region
  $region30: #{noisy_dqn_forward.10} parent=0 // pred_check
    _
  $region31: #{noisy_dqn_forward.10} parent=0 // pred_check_branch
    %632 = sbr.rel (0) target = $region33
  $region32: #{noisy_dqn_forward.10} parent=0 // pred_region
    _
  $region33: #{noisy_dqn_forward.10} parent=0 // pred_fallthru
    _
  // Predicated region
  $region34: #{noisy_dqn_forward.10} parent=0 // pred_check
    _
  $region35: #{noisy_dqn_forward.10} parent=0 // pred_check_branch
    %634 = sbr.rel (0) target = $region37
  $region36: #{noisy_dqn_forward.10} parent=0 // pred_region
    _
  $region37: #{noisy_dqn_forward.10} parent=0 // pred_fallthru
    _

// kernel: noisy_dqn_forward.11
$region0: #{noisy_dqn_forward.11}
  #allocation0 [shape = 'u32[]', space=smem, size = 0x4, offset = 0x4, fixed_abs, tag = 'smem constant byte address 0x4 - core index']
  #allocation1 [shape = 'u32[144,128]{1,0:T(1,128)}', space=vmem, size = 0x12000, scoped, tag = 'internal scratch']
  #allocation2 [shape = 'f32[8,128]{1,0:T(8,128)}', space=vmem, size = 0x1000, scoped, tag = 'scratch operand']
  %s0 = inlined_call_operand.vmem [shape: bf16[8,512], index: 0, kind: input, shape index: {}]
  %s1 = inlined_call_operand.vmem [shape: f32[128,512], index: 1, kind: input, shape index: {}]
  %s2 = inlined_call_operand.vmem [shape: f32[128,512], index: 2, kind: input, shape index: {}]
  %s3 = inlined_call_operand.vmem [shape: f32[128,512], index: 3, kind: input, shape index: {}]
  %s4 = inlined_call_operand.vmem [shape: f32[1,128], index: 4, kind: input, shape index: {}]
  %s5 = inlined_call_operand.vmem [shape: f32[8,128], index: 5, kind: output, shape index: {}]
  %s6 = sld [smem:[#allocation0]]
  $region38: #{noisy_dqn_forward.11} parent=0
    _
  %s8 = ssub.s32 1, %s6
  %s9 = scalar_select 0, %s8, %s6
  // Predicated region
  $region2: #{noisy_dqn_forward.11} parent=0 // pred_check
    _
  $region3: #{noisy_dqn_forward.11} parent=0 // pred_check_branch
    %11 = sbr.rel (0) target = $region5
  $region4: #{noisy_dqn_forward.11} parent=0 // pred_region
    _
  $region5: #{noisy_dqn_forward.11} parent=0 // pred_fallthru
    _
  // Predicated region
  $region6: #{noisy_dqn_forward.11} parent=0 // pred_check
    _
  $region7: #{noisy_dqn_forward.11} parent=0 // pred_check_branch
    %13 = sbr.rel (0) target = $region9
  $region8: #{noisy_dqn_forward.11} parent=0 // pred_region
    _
  $region9: #{noisy_dqn_forward.11} parent=0 // pred_fallthru
    _
  // Predicated region
  $region10: #{noisy_dqn_forward.11} parent=0 // pred_check
    _
  $region11: #{noisy_dqn_forward.11} parent=0 // pred_check_branch
    %15 = sbr.rel (0) target = $region13
  $region12: #{noisy_dqn_forward.11} parent=0 // pred_region
    _
  $region13: #{noisy_dqn_forward.11} parent=0 // pred_fallthru
    _
  // Predicated region
  $region14: #{noisy_dqn_forward.11} parent=0 // pred_check
    _
  $region15: #{noisy_dqn_forward.11} parent=0 // pred_check_branch
    %17 = sbr.rel (0) target = $region17
  $region16: #{noisy_dqn_forward.11} parent=0 // pred_region
    _
  $region17: #{noisy_dqn_forward.11} parent=0 // pred_fallthru
    _
  // Predicated region
  $region18: #{noisy_dqn_forward.11} parent=0 // pred_check
    _
  $region19: #{noisy_dqn_forward.11} parent=0 // pred_check_branch
    %19 = sbr.rel (0) target = $region21
  $region20: #{noisy_dqn_forward.11} parent=0 // pred_region
    _
  $region21: #{noisy_dqn_forward.11} parent=0 // pred_fallthru
    _
  %p21 = scmp.eq.s32.totalorder 0, 0
  // Predicated region
  $region22: #{noisy_dqn_forward.11} parent=0 // pred_check
    %p22 = pneg %p21
  $region23: #{noisy_dqn_forward.11} parent=0 // pred_check_branch
    %24 = sbr.rel (%p22) target = $region25
  $region24: #{noisy_dqn_forward.11} parent=0 // pred_region
    %25 = vst [vmem:[#allocation2] sm:$0xff] 0.0
  $region25: #{noisy_dqn_forward.11} parent=0 // pred_fallthru
    _
  %v26 = vld [vmem:[%s1] sm:$0xff]
  %v27 = vld [vmem:[%s1 + $0x8] sm:$0xff]
  %v28 = vld [vmem:[%s1 + $0x10] sm:$0xff]
  %v29 = vld [vmem:[%s1 + $0x18] sm:$0xff]
  %v30 = vld [vmem:[%s1 + $0x20] sm:$0xff]
  %v31 = vld [vmem:[%s1 + $0x28] sm:$0xff]
  %v32 = vld [vmem:[%s1 + $0x30] sm:$0xff]
  %v33 = vld [vmem:[%s1 + $0x38] sm:$0xff]
  %v34 = vld [vmem:[%s1 + $0x40] sm:$0xff]
  %v35 = vld [vmem:[%s1 + $0x48] sm:$0xff]
  %v36 = vld [vmem:[%s1 + $0x50] sm:$0xff]
  %v37 = vld [vmem:[%s1 + $0x58] sm:$0xff]
  %v38 = vld [vmem:[%s1 + $0x60] sm:$0xff]
  %v39 = vld [vmem:[%s1 + $0x68] sm:$0xff]
  %v40 = vld [vmem:[%s1 + $0x70] sm:$0xff]
  %v41 = vld [vmem:[%s1 + $0x78] sm:$0xff]
  %v42 = vld [vmem:[%s1 + $0x80] sm:$0xff]
  %v43 = vld [vmem:[%s1 + $0x88] sm:$0xff]
  %v44 = vld [vmem:[%s1 + $0x90] sm:$0xff]
  %v45 = vld [vmem:[%s1 + $0x98] sm:$0xff]
  %v46 = vld [vmem:[%s1 + $0xa0] sm:$0xff]
  %v47 = vld [vmem:[%s1 + $0xa8] sm:$0xff]
  %v48 = vld [vmem:[%s1 + $0xb0] sm:$0xff]
  %v49 = vld [vmem:[%s1 + $0xb8] sm:$0xff]
  %v50 = vld [vmem:[%s1 + $0xc0] sm:$0xff]
  %v51 = vld [vmem:[%s1 + $0xc8] sm:$0xff]
  %v52 = vld [vmem:[%s1 + $0xd0] sm:$0xff]
  %v53 = vld [vmem:[%s1 + $0xd8] sm:$0xff]
  %v54 = vld [vmem:[%s1 + $0xe0] sm:$0xff]
  %v55 = vld [vmem:[%s1 + $0xe8] sm:$0xff]
  %v56 = vld [vmem:[%s1 + $0xf0] sm:$0xff]
  %v57 = vld [vmem:[%s1 + $0xf8] sm:$0xff]
  %v58 = vld [vmem:[%s1 + $0x100] sm:$0xff]
  %v59 = vld [vmem:[%s1 + $0x108] sm:$0xff]
  %v60 = vld [vmem:[%s1 + $0x110] sm:$0xff]
  %v61 = vld [vmem:[%s1 + $0x118] sm:$0xff]
  %v62 = vld [vmem:[%s1 + $0x120] sm:$0xff]
  %v63 = vld [vmem:[%s1 + $0x128] sm:$0xff]
  %v64 = vld [vmem:[%s1 + $0x130] sm:$0xff]
  %v65 = vld [vmem:[%s1 + $0x138] sm:$0xff]
  %v66 = vld [vmem:[%s1 + $0x140] sm:$0xff]
  %v67 = vld [vmem:[%s1 + $0x148] sm:$0xff]
  %v68 = vld [vmem:[%s1 + $0x150] sm:$0xff]
  %v69 = vld [vmem:[%s1 + $0x158] sm:$0xff]
  %v70 = vld [vmem:[%s1 + $0x160] sm:$0xff]
  %v71 = vld [vmem:[%s1 + $0x168] sm:$0xff]
  %v72 = vld [vmem:[%s1 + $0x170] sm:$0xff]
  %v73 = vld [vmem:[%s1 + $0x178] sm:$0xff]
  %v74 = vld [vmem:[%s1 + $0x180] sm:$0xff]
  %v75 = vld [vmem:[%s1 + $0x188] sm:$0xff]
  %v76 = vld [vmem:[%s1 + $0x190] sm:$0xff]
  %v77 = vld [vmem:[%s1 + $0x198] sm:$0xff]
  %v78 = vld [vmem:[%s1 + $0x1a0] sm:$0xff]
  %v79 = vld [vmem:[%s1 + $0x1a8] sm:$0xff]
  %v80 = vld [vmem:[%s1 + $0x1b0] sm:$0xff]
  %v81 = vld [vmem:[%s1 + $0x1b8] sm:$0xff]
  %v82 = vld [vmem:[%s1 + $0x1c0] sm:$0xff]
  %v83 = vld [vmem:[%s1 + $0x1c8] sm:$0xff]
  %v84 = vld [vmem:[%s1 + $0x1d0] sm:$0xff]
  %v85 = vld [vmem:[%s1 + $0x1d8] sm:$0xff]
  %v86 = vld [vmem:[%s1 + $0x1e0] sm:$0xff]
  %v87 = vld [vmem:[%s1 + $0x1e8] sm:$0xff]
  %v88 = vld [vmem:[%s1 + $0x1f0] sm:$0xff]
  %v89 = vld [vmem:[%s1 + $0x1f8] sm:$0xff]
  %v90 = vld [vmem:[%s2] sm:$0xff]
  %v91 = vld [vmem:[%s2 + $0x8] sm:$0xff]
  %v92 = vld [vmem:[%s2 + $0x10] sm:$0xff]
  %v93 = vld [vmem:[%s2 + $0x18] sm:$0xff]
  %v94 = vld [vmem:[%s2 + $0x20] sm:$0xff]
  %v95 = vld [vmem:[%s2 + $0x28] sm:$0xff]
  %v96 = vld [vmem:[%s2 + $0x30] sm:$0xff]
  %v97 = vld [vmem:[%s2 + $0x38] sm:$0xff]
  %v98 = vld [vmem:[%s2 + $0x40] sm:$0xff]
  %v99 = vld [vmem:[%s2 + $0x48] sm:$0xff]
  %v100 = vld [vmem:[%s2 + $0x50] sm:$0xff]
  %v101 = vld [vmem:[%s2 + $0x58] sm:$0xff]
  %v102 = vld [vmem:[%s2 + $0x60] sm:$0xff]
  %v103 = vld [vmem:[%s2 + $0x68] sm:$0xff]
  %v104 = vld [vmem:[%s2 + $0x70] sm:$0xff]
  %v105 = vld [vmem:[%s2 + $0x78] sm:$0xff]
  %v106 = vld [vmem:[%s2 + $0x80] sm:$0xff]
  %v107 = vld [vmem:[%s2 + $0x88] sm:$0xff]
  %v108 = vld [vmem:[%s2 + $0x90] sm:$0xff]
  %v109 = vld [vmem:[%s2 + $0x98] sm:$0xff]
  %v110 = vld [vmem:[%s2 + $0xa0] sm:$0xff]
  %v111 = vld [vmem:[%s2 + $0xa8] sm:$0xff]
  %v112 = vld [vmem:[%s2 + $0xb0] sm:$0xff]
  %v113 = vld [vmem:[%s2 + $0xb8] sm:$0xff]
  %v114 = vld [vmem:[%s2 + $0xc0] sm:$0xff]
  %v115 = vld [vmem:[%s2 + $0xc8] sm:$0xff]
  %v116 = vld [vmem:[%s2 + $0xd0] sm:$0xff]
  %v117 = vld [vmem:[%s2 + $0xd8] sm:$0xff]
  %v118 = vld [vmem:[%s2 + $0xe0] sm:$0xff]
  %v119 = vld [vmem:[%s2 + $0xe8] sm:$0xff]
  %v120 = vld [vmem:[%s2 + $0xf0] sm:$0xff]
  %v121 = vld [vmem:[%s2 + $0xf8] sm:$0xff]
  %v122 = vld [vmem:[%s2 + $0x100] sm:$0xff]
  %v123 = vld [vmem:[%s2 + $0x108] sm:$0xff]
  %v124 = vld [vmem:[%s2 + $0x110] sm:$0xff]
  %v125 = vld [vmem:[%s2 + $0x118] sm:$0xff]
  %v126 = vld [vmem:[%s2 + $0x120] sm:$0xff]
  %v127 = vld [vmem:[%s2 + $0x128] sm:$0xff]
  %v128 = vld [vmem:[%s2 + $0x130] sm:$0xff]
  %v129 = vld [vmem:[%s2 + $0x138] sm:$0xff]
  %v130 = vld [vmem:[%s2 + $0x140] sm:$0xff]
  %v131 = vld [vmem:[%s2 + $0x148] sm:$0xff]
  %v132 = vld [vmem:[%s2 + $0x150] sm:$0xff]
  %v133 = vld [vmem:[%s2 + $0x158] sm:$0xff]
  %v134 = vld [vmem:[%s2 + $0x160] sm:$0xff]
  %v135 = vld [vmem:[%s2 + $0x168] sm:$0xff]
  %v136 = vld [vmem:[%s2 + $0x170] sm:$0xff]
  %v137 = vld [vmem:[%s2 + $0x178] sm:$0xff]
  %v138 = vld [vmem:[%s2 + $0x180] sm:$0xff]
  %v139 = vld [vmem:[%s2 + $0x188] sm:$0xff]
  %v140 = vld [vmem:[%s2 + $0x190] sm:$0xff]
  %v141 = vld [vmem:[%s2 + $0x198] sm:$0xff]
  %v142 = vld [vmem:[%s2 + $0x1a0] sm:$0xff]
  %v143 = vld [vmem:[%s2 + $0x1a8] sm:$0xff]
  %v144 = vld [vmem:[%s2 + $0x1b0] sm:$0xff]
  %v145 = vld [vmem:[%s2 + $0x1b8] sm:$0xff]
  %v146 = vld [vmem:[%s2 + $0x1c0] sm:$0xff]
  %v147 = vld [vmem:[%s2 + $0x1c8] sm:$0xff]
  %v148 = vld [vmem:[%s2 + $0x1d0] sm:$0xff]
  %v149 = vld [vmem:[%s2 + $0x1d8] sm:$0xff]
  %v150 = vld [vmem:[%s2 + $0x1e0] sm:$0xff]
  %v151 = vld [vmem:[%s2 + $0x1e8] sm:$0xff]
  %v152 = vld [vmem:[%s2 + $0x1f0] sm:$0xff]
  %v153 = vld [vmem:[%s2 + $0x1f8] sm:$0xff]
  %v154 = vld [vmem:[%s3] sm:$0xff]
  %v155 = vld [vmem:[%s3 + $0x8] sm:$0xff]
  %v156 = vld [vmem:[%s3 + $0x10] sm:$0xff]
  %v157 = vld [vmem:[%s3 + $0x18] sm:$0xff]
  %v158 = vld [vmem:[%s3 + $0x20] sm:$0xff]
  %v159 = vld [vmem:[%s3 + $0x28] sm:$0xff]
  %v160 = vld [vmem:[%s3 + $0x30] sm:$0xff]
  %v161 = vld [vmem:[%s3 + $0x38] sm:$0xff]
  %v162 = vld [vmem:[%s3 + $0x40] sm:$0xff]
  %v163 = vld [vmem:[%s3 + $0x48] sm:$0xff]
  %v164 = vld [vmem:[%s3 + $0x50] sm:$0xff]
  %v165 = vld [vmem:[%s3 + $0x58] sm:$0xff]
  %v166 = vld [vmem:[%s3 + $0x60] sm:$0xff]
  %v167 = vld [vmem:[%s3 + $0x68] sm:$0xff]
  %v168 = vld [vmem:[%s3 + $0x70] sm:$0xff]
  %v169 = vld [vmem:[%s3 + $0x78] sm:$0xff]
  %v170 = vld [vmem:[%s3 + $0x80] sm:$0xff]
  %v171 = vld [vmem:[%s3 + $0x88] sm:$0xff]
  %v172 = vld [vmem:[%s3 + $0x90] sm:$0xff]
  %v173 = vld [vmem:[%s3 + $0x98] sm:$0xff]
  %v174 = vld [vmem:[%s3 + $0xa0] sm:$0xff]
  %v175 = vld [vmem:[%s3 + $0xa8] sm:$0xff]
  %v176 = vld [vmem:[%s3 + $0xb0] sm:$0xff]
  %v177 = vld [vmem:[%s3 + $0xb8] sm:$0xff]
  %v178 = vld [vmem:[%s3 + $0xc0] sm:$0xff]
  %v179 = vld [vmem:[%s3 + $0xc8] sm:$0xff]
  %v180 = vld [vmem:[%s3 + $0xd0] sm:$0xff]
  %v181 = vld [vmem:[%s3 + $0xd8] sm:$0xff]
  %v182 = vld [vmem:[%s3 + $0xe0] sm:$0xff]
  %v183 = vld [vmem:[%s3 + $0xe8] sm:$0xff]
  %v184 = vld [vmem:[%s3 + $0xf0] sm:$0xff]
  %v185 = vld [vmem:[%s3 + $0xf8] sm:$0xff]
  %v186 = vld [vmem:[%s3 + $0x100] sm:$0xff]
  %v187 = vld [vmem:[%s3 + $0x108] sm:$0xff]
  %v188 = vld [vmem:[%s3 + $0x110] sm:$0xff]
  %v189 = vld [vmem:[%s3 + $0x118] sm:$0xff]
  %v190 = vld [vmem:[%s3 + $0x120] sm:$0xff]
  %v191 = vld [vmem:[%s3 + $0x128] sm:$0xff]
  %v192 = vld [vmem:[%s3 + $0x130] sm:$0xff]
  %v193 = vld [vmem:[%s3 + $0x138] sm:$0xff]
  %v194 = vld [vmem:[%s3 + $0x140] sm:$0xff]
  %v195 = vld [vmem:[%s3 + $0x148] sm:$0xff]
  %v196 = vld [vmem:[%s3 + $0x150] sm:$0xff]
  %v197 = vld [vmem:[%s3 + $0x158] sm:$0xff]
  %v198 = vld [vmem:[%s3 + $0x160] sm:$0xff]
  %v199 = vld [vmem:[%s3 + $0x168] sm:$0xff]
  %v200 = vld [vmem:[%s3 + $0x170] sm:$0xff]
  %v201 = vld [vmem:[%s3 + $0x178] sm:$0xff]
  %v202 = vld [vmem:[%s3 + $0x180] sm:$0xff]
  %v203 = vld [vmem:[%s3 + $0x188] sm:$0xff]
  %v204 = vld [vmem:[%s3 + $0x190] sm:$0xff]
  %v205 = vld [vmem:[%s3 + $0x198] sm:$0xff]
  %v206 = vld [vmem:[%s3 + $0x1a0] sm:$0xff]
  %v207 = vld [vmem:[%s3 + $0x1a8] sm:$0xff]
  %v208 = vld [vmem:[%s3 + $0x1b0] sm:$0xff]
  %v209 = vld [vmem:[%s3 + $0x1b8] sm:$0xff]
  %v210 = vld [vmem:[%s3 + $0x1c0] sm:$0xff]
  %v211 = vld [vmem:[%s3 + $0x1c8] sm:$0xff]
  %v212 = vld [vmem:[%s3 + $0x1d0] sm:$0xff]
  %v213 = vld [vmem:[%s3 + $0x1d8] sm:$0xff]
  %v214 = vld [vmem:[%s3 + $0x1e0] sm:$0xff]
  %v215 = vld [vmem:[%s3 + $0x1e8] sm:$0xff]
  %v216 = vld [vmem:[%s3 + $0x1f0] sm:$0xff]
  %v217 = vld [vmem:[%s3 + $0x1f8] sm:$0xff]
  %v218 = vmul.f32 %v90, %v154
  %v219 = vmul.f32 %v91, %v155
  %v220 = vmul.f32 %v92, %v156
  %v221 = vmul.f32 %v93, %v157
  %v222 = vmul.f32 %v94, %v158
  %v223 = vmul.f32 %v95, %v159
  %v224 = vmul.f32 %v96, %v160
  %v225 = vmul.f32 %v97, %v161
  %v226 = vmul.f32 %v98, %v162
  %v227 = vmul.f32 %v99, %v163
  %v228 = vmul.f32 %v100, %v164
  %v229 = vmul.f32 %v101, %v165
  %v230 = vmul.f32 %v102, %v166
  %v231 = vmul.f32 %v103, %v167
  %v232 = vmul.f32 %v104, %v168
  %v233 = vmul.f32 %v105, %v169
  %v234 = vmul.f32 %v106, %v170
  %v235 = vmul.f32 %v107, %v171
  %v236 = vmul.f32 %v108, %v172
  %v237 = vmul.f32 %v109, %v173
  %v238 = vmul.f32 %v110, %v174
  %v239 = vmul.f32 %v111, %v175
  %v240 = vmul.f32 %v112, %v176
  %v241 = vmul.f32 %v113, %v177
  %v242 = vmul.f32 %v114, %v178
  %v243 = vmul.f32 %v115, %v179
  %v244 = vmul.f32 %v116, %v180
  %v245 = vmul.f32 %v117, %v181
  %v246 = vmul.f32 %v118, %v182
  %v247 = vmul.f32 %v119, %v183
  %v248 = vmul.f32 %v120, %v184
  %v249 = vmul.f32 %v121, %v185
  %v250 = vmul.f32 %v122, %v186
  %v251 = vmul.f32 %v123, %v187
  %v252 = vmul.f32 %v124, %v188
  %v253 = vmul.f32 %v125, %v189
  %v254 = vmul.f32 %v126, %v190
  %v255 = vmul.f32 %v127, %v191
  %v256 = vmul.f32 %v128, %v192
  %v257 = vmul.f32 %v129, %v193
  %v258 = vmul.f32 %v130, %v194
  %v259 = vmul.f32 %v131, %v195
  %v260 = vmul.f32 %v132, %v196
  %v261 = vmul.f32 %v133, %v197
  %v262 = vmul.f32 %v134, %v198
  %v263 = vmul.f32 %v135, %v199
  %v264 = vmul.f32 %v136, %v200
  %v265 = vmul.f32 %v137, %v201
  %v266 = vmul.f32 %v138, %v202
  %v267 = vmul.f32 %v139, %v203
  %v268 = vmul.f32 %v140, %v204
  %v269 = vmul.f32 %v141, %v205
  %v270 = vmul.f32 %v142, %v206
  %v271 = vmul.f32 %v143, %v207
  %v272 = vmul.f32 %v144, %v208
  %v273 = vmul.f32 %v145, %v209
  %v274 = vmul.f32 %v146, %v210
  %v275 = vmul.f32 %v147, %v211
  %v276 = vmul.f32 %v148, %v212
  %v277 = vmul.f32 %v149, %v213
  %v278 = vmul.f32 %v150, %v214
  %v279 = vmul.f32 %v151, %v215
  %v280 = vmul.f32 %v152, %v216
  %v281 = vmul.f32 %v153, %v217
  %v282 = vadd.f32 %v26, %v218
  %v283 = vadd.f32 %v27, %v219
  %v284 = vadd.f32 %v28, %v220
  %v285 = vadd.f32 %v29, %v221
  %v286 = vadd.f32 %v30, %v222
  %v287 = vadd.f32 %v31, %v223
  %v288 = vadd.f32 %v32, %v224
  %v289 = vadd.f32 %v33, %v225
  %v290 = vadd.f32 %v34, %v226
  %v291 = vadd.f32 %v35, %v227
  %v292 = vadd.f32 %v36, %v228
  %v293 = vadd.f32 %v37, %v229
  %v294 = vadd.f32 %v38, %v230
  %v295 = vadd.f32 %v39, %v231
  %v296 = vadd.f32 %v40, %v232
  %v297 = vadd.f32 %v41, %v233
  %v298 = vadd.f32 %v42, %v234
  %v299 = vadd.f32 %v43, %v235
  %v300 = vadd.f32 %v44, %v236
  %v301 = vadd.f32 %v45, %v237
  %v302 = vadd.f32 %v46, %v238
  %v303 = vadd.f32 %v47, %v239
  %v304 = vadd.f32 %v48, %v240
  %v305 = vadd.f32 %v49, %v241
  %v306 = vadd.f32 %v50, %v242
  %v307 = vadd.f32 %v51, %v243
  %v308 = vadd.f32 %v52, %v244
  %v309 = vadd.f32 %v53, %v245
  %v310 = vadd.f32 %v54, %v246
  %v311 = vadd.f32 %v55, %v247
  %v312 = vadd.f32 %v56, %v248
  %v313 = vadd.f32 %v57, %v249
  %v314 = vadd.f32 %v58, %v250
  %v315 = vadd.f32 %v59, %v251
  %v316 = vadd.f32 %v60, %v252
  %v317 = vadd.f32 %v61, %v253
  %v318 = vadd.f32 %v62, %v254
  %v319 = vadd.f32 %v63, %v255
  %v320 = vadd.f32 %v64, %v256
  %v321 = vadd.f32 %v65, %v257
  %v322 = vadd.f32 %v66, %v258
  %v323 = vadd.f32 %v67, %v259
  %v324 = vadd.f32 %v68, %v260
  %v325 = vadd.f32 %v69, %v261
  %v326 = vadd.f32 %v70, %v262
  %v327 = vadd.f32 %v71, %v263
  %v328 = vadd.f32 %v72, %v264
  %v329 = vadd.f32 %v73, %v265
  %v330 = vadd.f32 %v74, %v266
  %v331 = vadd.f32 %v75, %v267
  %v332 = vadd.f32 %v76, %v268
  %v333 = vadd.f32 %v77, %v269
  %v334 = vadd.f32 %v78, %v270
  %v335 = vadd.f32 %v79, %v271
  %v336 = vadd.f32 %v80, %v272
  %v337 = vadd.f32 %v81, %v273
  %v338 = vadd.f32 %v82, %v274
  %v339 = vadd.f32 %v83, %v275
  %v340 = vadd.f32 %v84, %v276
  %v341 = vadd.f32 %v85, %v277
  %v342 = vadd.f32 %v86, %v278
  %v343 = vadd.f32 %v87, %v279
  %v344 = vadd.f32 %v88, %v280
  %v345 = vadd.f32 %v89, %v281
  %v346 = vpack.c.bf16 %v286, %v282
  %v347 = vpack.c.bf16 %v287, %v283
  %v348 = vpack.c.bf16 %v288, %v284
  %v349 = vpack.c.bf16 %v289, %v285
  %v350 = vpack.c.bf16 %v294, %v290
  %v351 = vpack.c.bf16 %v295, %v291
  %v352 = vpack.c.bf16 %v296, %v292
  %v353 = vpack.c.bf16 %v297, %v293
  %v354 = vpack.c.bf16 %v302, %v298
  %v355 = vpack.c.bf16 %v303, %v299
  %v356 = vpack.c.bf16 %v304, %v300
  %v357 = vpack.c.bf16 %v305, %v301
  %v358 = vpack.c.bf16 %v310, %v306
  %v359 = vpack.c.bf16 %v311, %v307
  %v360 = vpack.c.bf16 %v312, %v308
  %v361 = vpack.c.bf16 %v313, %v309
  %v362 = vpack.c.bf16 %v318, %v314
  %v363 = vpack.c.bf16 %v319, %v315
  %v364 = vpack.c.bf16 %v320, %v316
  %v365 = vpack.c.bf16 %v321, %v317
  %v366 = vpack.c.bf16 %v326, %v322
  %v367 = vpack.c.bf16 %v327, %v323
  %v368 = vpack.c.bf16 %v328, %v324
  %v369 = vpack.c.bf16 %v329, %v325
  %v370 = vpack.c.bf16 %v334, %v330
  %v371 = vpack.c.bf16 %v335, %v331
  %v372 = vpack.c.bf16 %v336, %v332
  %v373 = vpack.c.bf16 %v337, %v333
  %v374 = vpack.c.bf16 %v342, %v338
  %v375 = vpack.c.bf16 %v343, %v339
  %v376 = vpack.c.bf16 %v344, %v340
  %v377 = vpack.c.bf16 %v345, %v341
  %v378 = vld [vmem:[#allocation2] sm:$0xff]
  %v379 = vld [vmem:[%s0] sm:$0xff]
  %v380 = vld [vmem:[%s0 + $0x8] sm:$0xff]
  %v383 = vunpack.c.l.b16 %v379
  %v384 = vunpack.c.h.b16 %v379
  %v385 = vunpack.c.l.b16 %v380
  %v386 = vunpack.c.h.b16 %v380
  %v387 = vpack.c.b16 %v383, %v383
  %v388 = vpack.c.b16 %v384, %v384
  %v389 = vpack.c.b16 %v385, %v385
  %v390 = vpack.c.b16 %v386, %v386
  %395 = vmatprep.subr.bf16.mxu0 %v347
  %396 = vmatpush1.bf16.xpose.msra.mxu0 %v346
  %397 = vmatprep.subr.bf16.mxu0 %v351
  %398 = vmatpush1.bf16.xpose.msra.mxu0 %v350
  %399 = vmatprep.subr.bf16.mxu0 %v355
  %400 = vmatpush1.bf16.xpose.msra.mxu0 %v354
  %401 = vmatprep.subr.bf16.mxu0 %v359
  %402 = vmatpush1.bf16.xpose.msra.mxu0 %v358
  %403 = vmatprep.subr.bf16.mxu0 %v363
  %404 = vmatpush1.bf16.xpose.msra.mxu0 %v362
  %405 = vmatprep.subr.bf16.mxu0 %v367
  %406 = vmatpush1.bf16.xpose.msra.mxu0 %v366
  %407 = vmatprep.subr.bf16.mxu0 %v371
  %408 = vmatpush1.bf16.xpose.msra.mxu0 %v370
  %409 = vmatprep.subr.bf16.mxu0 %v375
  %410 = vmatpush1.bf16.xpose.msra.mxu0 %v374
  %411 = vmatprep.subr.bf16.mxu0 0
  %412 = vmatpush1.bf16.xpose.msra.mxu0 0
  %413 = vmatprep.subr.bf16.mxu0 0
  %414 = vmatpush1.bf16.xpose.msra.mxu0 0
  %415 = vmatprep.subr.bf16.mxu0 0
  %416 = vmatpush1.bf16.xpose.msra.mxu0 0
  %417 = vmatprep.subr.bf16.mxu0 0
  %418 = vmatpush1.bf16.xpose.msra.mxu0 0
  %419 = vmatprep.subr.bf16.mxu0 0
  %420 = vmatpush1.bf16.xpose.msra.mxu0 0
  %421 = vmatprep.subr.bf16.mxu0 0
  %422 = vmatpush1.bf16.xpose.msra.mxu0 0
  %423 = vmatprep.subr.bf16.mxu0 0
  %424 = vmatpush1.bf16.xpose.msra.mxu0 0
  %425 = vmatprep.subr.bf16.mxu0 0
  %426 = vmatpush1.bf16.xpose.msra.mxu0 0
  %427 = vmatprep.mubr.bf16.mxu0 %v388
  %428 = vmatmul.mubr.bf16.gmra.mrb[0].mxu0 %v387
  %v429 = vpop.f32.mrb[0].mxu0
  %v430 = vadd.f32 0.0, %v429
  %v431 = vpop.f32.mrb[0].mxu0
  %v432 = vpop.f32.mrb[0].mxu0
  %v433 = vpop.f32.mrb[0].mxu0
  %434 = vdwg.mxu0
  %435 = vmatprep.subr.bf16.mxu0 %v349
  %436 = vmatpush1.bf16.xpose.msra.mxu0 %v348
  %437 = vmatprep.subr.bf16.mxu0 %v353
  %438 = vmatpush1.bf16.xpose.msra.mxu0 %v352
  %439 = vmatprep.subr.bf16.mxu0 %v357
  %440 = vmatpush1.bf16.xpose.msra.mxu0 %v356
  %441 = vmatprep.subr.bf16.mxu0 %v361
  %442 = vmatpush1.bf16.xpose.msra.mxu0 %v360
  %443 = vmatprep.subr.bf16.mxu0 %v365
  %444 = vmatpush1.bf16.xpose.msra.mxu0 %v364
  %445 = vmatprep.subr.bf16.mxu0 %v369
  %446 = vmatpush1.bf16.xpose.msra.mxu0 %v368
  %447 = vmatprep.subr.bf16.mxu0 %v373
  %448 = vmatpush1.bf16.xpose.msra.mxu0 %v372
  %449 = vmatprep.subr.bf16.mxu0 %v377
  %450 = vmatpush1.bf16.xpose.msra.mxu0 %v376
  %451 = vmatprep.subr.bf16.mxu0 0
  %452 = vmatpush1.bf16.xpose.msra.mxu0 0
  %453 = vmatprep.subr.bf16.mxu0 0
  %454 = vmatpush1.bf16.xpose.msra.mxu0 0
  %455 = vmatprep.subr.bf16.mxu0 0
  %456 = vmatpush1.bf16.xpose.msra.mxu0 0
  %457 = vmatprep.subr.bf16.mxu0 0
  %458 = vmatpush1.bf16.xpose.msra.mxu0 0
  %459 = vmatprep.subr.bf16.mxu0 0
  %460 = vmatpush1.bf16.xpose.msra.mxu0 0
  %461 = vmatprep.subr.bf16.mxu0 0
  %462 = vmatpush1.bf16.xpose.msra.mxu0 0
  %463 = vmatprep.subr.bf16.mxu0 0
  %464 = vmatpush1.bf16.xpose.msra.mxu0 0
  %465 = vmatprep.subr.bf16.mxu0 0
  %466 = vmatpush1.bf16.xpose.msra.mxu0 0
  %467 = vmatprep.mubr.bf16.mxu0 %v390
  %468 = vmatmul.mubr.bf16.gmra.mrb[0].mxu0 %v389
  %v469 = vpop.f32.mrb[0].mxu0
  %v470 = vadd.f32 %v430, %v469
  %v471 = vpop.f32.mrb[0].mxu0
  %v472 = vpop.f32.mrb[0].mxu0
  %v473 = vpop.f32.mrb[0].mxu0
  %474 = vdwg.mxu0
  %v475 = vadd.f32 %v378, %v470
  %476 = vst [vmem:[#allocation2] sm:$0xff] %v475
  // Predicated region
  $region26: #{noisy_dqn_forward.11} parent=0 // pred_check
    %p477 = pneg %p21
  $region27: #{noisy_dqn_forward.11} parent=0 // pred_check_branch
    %479 = sbr.rel (%p477) target = $region29
  $region28: #{noisy_dqn_forward.11} parent=0 // pred_region
    %v480 = vld [vmem:[#allocation2] sm:$0xff]
    %v481 = vld [vmem:[%s4] sm:$0x1]
    %v483 = vlaneseq
    %v484 = vshrl.u32 %v483, 7
    %v485 = vsub.s32 0, %v484
    %v486 = vrot.slane %v481, %v485
    %v488 = vadd.f32 %v480, %v486
    %489 = vst [vmem:[%s5] sm:$0xff] %v488
  $region29: #{noisy_dqn_forward.11} parent=0 // pred_fallthru
    _
  // Predicated region
  $region30: #{noisy_dqn_forward.11} parent=0 // pred_check
    _
  $region31: #{noisy_dqn_forward.11} parent=0 // pred_check_branch
    %491 = sbr.rel (0) target = $region33
  $region32: #{noisy_dqn_forward.11} parent=0 // pred_region
    _
  $region33: #{noisy_dqn_forward.11} parent=0 // pred_fallthru
    _
  // Predicated region
  $region34: #{noisy_dqn_forward.11} parent=0 // pred_check
    _
  $region35: #{noisy_dqn_forward.11} parent=0 // pred_check_branch
    %493 = sbr.rel (0) target = $region37
  $region36: #{noisy_dqn_forward.11} parent=0 // pred_region
    _
  $region37: #{noisy_dqn_forward.11} parent=0 // pred_fallthru
    _

</llo_original>
